<compile_context>
chip_gen: v7x
topology: tpu7x:2x2x1
jax: 0.10.0
libtpu: 0.0.40
codegen_flags: <defaults>
</compile_context>

<pallas_src>
import functools
import math

import jax
import jax.numpy as jnp
from jax.experimental import pallas as pl
from jax.experimental.pallas import tpu as pltpu


def _round_up(n: int, m: int) -> int:
    return ((n + m - 1) // m) * m


def _mlp3_kernel(x_ref, w1_ref, w2_ref, b2_ref, w3_ref, b3_ref, o_ref, *,
                 mxu_dtype, precision):
    # x tile: (row_tile, d_in); single cast to the MXU feed dtype when needed.
    x = x_ref[...]
    if x.dtype != mxu_dtype:
        x = x.astype(mxu_dtype)

    # Layer 1: Linear(d_in -> d1, bias=False) + ReLU   (MXU, f32 accumulation)
    h1 = jnp.dot(x, w1_ref[...], preferred_element_type=jnp.float32,
                 precision=precision)
    h1 = jnp.maximum(h1, 0.0)

    # Layer 2: Linear(d1 -> d2) + bias + ReLU   (bias add + ReLU stay f32 on VPU)
    h2 = jnp.dot(h1.astype(mxu_dtype), w2_ref[...],
                 preferred_element_type=jnp.float32, precision=precision)
    h2 = jnp.maximum(h2 + b2_ref[...], 0.0)

    # Layer 3: Linear(d2 -> d3) + bias + ReLU
    y = jnp.dot(h2.astype(mxu_dtype), w3_ref[...],
                preferred_element_type=jnp.float32, precision=precision)
    o_ref[...] = jnp.maximum(y + b3_ref[...], 0.0).astype(o_ref.dtype)


def _build_call(rows, d_in, d1_p, d2_p, d3, row_tile, n_tiles, out_dtype,
                mxu_dtype, precision, vmem_limit, resident_pipeline_mode):
    kern = functools.partial(_mlp3_kernel, mxu_dtype=mxu_dtype, precision=precision)

    def resident(shape):
        if resident_pipeline_mode is None:
            return pl.BlockSpec(shape, lambda i: (0, 0))
        return pl.BlockSpec(shape, lambda i: (0, 0),
                            pipeline_mode=resident_pipeline_mode)

    return pl.pallas_call(
        kern,
        out_shape=jax.ShapeDtypeStruct((rows, d3), out_dtype),
        grid_spec=pltpu.PrefetchScalarGridSpec(
            num_scalar_prefetch=0,
            grid=(n_tiles,),
            in_specs=[
                pl.BlockSpec((row_tile, d_in), lambda i: (i, 0)),  # streamed x rows
                resident((d_in, d1_p)),                            # W1 (resident)
                resident((d1_p, d2_p)),                            # W2 (resident)
                resident((1, d2_p)),                               # b2 (resident, f32)
                resident((d2_p, d3)),                              # W3 (resident)
                resident((1, d3)),                                 # b3 (resident, f32)
            ],
            out_specs=pl.BlockSpec((row_tile, d3), lambda i: (i, 0)),
        ),
        compiler_params=pltpu.CompilerParams(
            dimension_semantics=("parallel",),
            vmem_limit_bytes=vmem_limit,
        ),
    )


def fully_connected_3layers(x, w1, w2, b2, w3, b3, *,
                            row_tile=1024, mxu_dtype=jnp.bfloat16):
    """x: (..., d_in); w1: (d_in, d1); w2: (d1, d2); b2: (d2,); w3: (d2, d3); b3: (d3,)."""
    mxu_dtype = jnp.dtype(mxu_dtype)
    lead_shape = x.shape[:-1]
    d_in = x.shape[-1]
    d1, d2, d3 = w1.shape[1], w2.shape[1], w3.shape[1]
    rows = math.prod(lead_shape) if lead_shape else 1

    # Hidden dims padded to 128 (weights are tiny; keeps the hidden-side MXU
    # operands lane-dense).  x's feature dim and the output dim stay exact.
    d1_p = _round_up(d1, 128)
    d2_p = _round_up(d2, 128)

    w1p = jnp.pad(w1, ((0, 0), (0, d1_p - d1))).astype(mxu_dtype)
    w2p = jnp.pad(w2, ((0, d1_p - d1), (0, d2_p - d2))).astype(mxu_dtype)
    w3p = jnp.pad(w3, ((0, d2_p - d2), (0, 0))).astype(mxu_dtype)
    b2p = jnp.pad(b2, (0, d2_p - d2)).astype(jnp.float32).reshape(1, d2_p)
    b3p = b3.astype(jnp.float32).reshape(1, d3)

    x2 = x.reshape(rows, d_in)

    # --- generation-aware VMEM cap -------------------------------------------
    try:
        vmem_cap = int(pltpu.get_tpu_info().vmem_capacity_bytes)
    except Exception:
        vmem_cap = 64 * 2 ** 20                 # conservative (v7x per-TC size)
    vmem_cap_usable = int(vmem_cap * 0.85)      # headroom for compiler scratch

    x_bytes = jnp.dtype(x.dtype).itemsize
    w_bytes = mxu_dtype.itemsize
    resident_bytes = ((d_in * d1_p + d1_p * d2_p + d2_p * d3) * w_bytes
                      + (d2_p + d3) * 4)

    # --- row tiling: cap so intermediates fit VMEM and there are >=2 steps ----
    per_row_bytes = 2 * x_bytes * (d_in + d3) + 4 * (d1_p + d2_p + d3)
    fit_rows = max(8, ((vmem_cap_usable - resident_bytes)
                       // (2 * max(per_row_bytes, 1))) // 8 * 8)
    row_tile = max(8, min(_round_up(int(row_tile), 8), fit_rows,
                          _round_up(-(-rows // 2), 8)))
    n_tiles = pl.cdiv(rows, row_tile)

    budget = (2 * row_tile * x_bytes * (d_in + d3)      # double-buffered x / out tiles
              + resident_bytes                          # single-buffered weights/biases
              + row_tile * 4 * (d1_p + d2_p + d3))      # f32 intermediates
    vmem_limit = int(min(max(int(budget * 1.4), 16 * 2 ** 20), vmem_cap_usable))

    # Use HIGHEST precision only for the f32 feed path (bf16 feed already fixed).
    precision = (jax.lax.Precision.HIGHEST
                 if mxu_dtype == jnp.dtype(jnp.float32) else None)

    call_args = (rows, d_in, d1_p, d2_p, d3, row_tile, n_tiles, x.dtype,
                 mxu_dtype, precision, vmem_limit)
    # TODO(synk): add a K/N-tiled fallback (grid over hidden dims + VMEM accumulator)
    # for weight sets too large to stay fully VMEM-resident on v7x (64 MiB/TC).
    try:
        out = _build_call(*call_args, pl.Buffered(1))(x2, w1p, w2p, b2p, w3p, b3p)
    except Exception:
        # Fallback for runtimes that reject single-buffered resident operands.
        out = _build_call(*call_args, None)(x2, w1p, w2p, b2p, w3p, b3p)

    return out.reshape(*lead_shape, d3)


def _reference(x, w1, w2, b2, w3, b3):
    hp = jax.lax.Precision.HIGHEST
    h = jnp.maximum(jnp.dot(x, w1, precision=hp), 0.0)
    h = jnp.maximum(jnp.dot(h, w2, precision=hp) + b2, 0.0)
    return jnp.maximum(jnp.dot(h, w3, precision=hp) + b3, 0.0)


if __name__ == "__main__":
    key = jax.random.PRNGKey(0)
    batch, seq = 2, 8                          # 16 rows after flattening
    input_feas_dim, dim1, dim2, dim3 = 32, 64, 48, 32

    k_x, k_w1, k_w2, k_b2, k_w3, k_b3 = jax.random.split(key, 6)
    x = jax.random.normal(k_x, (batch, seq, input_feas_dim), dtype=jnp.float32)

    # nn.Linear-style init bounds (1/sqrt(fan_in)); weights stored (in, out).
    bnd1 = 1.0 / math.sqrt(input_feas_dim)
    bnd2 = 1.0 / math.sqrt(dim1)
    bnd3 = 1.0 / math.sqrt(dim2)
    w1 = jax.random.uniform(k_w1, (input_feas_dim, dim1), jnp.float32, -bnd1, bnd1)
    w2 = jax.random.uniform(k_w2, (dim1, dim2), jnp.float32, -bnd2, bnd2)
    b2 = jax.random.uniform(k_b2, (dim2,), jnp.float32, -bnd2, bnd2)
    w3 = jax.random.uniform(k_w3, (dim2, dim3), jnp.float32, -bnd3, bnd3)
    b3 = jax.random.uniform(k_b3, (dim3,), jnp.float32, -bnd3, bnd3)

    ref = _reference(x, w1, w2, b2, w3, b3)

    # f32 MXU feed: reference-accurate path.
    out_f32 = jax.block_until_ready(
        fully_connected_3layers(x, w1, w2, b2, w3, b3, mxu_dtype=jnp.float32))
    assert out_f32.shape == (batch, seq, dim3)
    assert jnp.allclose(out_f32, ref, atol=2e-3, rtol=2e-2)

    # bf16 MXU feed (performance default on v5e/v6e/v7x): relaxed tolerance.
    out_bf16 = jax.block_until_ready(
        fully_connected_3layers(x, w1, w2, b2, w3, b3, mxu_dtype=jnp.bfloat16))
    assert out_bf16.shape == (batch, seq, dim3)
    assert jnp.allclose(out_bf16, ref, atol=5e-2, rtol=5e-2)

    print("KERNEL_OK")
</pallas_src>

<mosaic_0001>
module attributes {stable_mosaic.version = 11 : i64} {
  func.func @_mlp3_kernel(%arg0: i32, %arg1: memref<8x32xf32, #tpu.memory_space<vmem>>, %arg2: memref<32x128xf32, #tpu.memory_space<vmem>>, %arg3: memref<128x128xf32, #tpu.memory_space<vmem>>, %arg4: memref<1x128xf32, #tpu.memory_space<vmem>>, %arg5: memref<128x32xf32, #tpu.memory_space<vmem>>, %arg6: memref<1x32xf32, #tpu.memory_space<vmem>>, %arg7: memref<8x32xf32, #tpu.memory_space<vmem>>) attributes {dimension_semantics = [#tpu.dimension_semantics<parallel>], iteration_bounds = array<i64: 2>, scalar_prefetch = 0 : i64, scratch_operands = 0 : i64, tpu.core_type = #tpu.core_type<tc>, window_params = [{transform_indices = @transform_0, window_bounds = array<i64: 8, 32>}, {pipeline_mode = #tpu.pipeline_mode<synchronous>, transform_indices = @transform_1, window_bounds = array<i64: 32, 128>}, {pipeline_mode = #tpu.pipeline_mode<synchronous>, transform_indices = @transform_2, window_bounds = array<i64: 128, 128>}, {pipeline_mode = #tpu.pipeline_mode<synchronous>, transform_indices = @transform_3, window_bounds = array<i64: 1, 128>}, {pipeline_mode = #tpu.pipeline_mode<synchronous>, transform_indices = @transform_4, window_bounds = array<i64: 128, 32>}, {pipeline_mode = #tpu.pipeline_mode<synchronous>, transform_indices = @transform_5, window_bounds = array<i64: 1, 32>}, {transform_indices = @transform_6, window_bounds = array<i64: 8, 32>}]} {
    %c0 = arith.constant 0 : index
    %c0_0 = arith.constant 0 : index
    %0 = vector.load %arg1[%c0, %c0_0] : memref<8x32xf32, #tpu.memory_space<vmem>>, vector<8x32xf32>
    %c0_1 = arith.constant 0 : index
    %c0_2 = arith.constant 0 : index
    %1 = vector.load %arg2[%c0_1, %c0_2] : memref<32x128xf32, #tpu.memory_space<vmem>>, vector<32x128xf32>
    %cst = arith.constant dense<0.000000e+00> : vector<8x128xf32>
    %2 = tpu.matmul %0, %1, %cst {dimension_numbers = #tpu.dot_dimension_numbers<[1], [0], [0], [1], [0, 0, 1, 1], [], []>, precision = #tpu.contract_precision<fp32>} : vector<8x32xf32>, vector<32x128xf32>, vector<8x128xf32> -> vector<8x128xf32>
    %cst_3 = arith.constant 0.000000e+00 : f32
    %3 = vector.broadcast %cst_3 : f32 to vector<8x128xf32>
    %4 = arith.maximumf %2, %3 : vector<8x128xf32>
    %c0_4 = arith.constant 0 : index
    %c0_5 = arith.constant 0 : index
    %5 = vector.load %arg3[%c0_4, %c0_5] : memref<128x128xf32, #tpu.memory_space<vmem>>, vector<128x128xf32>
    %cst_6 = arith.constant dense<0.000000e+00> : vector<8x128xf32>
    %6 = tpu.matmul %4, %5, %cst_6 {dimension_numbers = #tpu.dot_dimension_numbers<[1], [0], [0], [1], [0, 0, 1, 1], [], []>, precision = #tpu.contract_precision<fp32>} : vector<8x128xf32>, vector<128x128xf32>, vector<8x128xf32> -> vector<8x128xf32>
    %c0_7 = arith.constant 0 : index
    %c0_8 = arith.constant 0 : index
    %7 = vector.load %arg4[%c0_7, %c0_8] : memref<1x128xf32, #tpu.memory_space<vmem>>, vector<1x128xf32>
    %8 = vector.broadcast %7 : vector<1x128xf32> to vector<8x128xf32>
    %9 = arith.addf %6, %8 : vector<8x128xf32>
    %cst_9 = arith.constant 0.000000e+00 : f32
    %10 = vector.broadcast %cst_9 : f32 to vector<8x128xf32>
    %11 = arith.maximumf %9, %10 : vector<8x128xf32>
    %c0_10 = arith.constant 0 : index
    %c0_11 = arith.constant 0 : index
    %12 = vector.load %arg5[%c0_10, %c0_11] : memref<128x32xf32, #tpu.memory_space<vmem>>, vector<128x32xf32>
    %cst_12 = arith.constant dense<0.000000e+00> : vector<8x32xf32>
    %13 = tpu.matmul %11, %12, %cst_12 {dimension_numbers = #tpu.dot_dimension_numbers<[1], [0], [0], [1], [0, 0, 1, 1], [], []>, precision = #tpu.contract_precision<fp32>} : vector<8x128xf32>, vector<128x32xf32>, vector<8x32xf32> -> vector<8x32xf32>
    %c0_13 = arith.constant 0 : index
    %c0_14 = arith.constant 0 : index
    %14 = vector.load %arg6[%c0_13, %c0_14] : memref<1x32xf32, #tpu.memory_space<vmem>>, vector<1x32xf32>
    %15 = vector.broadcast %14 : vector<1x32xf32> to vector<8x32xf32>
    %16 = arith.addf %13, %15 : vector<8x32xf32>
    %cst_15 = arith.constant 0.000000e+00 : f32
    %17 = vector.broadcast %cst_15 : f32 to vector<8x32xf32>
    %18 = arith.maximumf %16, %17 : vector<8x32xf32>
    %c0_16 = arith.constant 0 : index
    %c0_17 = arith.constant 0 : index
    %19 = vector.load %arg7[%c0_16, %c0_17] : memref<8x32xf32, #tpu.memory_space<vmem>>, vector<8x32xf32>
    tpu.vector_store %arg7[%c0_16, %c0_17], %18 {strides = array<i32>} : memref<8x32xf32, #tpu.memory_space<vmem>>, vector<8x32xf32>,
    return
  }
  func.func @transform_0(%arg0: i32) -> (i32, i32) {
    %c0_i32 = arith.constant 0 : i32
    %c0_i32_0 = arith.constant 0 : i32
    return %arg0, %c0_i32 : i32, i32
  }
  func.func @transform_1(%arg0: i32) -> (i32, i32) {
    %c0_i32 = arith.constant 0 : i32
    %c0_i32_0 = arith.constant 0 : i32
    %c0_i32_1 = arith.constant 0 : i32
    return %c0_i32, %c0_i32_0 : i32, i32
  }
  func.func @transform_2(%arg0: i32) -> (i32, i32) {
    %c0_i32 = arith.constant 0 : i32
    %c0_i32_0 = arith.constant 0 : i32
    %c0_i32_1 = arith.constant 0 : i32
    return %c0_i32, %c0_i32_0 : i32, i32
  }
  func.func @transform_3(%arg0: i32) -> (i32, i32) {
    %c0_i32 = arith.constant 0 : i32
    %c0_i32_0 = arith.constant 0 : i32
    %c0_i32_1 = arith.constant 0 : i32
    return %c0_i32, %c0_i32_0 : i32, i32
  }
  func.func @transform_4(%arg0: i32) -> (i32, i32) {
    %c0_i32 = arith.constant 0 : i32
    %c0_i32_0 = arith.constant 0 : i32
    %c0_i32_1 = arith.constant 0 : i32
    return %c0_i32, %c0_i32_0 : i32, i32
  }
  func.func @transform_5(%arg0: i32) -> (i32, i32) {
    %c0_i32 = arith.constant 0 : i32
    %c0_i32_0 = arith.constant 0 : i32
    %c0_i32_1 = arith.constant 0 : i32
    return %c0_i32, %c0_i32_0 : i32, i32
  }
  func.func @transform_6(%arg0: i32) -> (i32, i32) {
    %c0_i32 = arith.constant 0 : i32
    %c0_i32_0 = arith.constant 0 : i32
    return %arg0, %c0_i32 : i32, i32
  }
}

module attributes {stable_mosaic.version = 11 : i64} {
  func.func @_mlp3_kernel(%arg0: i32, %arg1: memref<8x32xf32, #tpu.memory_space<vmem>>, %arg2: memref<32x128xf32, #tpu.memory_space<vmem>>, %arg3: memref<128x128xf32, #tpu.memory_space<vmem>>, %arg4: memref<1x128xf32, #tpu.memory_space<vmem>>, %arg5: memref<128x32xf32, #tpu.memory_space<vmem>>, %arg6: memref<1x32xf32, #tpu.memory_space<vmem>>, %arg7: memref<8x32xf32, #tpu.memory_space<vmem>>) attributes {dimension_semantics = [#tpu.dimension_semantics<parallel>], iteration_bounds = array<i64: 2>, scalar_prefetch = 0 : i64, scratch_operands = 0 : i64, tpu.core_type = #tpu.core_type<tc>, window_params = [{transform_indices = @transform_0, window_bounds = array<i64: 8, 32>}, {pipeline_mode = #tpu.pipeline_mode<synchronous>, transform_indices = @transform_1, window_bounds = array<i64: 32, 128>}, {pipeline_mode = #tpu.pipeline_mode<synchronous>, transform_indices = @transform_2, window_bounds = array<i64: 128, 128>}, {pipeline_mode = #tpu.pipeline_mode<synchronous>, transform_indices = @transform_3, window_bounds = array<i64: 1, 128>}, {pipeline_mode = #tpu.pipeline_mode<synchronous>, transform_indices = @transform_4, window_bounds = array<i64: 128, 32>}, {pipeline_mode = #tpu.pipeline_mode<synchronous>, transform_indices = @transform_5, window_bounds = array<i64: 1, 32>}, {transform_indices = @transform_6, window_bounds = array<i64: 8, 32>}]} {
    %c0 = arith.constant 0 : index
    %c0_0 = arith.constant 0 : index
    %0 = vector.load %arg1[%c0, %c0_0] : memref<8x32xf32, #tpu.memory_space<vmem>>, vector<8x32xf32>
    %c0_1 = arith.constant 0 : index
    %c0_2 = arith.constant 0 : index
    %1 = vector.load %arg2[%c0_1, %c0_2] : memref<32x128xf32, #tpu.memory_space<vmem>>, vector<32x128xf32>
    %cst = arith.constant dense<0.000000e+00> : vector<8x128xf32>
    %2 = tpu.matmul %0, %1, %cst {dimension_numbers = #tpu.dot_dimension_numbers<[1], [0], [0], [1], [0, 0, 1, 1], [], []>, precision = #tpu.contract_precision<fp32>} : vector<8x32xf32>, vector<32x128xf32>, vector<8x128xf32> -> vector<8x128xf32>
    %cst_3 = arith.constant 0.000000e+00 : f32
    %3 = vector.broadcast %cst_3 : f32 to vector<8x128xf32>
    %4 = arith.maximumf %2, %3 : vector<8x128xf32>
    %c0_4 = arith.constant 0 : index
    %c0_5 = arith.constant 0 : index
    %5 = vector.load %arg3[%c0_4, %c0_5] : memref<128x128xf32, #tpu.memory_space<vmem>>, vector<128x128xf32>
    %cst_6 = arith.constant dense<0.000000e+00> : vector<8x128xf32>
    %6 = tpu.matmul %4, %5, %cst_6 {dimension_numbers = #tpu.dot_dimension_numbers<[1], [0], [0], [1], [0, 0, 1, 1], [], []>, precision = #tpu.contract_precision<fp32>} : vector<8x128xf32>, vector<128x128xf32>, vector<8x128xf32> -> vector<8x128xf32>
    %c0_7 = arith.constant 0 : index
    %c0_8 = arith.constant 0 : index
    %7 = vector.load %arg4[%c0_7, %c0_8] : memref<1x128xf32, #tpu.memory_space<vmem>>, vector<1x128xf32>
    %8 = vector.broadcast %7 : vector<1x128xf32> to vector<8x128xf32>
    %9 = arith.addf %6, %8 : vector<8x128xf32>
    %cst_9 = arith.constant 0.000000e+00 : f32
    %10 = vector.broadcast %cst_9 : f32 to vector<8x128xf32>
    %11 = arith.maximumf %9, %10 : vector<8x128xf32>
    %c0_10 = arith.constant 0 : index
    %c0_11 = arith.constant 0 : index
    %12 = vector.load %arg5[%c0_10, %c0_11] : memref<128x32xf32, #tpu.memory_space<vmem>>, vector<128x32xf32>
    %cst_12 = arith.constant dense<0.000000e+00> : vector<8x32xf32>
    %13 = tpu.matmul %11, %12, %cst_12 {dimension_numbers = #tpu.dot_dimension_numbers<[1], [0], [0], [1], [0, 0, 1, 1], [], []>, precision = #tpu.contract_precision<fp32>} : vector<8x128xf32>, vector<128x32xf32>, vector<8x32xf32> -> vector<8x32xf32>
    %c0_13 = arith.constant 0 : index
    %c0_14 = arith.constant 0 : index
    %14 = vector.load %arg6[%c0_13, %c0_14] : memref<1x32xf32, #tpu.memory_space<vmem>>, vector<1x32xf32>
    %15 = vector.broadcast %14 : vector<1x32xf32> to vector<8x32xf32>
    %16 = arith.addf %13, %15 : vector<8x32xf32>
    %cst_15 = arith.constant 0.000000e+00 : f32
    %17 = vector.broadcast %cst_15 : f32 to vector<8x32xf32>
    %18 = arith.maximumf %16, %17 : vector<8x32xf32>
    %c0_16 = arith.constant 0 : index
    %c0_17 = arith.constant 0 : index
    %19 = vector.load %arg7[%c0_16, %c0_17] : memref<8x32xf32, #tpu.memory_space<vmem>>, vector<8x32xf32>
    tpu.vector_store %arg7[%c0_16, %c0_17], %18 {strides = array<i32>} : memref<8x32xf32, #tpu.memory_space<vmem>>, vector<8x32xf32>,
    return
  }
  func.func @transform_0(%arg0: i32) -> (i32, i32) {
    %c0_i32 = arith.constant 0 : i32
    %c0_i32_0 = arith.constant 0 : i32
    return %arg0, %c0_i32 : i32, i32
  }
  func.func @transform_1(%arg0: i32) -> (i32, i32) {
    %c0_i32 = arith.constant 0 : i32
    %c0_i32_0 = arith.constant 0 : i32
    %c0_i32_1 = arith.constant 0 : i32
    return %c0_i32, %c0_i32_0 : i32, i32
  }
  func.func @transform_2(%arg0: i32) -> (i32, i32) {
    %c0_i32 = arith.constant 0 : i32
    %c0_i32_0 = arith.constant 0 : i32
    %c0_i32_1 = arith.constant 0 : i32
    return %c0_i32, %c0_i32_0 : i32, i32
  }
  func.func @transform_3(%arg0: i32) -> (i32, i32) {
    %c0_i32 = arith.constant 0 : i32
    %c0_i32_0 = arith.constant 0 : i32
    %c0_i32_1 = arith.constant 0 : i32
    return %c0_i32, %c0_i32_0 : i32, i32
  }
  func.func @transform_4(%arg0: i32) -> (i32, i32) {
    %c0_i32 = arith.constant 0 : i32
    %c0_i32_0 = arith.constant 0 : i32
    %c0_i32_1 = arith.constant 0 : i32
    return %c0_i32, %c0_i32_0 : i32, i32
  }
  func.func @transform_5(%arg0: i32) -> (i32, i32) {
    %c0_i32 = arith.constant 0 : i32
    %c0_i32_0 = arith.constant 0 : i32
    %c0_i32_1 = arith.constant 0 : i32
    return %c0_i32, %c0_i32_0 : i32, i32
  }
  func.func @transform_6(%arg0: i32) -> (i32, i32) {
    %c0_i32 = arith.constant 0 : i32
    %c0_i32_0 = arith.constant 0 : i32
    return %arg0, %c0_i32 : i32, i32
  }
}

</mosaic_0001>

<llo_original>
// kernel: tpu_custom_call.1
$region0: #{tpu_custom_call.1}
  #allocation0 [shape = 'u32[]', space=smem, size = 0x4, offset = 0x4, fixed_abs, tag = 'smem constant byte address 0x4 - core index']
  #allocation1 [shape = 'u32[144,128]{1,0:T(1,128)}', space=vmem, size = 0x12000, scoped, tag = 'internal scratch']
  %s0 = inlined_call_operand.hbm [shape: f32[16,32], index: 0, kind: input, shape index: {}]
  %s1 = inlined_call_operand.vmem [shape: f32[32,128], index: 1, kind: input, shape index: {}]
  %s2 = inlined_call_operand.vmem [shape: f32[128,128], index: 2, kind: input, shape index: {}]
  %s3 = inlined_call_operand.vmem [shape: f32[1,128], index: 3, kind: input, shape index: {}]
  %s4 = inlined_call_operand.vmem [shape: f32[128,32], index: 4, kind: input, shape index: {}]
  %s5 = inlined_call_operand.vmem [shape: f32[1,32], index: 5, kind: input, shape index: {}]
  %s6 = inlined_call_operand.hbm [shape: f32[16,32], index: 6, kind: output, shape index: {}]
  %s7 = sld [smem:[#allocation0]]
  $region61: #{tpu_custom_call.1} parent=0
    _
  %s9 = ssub.s32 1, %s7
  %s10 = scalar_select 0, %s9, %s7
  $region1: #{tpu_custom_call.1} parent=0
    #allocation2 [shape = 'u8[8192]{0}', space=vmem, size = 0x2000, scoped, tag = 'input window, operand 0']
    #allocation3 [shape = 's32[2]{0}', space=sflag, size = 0x8, scoped, tag = 'scoped memory for tpu_custom_call.1']
    #allocation4 [shape = 's32[2]{0}', space=sflag, size = 0x8, scoped, tag = 'scoped memory for tpu_custom_call.1']
    #allocation5 [shape = 'u8[8192]{0}', space=vmem, size = 0x2000, scoped, tag = 'output window, operand 0']
    %11 = vsyncpa [#allocation3], 0
    %s12 = scalar_lea.sflag [#allocation3], 1
    %13 = vsyncpa %s12, 0
    %14 = vsyncpa [#allocation4], 0
    %s15 = scalar_lea.sflag [#allocation4], 1
    %16 = vsyncpa %s15, 0
    loop: start=0, step=1, limit=4
    $region2: #{tpu_custom_call.1} parent=1 // loop_pre_header
      _
    $region3: #{tpu_custom_call.1} parent=1 // loop_header
      %s18 = sphi 0, %s22
      %p19 = scmp.ge.s32.totalorder %s18, 4
      %s28 = sphi 0, %s30
      %s31 = sphi 0, %s28
      %s32 = sphi 0, %s31
      %s48 = sphi 0, %s32
      %s52 = sphi 0, %s52
      %s54 = sphi 0, %s52
      %s55 = sphi 0, %s54
      %s69 = sphi 0, %s55
      %s73 = sphi 0, %s73
      %s75 = sphi 0, %s73
      %s76 = sphi 0, %s75
      %s90 = sphi 0, %s76
      %s94 = sphi 0, %s94
      %s96 = sphi 0, %s94
      %s97 = sphi 0, %s96
      %s111 = sphi 0, %s97
      %s115 = sphi 0, %s115
      %s117 = sphi 0, %s115
      %s118 = sphi 0, %s117
      %s132 = sphi 0, %s118
      %s136 = sphi 0, %s136
      %s138 = sphi 0, %s136
      %s139 = sphi 0, %s138
      %s153 = sphi 0, %s139
      %s159 = sphi 0, %s161
      %s162 = sphi 0, %s159
      %s163 = sphi 0, %s162
      %s179 = sphi 0, %s163
    $region4: #{tpu_custom_call.1} parent=1 // loop_header_branch
      %21 = sbr.rel (%p19) target = $region8
    $region5: #{tpu_custom_call.1} parent=1 // loop_body
      %s23 = ssub.s32 %s18, 1
      %s24 = ssub.s32 %s18, 2
      %s25 = sadd.s32 %s18, 1
      %s26 = ssub.s32 %s18, %s25
      %p27 = scmp.eq.s32.totalorder %s26, 0
      %s29 = sadd.s32 %s28, 1
      %s30 = scalar_select %p27, %s28, %s29
      %p33 = pneg %p27
      %p34 = scmp.eq.s32.totalorder %s18, 1
      %p35 = por %p33, %p34
      %p36 = scmp.ne.s32.totalorder %s28, %s31
      %p37 = scmp.eq.s32.totalorder %s18, 0
      %p38 = por %p36, %p37
      %p39 = scmp.ne.s32.totalorder %s28, %s31
      %p40 = scmp.eq.s32.totalorder %s23, 1
      %p41 = por %p39, %p40
      %p42 = scmp.ne.s32.totalorder %s31, %s32
      %p43 = scmp.eq.s32.totalorder %s23, 0
      %p44 = por %p42, %p43
      %p45 = scmp.ne.s32.totalorder %s31, %s32
      %p46 = scmp.eq.s32.totalorder %s24, 1
      %p47 = por %p45, %p46
      %p49 = scmp.ne.s32.totalorder %s32, %s48
      %p50 = scmp.eq.s32.totalorder %s24, 0
      %p51 = por %p49, %p50
      %s53 = sadd.s32 %s52, 1
      %p56 = scmp.eq.s32.totalorder %s18, 1
      %p57 = scmp.ne.s32.totalorder %s52, %s54
      %p58 = scmp.eq.s32.totalorder %s18, 0
      %p59 = por %p57, %p58
      %p60 = scmp.ne.s32.totalorder %s52, %s54
      %p61 = scmp.eq.s32.totalorder %s23, 1
      %p62 = por %p60, %p61
      %p63 = scmp.ne.s32.totalorder %s54, %s55
      %p64 = scmp.eq.s32.totalorder %s23, 0
      %p65 = por %p63, %p64
      %p66 = scmp.ne.s32.totalorder %s54, %s55
      %p67 = scmp.eq.s32.totalorder %s24, 1
      %p68 = por %p66, %p67
      %p70 = scmp.ne.s32.totalorder %s55, %s69
      %p71 = scmp.eq.s32.totalorder %s24, 0
      %p72 = por %p70, %p71
      %s74 = sadd.s32 %s73, 1
      %p77 = scmp.eq.s32.totalorder %s18, 1
      %p78 = scmp.ne.s32.totalorder %s73, %s75
      %p79 = scmp.eq.s32.totalorder %s18, 0
      %p80 = por %p78, %p79
      %p81 = scmp.ne.s32.totalorder %s73, %s75
      %p82 = scmp.eq.s32.totalorder %s23, 1
      %p83 = por %p81, %p82
      %p84 = scmp.ne.s32.totalorder %s75, %s76
      %p85 = scmp.eq.s32.totalorder %s23, 0
      %p86 = por %p84, %p85
      %p87 = scmp.ne.s32.totalorder %s75, %s76
      %p88 = scmp.eq.s32.totalorder %s24, 1
      %p89 = por %p87, %p88
      %p91 = scmp.ne.s32.totalorder %s76, %s90
      %p92 = scmp.eq.s32.totalorder %s24, 0
      %p93 = por %p91, %p92
      %s95 = sadd.s32 %s94, 1
      %p98 = scmp.eq.s32.totalorder %s18, 1
      %p99 = scmp.ne.s32.totalorder %s94, %s96
      %p100 = scmp.eq.s32.totalorder %s18, 0
      %p101 = por %p99, %p100
      %p102 = scmp.ne.s32.totalorder %s94, %s96
      %p103 = scmp.eq.s32.totalorder %s23, 1
      %p104 = por %p102, %p103
      %p105 = scmp.ne.s32.totalorder %s96, %s97
      %p106 = scmp.eq.s32.totalorder %s23, 0
      %p107 = por %p105, %p106
      %p108 = scmp.ne.s32.totalorder %s96, %s97
      %p109 = scmp.eq.s32.totalorder %s24, 1
      %p110 = por %p108, %p109
      %p112 = scmp.ne.s32.totalorder %s97, %s111
      %p113 = scmp.eq.s32.totalorder %s24, 0
      %p114 = por %p112, %p113
      %s116 = sadd.s32 %s115, 1
      %p119 = scmp.eq.s32.totalorder %s18, 1
      %p120 = scmp.ne.s32.totalorder %s115, %s117
      %p121 = scmp.eq.s32.totalorder %s18, 0
      %p122 = por %p120, %p121
      %p123 = scmp.ne.s32.totalorder %s115, %s117
      %p124 = scmp.eq.s32.totalorder %s23, 1
      %p125 = por %p123, %p124
      %p126 = scmp.ne.s32.totalorder %s117, %s118
      %p127 = scmp.eq.s32.totalorder %s23, 0
      %p128 = por %p126, %p127
      %p129 = scmp.ne.s32.totalorder %s117, %s118
      %p130 = scmp.eq.s32.totalorder %s24, 1
      %p131 = por %p129, %p130
      %p133 = scmp.ne.s32.totalorder %s118, %s132
      %p134 = scmp.eq.s32.totalorder %s24, 0
      %p135 = por %p133, %p134
      %s137 = sadd.s32 %s136, 1
      %p140 = scmp.eq.s32.totalorder %s18, 1
      %p141 = scmp.ne.s32.totalorder %s136, %s138
      %p142 = scmp.eq.s32.totalorder %s18, 0
      %p143 = por %p141, %p142
      %p144 = scmp.ne.s32.totalorder %s136, %s138
      %p145 = scmp.eq.s32.totalorder %s23, 1
      %p146 = por %p144, %p145
      %p147 = scmp.ne.s32.totalorder %s138, %s139
      %p148 = scmp.eq.s32.totalorder %s23, 0
      %p149 = por %p147, %p148
      %p150 = scmp.ne.s32.totalorder %s138, %s139
      %p151 = scmp.eq.s32.totalorder %s24, 1
      %p152 = por %p150, %p151
      %p154 = scmp.ne.s32.totalorder %s139, %s153
      %p155 = scmp.eq.s32.totalorder %s24, 0
      %p156 = por %p154, %p155
      %s157 = ssub.s32 %s18, %s25
      %p158 = scmp.eq.s32.totalorder %s157, 0
      %s160 = sadd.s32 %s159, 1
      %s161 = scalar_select %p158, %s159, %s160
      %p164 = pneg %p158
      %p165 = scmp.eq.s32.totalorder %s18, 1
      %p166 = por %p164, %p165
      %p167 = scmp.ne.s32.totalorder %s159, %s162
      %p168 = scmp.eq.s32.totalorder %s18, 0
      %p169 = por %p167, %p168
      %p170 = scmp.ne.s32.totalorder %s159, %s162
      %p171 = scmp.eq.s32.totalorder %s23, 1
      %p172 = por %p170, %p171
      %p173 = scmp.ne.s32.totalorder %s162, %s163
      %p174 = scmp.eq.s32.totalorder %s23, 0
      %p175 = por %p173, %p174
      %p176 = scmp.ne.s32.totalorder %s162, %s163
      %p177 = scmp.eq.s32.totalorder %s24, 1
      %p178 = por %p176, %p177
      %p180 = scmp.ne.s32.totalorder %s163, %s179
      %p181 = scmp.eq.s32.totalorder %s24, 0
      %p182 = por %p180, %p181
      %p183 = scmp.le.s32.totalorder 1, %s18
      %p184 = scmp.lt.s32.totalorder %s18, 3
      %p185 = pnand %p183, %p184
      %p186 = pneg %p185
      // Predicated region
      $region9: #{tpu_custom_call.1} parent=5 // pred_check
        _
      $region10: #{tpu_custom_call.1} parent=5 // pred_check_branch
        %188 = sbr.rel (%p185) target = $region12
      $region11: #{tpu_custom_call.1} parent=5 // pred_region
        %s189 = ssub.s32 %s18, 1
        // Predicated region
        $region13: #{tpu_custom_call.1} parent=11 // pred_check
          %p190 = pneg %p65
        $region14: #{tpu_custom_call.1} parent=11 // pred_check_branch
          %192 = sbr.rel (%p190) target = $region16
        $region15: #{tpu_custom_call.1} parent=11 // pred_region
          _
        $region16: #{tpu_custom_call.1} parent=11 // pred_fallthru
          _
        // Predicated region
        $region17: #{tpu_custom_call.1} parent=11 // pred_check
          %p193 = pneg %p86
        $region18: #{tpu_custom_call.1} parent=11 // pred_check_branch
          %195 = sbr.rel (%p193) target = $region20
        $region19: #{tpu_custom_call.1} parent=11 // pred_region
          _
        $region20: #{tpu_custom_call.1} parent=11 // pred_fallthru
          _
        // Predicated region
        $region21: #{tpu_custom_call.1} parent=11 // pred_check
          %p196 = pneg %p107
        $region22: #{tpu_custom_call.1} parent=11 // pred_check_branch
          %198 = sbr.rel (%p196) target = $region24
        $region23: #{tpu_custom_call.1} parent=11 // pred_region
          _
        $region24: #{tpu_custom_call.1} parent=11 // pred_fallthru
          _
        // Predicated region
        $region25: #{tpu_custom_call.1} parent=11 // pred_check
          %p199 = pneg %p128
        $region26: #{tpu_custom_call.1} parent=11 // pred_check_branch
          %201 = sbr.rel (%p199) target = $region28
        $region27: #{tpu_custom_call.1} parent=11 // pred_region
          _
        $region28: #{tpu_custom_call.1} parent=11 // pred_fallthru
          _
        // Predicated region
        $region29: #{tpu_custom_call.1} parent=11 // pred_check
          %p202 = pneg %p149
        $region30: #{tpu_custom_call.1} parent=11 // pred_check_branch
          %204 = sbr.rel (%p202) target = $region32
        $region31: #{tpu_custom_call.1} parent=11 // pred_region
          _
        $region32: #{tpu_custom_call.1} parent=11 // pred_fallthru
          _
      $region12: #{tpu_custom_call.1} parent=5 // pred_fallthru
        _
      %p205 = scmp.lt.s32.totalorder %s18, 2
      // Predicated region
      $region33: #{tpu_custom_call.1} parent=5 // pred_check
        %p206 = pneg %p205
      $region34: #{tpu_custom_call.1} parent=5 // pred_check_branch
        %208 = sbr.rel (%p206) target = $region36
      $region35: #{tpu_custom_call.1} parent=5 // pred_region
        // Predicated region
        $region37: #{tpu_custom_call.1} parent=35 // pred_check
          %p209 = pneg %p38
        $region38: #{tpu_custom_call.1} parent=35 // pred_check_branch
          %211 = sbr.rel (%p209) target = $region40
        $region39: #{tpu_custom_call.1} parent=35 // pred_region
          %s212 = sand.u32 %s28, 1
          %s213 = scalar_lea.sflag [#allocation3], %s212
          %s214 = sand.u32 %s28, 1
          %s215 = smul.addr %s214, 8
          %s216 = scalar_lea.vmem [#allocation2], %s215
          %s218 = ssub.s32 128, 128
          %219 = vsyncadd %s213, %s218
          %s220 = smul.addr %s18, 128
          %s221 = scalar_lea.hbm %s0, %s220
          %s223 = sshll.u32 %s216, 4
          %s224 = int_to_ptr.vmem [resolvable:$true] %s223
          %226 = dma.hbm_to_vmem [thread:$0]  %s221, 128, %s224, %s213
        $region40: #{tpu_custom_call.1} parent=35 // pred_fallthru
          _
      $region36: #{tpu_custom_call.1} parent=5 // pred_fallthru
        _
      %p227 = scmp.le.s32.totalorder 1, %s18
      %p228 = scmp.lt.s32.totalorder %s18, 3
      %p229 = pnand %p227, %p228
      %p230 = pneg %p229
      // Predicated region
      $region41: #{tpu_custom_call.1} parent=5 // pred_check
        _
      $region42: #{tpu_custom_call.1} parent=5 // pred_check_branch
        %232 = sbr.rel (%p229) target = $region44
      $region43: #{tpu_custom_call.1} parent=5 // pred_region
        %s233 = ssub.s32 %s18, 1
        %s234 = sand.u32 %s31, 1
        %s235 = scalar_lea.sflag [#allocation3], %s234
        %s236 = sand.u32 %s31, 1
        %s237 = smul.addr %s236, 8
        %s238 = scalar_lea.vmem [#allocation2], %s237
        // Predicated region
        $region45: #{tpu_custom_call.1} parent=43 // pred_check
          %p239 = pneg %p44
        $region46: #{tpu_custom_call.1} parent=43 // pred_check_branch
          %241 = sbr.rel (%p239) target = $region48
        $region47: #{tpu_custom_call.1} parent=43 // pred_region
          %242 = dma.done %s235, 128
        $region48: #{tpu_custom_call.1} parent=43 // pred_fallthru
          _
        %s243 = sand.u32 %s31, 1
        %s244 = scalar_lea.sflag [#allocation3], %s243
        %s245 = sand.u32 %s31, 1
        %s246 = smul.addr %s245, 8
        %s247 = scalar_lea.vmem [#allocation2], %s246
        %p248 = pneg %p44
        %p249 = pneg %p41
        %p250 = pneg %p65
        %p251 = pneg %p62
        %p252 = pneg %p86
        %p253 = pneg %p83
        %p254 = pneg %p107
        %p255 = pneg %p104
        %p256 = pneg %p128
        %p257 = pneg %p125
        %p258 = pneg %p149
        %p259 = pneg %p146
        %p260 = pneg %p175
        %p261 = pneg %p172
        %s262 = sand.u32 %s162, 1
        %s263 = scalar_lea.sflag [#allocation4], %s262
        %s264 = sand.u32 %s162, 1
        %s265 = smul.addr %s264, 8
        %s266 = scalar_lea.vmem [#allocation5], %s265
        %v267 = vld [vmem:[%s238] sm:$0xff]
        %v268 = vld [vmem:[%s1] sm:$0xff]
        %v269 = vld [vmem:[%s1 + $0x8] sm:$0xff]
        %v270 = vld [vmem:[%s1 + $0x10] sm:$0xff]
        %v271 = vld [vmem:[%s1 + $0x18] sm:$0xff]
        %vm272 = vcmask 261120
        %v274 = vsel %vm272, %v267, 0
        %276 = vmatprep.subr.mxu0 0.0
        %v277 = vand.u32 %v268, 4294901760
        %278 = vmatpush1.msra.mxu0 %v277
        %279 = vmatprep.subr.mxu0 0.0
        %v280 = vand.u32 %v269, 4294901760
        %281 = vmatpush1.msra.mxu0 %v280
        %282 = vmatprep.subr.mxu0 0.0
        %v283 = vand.u32 %v270, 4294901760
        %284 = vmatpush1.msra.mxu0 %v283
        %285 = vmatprep.subr.mxu0 0.0
        %v286 = vand.u32 %v271, 4294901760
        %287 = vmatpush1.msra.mxu0 %v286
        %288 = vmatprep.subr.mxu0 0.0
        %289 = vmatpush1.msra.mxu0 0.0
        %290 = vmatprep.subr.mxu0 0.0
        %291 = vmatpush1.msra.mxu0 0.0
        %292 = vmatprep.subr.mxu0 0.0
        %293 = vmatpush1.msra.mxu0 0.0
        %294 = vmatprep.subr.mxu0 0.0
        %295 = vmatpush1.msra.mxu0 0.0
        %296 = vmatprep.subr.mxu0 0.0
        %297 = vmatpush1.msra.mxu0 0.0
        %298 = vmatprep.subr.mxu0 0.0
        %299 = vmatpush1.msra.mxu0 0.0
        %300 = vmatprep.subr.mxu0 0.0
        %301 = vmatpush1.msra.mxu0 0.0
        %302 = vmatprep.subr.mxu0 0.0
        %303 = vmatpush1.msra.mxu0 0.0
        %304 = vmatprep.subr.mxu0 0.0
        %305 = vmatpush1.msra.mxu0 0.0
        %306 = vmatprep.subr.mxu0 0.0
        %307 = vmatpush1.msra.mxu0 0.0
        %308 = vmatprep.subr.mxu0 0.0
        %309 = vmatpush1.msra.mxu0 0.0
        %310 = vmatprep.subr.mxu0 0.0
        %311 = vmatpush1.msra.mxu0 0.0
        %312 = vmatprep.subr.mxu0 0.0
        %313 = vmatpush1.msra.mxu0 0.0
        %314 = vmatprep.subr.mxu0 0.0
        %315 = vmatpush1.msra.mxu0 0.0
        %316 = vmatprep.subr.mxu0 0.0
        %317 = vmatpush1.msra.mxu0 0.0
        %318 = vmatprep.subr.mxu0 0.0
        %319 = vmatpush1.msra.mxu0 0.0
        %320 = vmatprep.subr.mxu0 0.0
        %321 = vmatpush1.msra.mxu0 0.0
        %322 = vmatprep.subr.mxu0 0.0
        %323 = vmatpush1.msra.mxu0 0.0
        %324 = vmatprep.subr.mxu0 0.0
        %325 = vmatpush1.msra.mxu0 0.0
        %326 = vmatprep.subr.mxu0 0.0
        %327 = vmatpush1.msra.mxu0 0.0
        %328 = vmatprep.subr.mxu0 0.0
        %329 = vmatpush1.msra.mxu0 0.0
        %330 = vmatprep.subr.mxu0 0.0
        %331 = vmatpush1.msra.mxu0 0.0
        %332 = vmatprep.subr.mxu0 0.0
        %333 = vmatpush1.msra.mxu0 0.0
        %334 = vmatprep.subr.mxu0 0.0
        %335 = vmatpush1.msra.mxu0 0.0
        %336 = vmatprep.subr.mxu0 0.0
        %337 = vmatpush1.msra.mxu0 0.0
        %338 = vmatprep.subr.mxu0 0.0
        %339 = vmatpush1.msra.mxu0 0.0
        %340 = vmatprep.subr.mxu0 0.0
        %341 = vmatpush1.msra.mxu0 0.0
        %342 = vmatprep.subr.mxu0 0.0
        %343 = vmatpush1.msra.mxu0 0.0
        %344 = vmatprep.mubr.f32.mxu0 0.0
        %v345 = vand.u32 %v274, 4294901760
        %v346 = vsub.f32 %v274, %v345
        %v347 = vand.u32 %v346, 4294901760
        %v348 = vsub.f32 %v346, %v347
        %v349 = vand.u32 %v348, 4294901760
        %350 = vmatmul.mubr.f32.gmra.mrb[0].mxu0 %v349
        %v351 = vpop.f32.mrb[0].mxu0
        %v352 = vadd.f32 0.0, %v351
        %v353 = vpop.f32.mrb[0].mxu0
        %354 = vdwg.mxu0
        %355 = vmatprep.subr.mxu0 0.0
        %v356 = vand.u32 %v268, 4294901760
        %v357 = vsub.f32 %v268, %v356
        %v358 = vand.u32 %v357, 4294901760
        %v359 = vsub.f32 %v357, %v358
        %v360 = vand.u32 %v359, 4294901760
        %361 = vmatpush1.msra.mxu0 %v360
        %362 = vmatprep.subr.mxu0 0.0
        %v363 = vand.u32 %v269, 4294901760
        %v364 = vsub.f32 %v269, %v363
        %v365 = vand.u32 %v364, 4294901760
        %v366 = vsub.f32 %v364, %v365
        %v367 = vand.u32 %v366, 4294901760
        %368 = vmatpush1.msra.mxu0 %v367
        %369 = vmatprep.subr.mxu0 0.0
        %v370 = vand.u32 %v270, 4294901760
        %v371 = vsub.f32 %v270, %v370
        %v372 = vand.u32 %v371, 4294901760
        %v373 = vsub.f32 %v371, %v372
        %v374 = vand.u32 %v373, 4294901760
        %375 = vmatpush1.msra.mxu0 %v374
        %376 = vmatprep.subr.mxu0 0.0
        %v377 = vand.u32 %v271, 4294901760
        %v378 = vsub.f32 %v271, %v377
        %v379 = vand.u32 %v378, 4294901760
        %v380 = vsub.f32 %v378, %v379
        %v381 = vand.u32 %v380, 4294901760
        %382 = vmatpush1.msra.mxu0 %v381
        %383 = vmatprep.subr.mxu0 0.0
        %384 = vmatpush1.msra.mxu0 0.0
        %385 = vmatprep.subr.mxu0 0.0
        %386 = vmatpush1.msra.mxu0 0.0
        %387 = vmatprep.subr.mxu0 0.0
        %388 = vmatpush1.msra.mxu0 0.0
        %389 = vmatprep.subr.mxu0 0.0
        %390 = vmatpush1.msra.mxu0 0.0
        %391 = vmatprep.subr.mxu0 0.0
        %392 = vmatpush1.msra.mxu0 0.0
        %393 = vmatprep.subr.mxu0 0.0
        %394 = vmatpush1.msra.mxu0 0.0
        %395 = vmatprep.subr.mxu0 0.0
        %396 = vmatpush1.msra.mxu0 0.0
        %397 = vmatprep.subr.mxu0 0.0
        %398 = vmatpush1.msra.mxu0 0.0
        %399 = vmatprep.subr.mxu0 0.0
        %400 = vmatpush1.msra.mxu0 0.0
        %401 = vmatprep.subr.mxu0 0.0
        %402 = vmatpush1.msra.mxu0 0.0
        %403 = vmatprep.subr.mxu0 0.0
        %404 = vmatpush1.msra.mxu0 0.0
        %405 = vmatprep.subr.mxu0 0.0
        %406 = vmatpush1.msra.mxu0 0.0
        %407 = vmatprep.subr.mxu0 0.0
        %408 = vmatpush1.msra.mxu0 0.0
        %409 = vmatprep.subr.mxu0 0.0
        %410 = vmatpush1.msra.mxu0 0.0
        %411 = vmatprep.subr.mxu0 0.0
        %412 = vmatpush1.msra.mxu0 0.0
        %413 = vmatprep.subr.mxu0 0.0
        %414 = vmatpush1.msra.mxu0 0.0
        %415 = vmatprep.subr.mxu0 0.0
        %416 = vmatpush1.msra.mxu0 0.0
        %417 = vmatprep.subr.mxu0 0.0
        %418 = vmatpush1.msra.mxu0 0.0
        %419 = vmatprep.subr.mxu0 0.0
        %420 = vmatpush1.msra.mxu0 0.0
        %421 = vmatprep.subr.mxu0 0.0
        %422 = vmatpush1.msra.mxu0 0.0
        %423 = vmatprep.subr.mxu0 0.0
        %424 = vmatpush1.msra.mxu0 0.0
        %425 = vmatprep.subr.mxu0 0.0
        %426 = vmatpush1.msra.mxu0 0.0
        %427 = vmatprep.subr.mxu0 0.0
        %428 = vmatpush1.msra.mxu0 0.0
        %429 = vmatprep.subr.mxu0 0.0
        %430 = vmatpush1.msra.mxu0 0.0
        %431 = vmatprep.subr.mxu0 0.0
        %432 = vmatpush1.msra.mxu0 0.0
        %433 = vmatprep.subr.mxu0 0.0
        %434 = vmatpush1.msra.mxu0 0.0
        %435 = vmatprep.subr.mxu0 0.0
        %436 = vmatpush1.msra.mxu0 0.0
        %437 = vmatprep.subr.mxu0 0.0
        %438 = vmatpush1.msra.mxu0 0.0
        %439 = vmatprep.mubr.f32.mxu0 0.0
        %v440 = vand.u32 %v274, 4294901760
        %441 = vmatmul.mubr.f32.gmra.mrb[0].mxu0 %v440
        %v442 = vpop.f32.mrb[0].mxu0
        %v443 = vadd.f32 %v352, %v442
        %v444 = vpop.f32.mrb[0].mxu0
        %445 = vdwg.mxu0
        %446 = vmatprep.subr.mxu0 0.0
        %v447 = vand.u32 %v268, 4294901760
        %v448 = vsub.f32 %v268, %v447
        %449 = vmatpush1.msra.mxu0 %v448
        %450 = vmatprep.subr.mxu0 0.0
        %v451 = vand.u32 %v269, 4294901760
        %v452 = vsub.f32 %v269, %v451
        %453 = vmatpush1.msra.mxu0 %v452
        %454 = vmatprep.subr.mxu0 0.0
        %v455 = vand.u32 %v270, 4294901760
        %v456 = vsub.f32 %v270, %v455
        %457 = vmatpush1.msra.mxu0 %v456
        %458 = vmatprep.subr.mxu0 0.0
        %v459 = vand.u32 %v271, 4294901760
        %v460 = vsub.f32 %v271, %v459
        %461 = vmatpush1.msra.mxu0 %v460
        %462 = vmatprep.subr.mxu0 0.0
        %463 = vmatpush1.msra.mxu0 0.0
        %464 = vmatprep.subr.mxu0 0.0
        %465 = vmatpush1.msra.mxu0 0.0
        %466 = vmatprep.subr.mxu0 0.0
        %467 = vmatpush1.msra.mxu0 0.0
        %468 = vmatprep.subr.mxu0 0.0
        %469 = vmatpush1.msra.mxu0 0.0
        %470 = vmatprep.subr.mxu0 0.0
        %471 = vmatpush1.msra.mxu0 0.0
        %472 = vmatprep.subr.mxu0 0.0
        %473 = vmatpush1.msra.mxu0 0.0
        %474 = vmatprep.subr.mxu0 0.0
        %475 = vmatpush1.msra.mxu0 0.0
        %476 = vmatprep.subr.mxu0 0.0
        %477 = vmatpush1.msra.mxu0 0.0
        %478 = vmatprep.subr.mxu0 0.0
        %479 = vmatpush1.msra.mxu0 0.0
        %480 = vmatprep.subr.mxu0 0.0
        %481 = vmatpush1.msra.mxu0 0.0
        %482 = vmatprep.subr.mxu0 0.0
        %483 = vmatpush1.msra.mxu0 0.0
        %484 = vmatprep.subr.mxu0 0.0
        %485 = vmatpush1.msra.mxu0 0.0
        %486 = vmatprep.subr.mxu0 0.0
        %487 = vmatpush1.msra.mxu0 0.0
        %488 = vmatprep.subr.mxu0 0.0
        %489 = vmatpush1.msra.mxu0 0.0
        %490 = vmatprep.subr.mxu0 0.0
        %491 = vmatpush1.msra.mxu0 0.0
        %492 = vmatprep.subr.mxu0 0.0
        %493 = vmatpush1.msra.mxu0 0.0
        %494 = vmatprep.subr.mxu0 0.0
        %495 = vmatpush1.msra.mxu0 0.0
        %496 = vmatprep.subr.mxu0 0.0
        %497 = vmatpush1.msra.mxu0 0.0
        %498 = vmatprep.subr.mxu0 0.0
        %499 = vmatpush1.msra.mxu0 0.0
        %500 = vmatprep.subr.mxu0 0.0
        %501 = vmatpush1.msra.mxu0 0.0
        %502 = vmatprep.subr.mxu0 0.0
        %503 = vmatpush1.msra.mxu0 0.0
        %504 = vmatprep.subr.mxu0 0.0
        %505 = vmatpush1.msra.mxu0 0.0
        %506 = vmatprep.subr.mxu0 0.0
        %507 = vmatpush1.msra.mxu0 0.0
        %508 = vmatprep.subr.mxu0 0.0
        %509 = vmatpush1.msra.mxu0 0.0
        %510 = vmatprep.subr.mxu0 0.0
        %511 = vmatpush1.msra.mxu0 0.0
        %512 = vmatprep.subr.mxu0 0.0
        %513 = vmatpush1.msra.mxu0 0.0
        %514 = vmatprep.subr.mxu0 0.0
        %515 = vmatpush1.msra.mxu0 0.0
        %516 = vmatprep.subr.mxu0 0.0
        %517 = vmatpush1.msra.mxu0 0.0
        %518 = vmatprep.mubr.f32.mxu0 0.0
        %v519 = vand.u32 %v274, 4294901760
        %v520 = vsub.f32 %v274, %v519
        %521 = vmatmul.mubr.f32.gmra.mrb[0].mxu0 %v520
        %v522 = vpop.f32.mrb[0].mxu0
        %v523 = vadd.f32 %v443, %v522
        %v524 = vpop.f32.mrb[0].mxu0
        %525 = vdwg.mxu0
        %526 = vmatprep.subr.mxu0 0.0
        %v527 = vand.u32 %v268, 4294901760
        %528 = vmatpush1.msra.mxu0 %v527
        %529 = vmatprep.subr.mxu0 0.0
        %v530 = vand.u32 %v269, 4294901760
        %531 = vmatpush1.msra.mxu0 %v530
        %532 = vmatprep.subr.mxu0 0.0
        %v533 = vand.u32 %v270, 4294901760
        %534 = vmatpush1.msra.mxu0 %v533
        %535 = vmatprep.subr.mxu0 0.0
        %v536 = vand.u32 %v271, 4294901760
        %537 = vmatpush1.msra.mxu0 %v536
        %538 = vmatprep.subr.mxu0 0.0
        %539 = vmatpush1.msra.mxu0 0.0
        %540 = vmatprep.subr.mxu0 0.0
        %541 = vmatpush1.msra.mxu0 0.0
        %542 = vmatprep.subr.mxu0 0.0
        %543 = vmatpush1.msra.mxu0 0.0
        %544 = vmatprep.subr.mxu0 0.0
        %545 = vmatpush1.msra.mxu0 0.0
        %546 = vmatprep.subr.mxu0 0.0
        %547 = vmatpush1.msra.mxu0 0.0
        %548 = vmatprep.subr.mxu0 0.0
        %549 = vmatpush1.msra.mxu0 0.0
        %550 = vmatprep.subr.mxu0 0.0
        %551 = vmatpush1.msra.mxu0 0.0
        %552 = vmatprep.subr.mxu0 0.0
        %553 = vmatpush1.msra.mxu0 0.0
        %554 = vmatprep.subr.mxu0 0.0
        %555 = vmatpush1.msra.mxu0 0.0
        %556 = vmatprep.subr.mxu0 0.0
        %557 = vmatpush1.msra.mxu0 0.0
        %558 = vmatprep.subr.mxu0 0.0
        %559 = vmatpush1.msra.mxu0 0.0
        %560 = vmatprep.subr.mxu0 0.0
        %561 = vmatpush1.msra.mxu0 0.0
        %562 = vmatprep.subr.mxu0 0.0
        %563 = vmatpush1.msra.mxu0 0.0
        %564 = vmatprep.subr.mxu0 0.0
        %565 = vmatpush1.msra.mxu0 0.0
        %566 = vmatprep.subr.mxu0 0.0
        %567 = vmatpush1.msra.mxu0 0.0
        %568 = vmatprep.subr.mxu0 0.0
        %569 = vmatpush1.msra.mxu0 0.0
        %570 = vmatprep.subr.mxu0 0.0
        %571 = vmatpush1.msra.mxu0 0.0
        %572 = vmatprep.subr.mxu0 0.0
        %573 = vmatpush1.msra.mxu0 0.0
        %574 = vmatprep.subr.mxu0 0.0
        %575 = vmatpush1.msra.mxu0 0.0
        %576 = vmatprep.subr.mxu0 0.0
        %577 = vmatpush1.msra.mxu0 0.0
        %578 = vmatprep.subr.mxu0 0.0
        %579 = vmatpush1.msra.mxu0 0.0
        %580 = vmatprep.subr.mxu0 0.0
        %581 = vmatpush1.msra.mxu0 0.0
        %582 = vmatprep.subr.mxu0 0.0
        %583 = vmatpush1.msra.mxu0 0.0
        %584 = vmatprep.subr.mxu0 0.0
        %585 = vmatpush1.msra.mxu0 0.0
        %586 = vmatprep.subr.mxu0 0.0
        %587 = vmatpush1.msra.mxu0 0.0
        %588 = vmatprep.subr.mxu0 0.0
        %589 = vmatpush1.msra.mxu0 0.0
        %590 = vmatprep.subr.mxu0 0.0
        %591 = vmatpush1.msra.mxu0 0.0
        %592 = vmatprep.subr.mxu0 0.0
        %593 = vmatpush1.msra.mxu0 0.0
        %594 = vmatprep.mubr.f32.mxu0 0.0
        %v595 = vand.u32 %v274, 4294901760
        %v596 = vsub.f32 %v274, %v595
        %v597 = vand.u32 %v596, 4294901760
        %598 = vmatmul.mubr.f32.gmra.mrb[0].mxu0 %v597
        %v599 = vpop.f32.mrb[0].mxu0
        %v600 = vadd.f32 %v523, %v599
        %v601 = vpop.f32.mrb[0].mxu0
        %602 = vdwg.mxu0
        %603 = vmatprep.subr.mxu0 0.0
        %v604 = vand.u32 %v268, 4294901760
        %v605 = vsub.f32 %v268, %v604
        %v606 = vand.u32 %v605, 4294901760
        %607 = vmatpush1.msra.mxu0 %v606
        %608 = vmatprep.subr.mxu0 0.0
        %v609 = vand.u32 %v269, 4294901760
        %v610 = vsub.f32 %v269, %v609
        %v611 = vand.u32 %v610, 4294901760
        %612 = vmatpush1.msra.mxu0 %v611
        %613 = vmatprep.subr.mxu0 0.0
        %v614 = vand.u32 %v270, 4294901760
        %v615 = vsub.f32 %v270, %v614
        %v616 = vand.u32 %v615, 4294901760
        %617 = vmatpush1.msra.mxu0 %v616
        %618 = vmatprep.subr.mxu0 0.0
        %v619 = vand.u32 %v271, 4294901760
        %v620 = vsub.f32 %v271, %v619
        %v621 = vand.u32 %v620, 4294901760
        %622 = vmatpush1.msra.mxu0 %v621
        %623 = vmatprep.subr.mxu0 0.0
        %624 = vmatpush1.msra.mxu0 0.0
        %625 = vmatprep.subr.mxu0 0.0
        %626 = vmatpush1.msra.mxu0 0.0
        %627 = vmatprep.subr.mxu0 0.0
        %628 = vmatpush1.msra.mxu0 0.0
        %629 = vmatprep.subr.mxu0 0.0
        %630 = vmatpush1.msra.mxu0 0.0
        %631 = vmatprep.subr.mxu0 0.0
        %632 = vmatpush1.msra.mxu0 0.0
        %633 = vmatprep.subr.mxu0 0.0
        %634 = vmatpush1.msra.mxu0 0.0
        %635 = vmatprep.subr.mxu0 0.0
        %636 = vmatpush1.msra.mxu0 0.0
        %637 = vmatprep.subr.mxu0 0.0
        %638 = vmatpush1.msra.mxu0 0.0
        %639 = vmatprep.subr.mxu0 0.0
        %640 = vmatpush1.msra.mxu0 0.0
        %641 = vmatprep.subr.mxu0 0.0
        %642 = vmatpush1.msra.mxu0 0.0
        %643 = vmatprep.subr.mxu0 0.0
        %644 = vmatpush1.msra.mxu0 0.0
        %645 = vmatprep.subr.mxu0 0.0
        %646 = vmatpush1.msra.mxu0 0.0
        %647 = vmatprep.subr.mxu0 0.0
        %648 = vmatpush1.msra.mxu0 0.0
        %649 = vmatprep.subr.mxu0 0.0
        %650 = vmatpush1.msra.mxu0 0.0
        %651 = vmatprep.subr.mxu0 0.0
        %652 = vmatpush1.msra.mxu0 0.0
        %653 = vmatprep.subr.mxu0 0.0
        %654 = vmatpush1.msra.mxu0 0.0
        %655 = vmatprep.subr.mxu0 0.0
        %656 = vmatpush1.msra.mxu0 0.0
        %657 = vmatprep.subr.mxu0 0.0
        %658 = vmatpush1.msra.mxu0 0.0
        %659 = vmatprep.subr.mxu0 0.0
        %660 = vmatpush1.msra.mxu0 0.0
        %661 = vmatprep.subr.mxu0 0.0
        %662 = vmatpush1.msra.mxu0 0.0
        %663 = vmatprep.subr.mxu0 0.0
        %664 = vmatpush1.msra.mxu0 0.0
        %665 = vmatprep.subr.mxu0 0.0
        %666 = vmatpush1.msra.mxu0 0.0
        %667 = vmatprep.subr.mxu0 0.0
        %668 = vmatpush1.msra.mxu0 0.0
        %669 = vmatprep.subr.mxu0 0.0
        %670 = vmatpush1.msra.mxu0 0.0
        %671 = vmatprep.subr.mxu0 0.0
        %672 = vmatpush1.msra.mxu0 0.0
        %673 = vmatprep.subr.mxu0 0.0
        %674 = vmatpush1.msra.mxu0 0.0
        %675 = vmatprep.subr.mxu0 0.0
        %676 = vmatpush1.msra.mxu0 0.0
        %677 = vmatprep.subr.mxu0 0.0
        %678 = vmatpush1.msra.mxu0 0.0
        %679 = vmatprep.mubr.f32.mxu0 0.0
        %v680 = vand.u32 %v274, 4294901760
        %681 = vmatmul.mubr.f32.gmra.mrb[0].mxu0 %v680
        %v682 = vpop.f32.mrb[0].mxu0
        %v683 = vadd.f32 %v600, %v682
        %v684 = vpop.f32.mrb[0].mxu0
        %685 = vdwg.mxu0
        %686 = vmatprep.subr.mxu0 0.0
        %v687 = vand.u32 %v268, 4294901760
        %688 = vmatpush1.msra.mxu0 %v687
        %689 = vmatprep.subr.mxu0 0.0
        %v690 = vand.u32 %v269, 4294901760
        %691 = vmatpush1.msra.mxu0 %v690
        %692 = vmatprep.subr.mxu0 0.0
        %v693 = vand.u32 %v270, 4294901760
        %694 = vmatpush1.msra.mxu0 %v693
        %695 = vmatprep.subr.mxu0 0.0
        %v696 = vand.u32 %v271, 4294901760
        %697 = vmatpush1.msra.mxu0 %v696
        %698 = vmatprep.subr.mxu0 0.0
        %699 = vmatpush1.msra.mxu0 0.0
        %700 = vmatprep.subr.mxu0 0.0
        %701 = vmatpush1.msra.mxu0 0.0
        %702 = vmatprep.subr.mxu0 0.0
        %703 = vmatpush1.msra.mxu0 0.0
        %704 = vmatprep.subr.mxu0 0.0
        %705 = vmatpush1.msra.mxu0 0.0
        %706 = vmatprep.subr.mxu0 0.0
        %707 = vmatpush1.msra.mxu0 0.0
        %708 = vmatprep.subr.mxu0 0.0
        %709 = vmatpush1.msra.mxu0 0.0
        %710 = vmatprep.subr.mxu0 0.0
        %711 = vmatpush1.msra.mxu0 0.0
        %712 = vmatprep.subr.mxu0 0.0
        %713 = vmatpush1.msra.mxu0 0.0
        %714 = vmatprep.subr.mxu0 0.0
        %715 = vmatpush1.msra.mxu0 0.0
        %716 = vmatprep.subr.mxu0 0.0
        %717 = vmatpush1.msra.mxu0 0.0
        %718 = vmatprep.subr.mxu0 0.0
        %719 = vmatpush1.msra.mxu0 0.0
        %720 = vmatprep.subr.mxu0 0.0
        %721 = vmatpush1.msra.mxu0 0.0
        %722 = vmatprep.subr.mxu0 0.0
        %723 = vmatpush1.msra.mxu0 0.0
        %724 = vmatprep.subr.mxu0 0.0
        %725 = vmatpush1.msra.mxu0 0.0
        %726 = vmatprep.subr.mxu0 0.0
        %727 = vmatpush1.msra.mxu0 0.0
        %728 = vmatprep.subr.mxu0 0.0
        %729 = vmatpush1.msra.mxu0 0.0
        %730 = vmatprep.subr.mxu0 0.0
        %731 = vmatpush1.msra.mxu0 0.0
        %732 = vmatprep.subr.mxu0 0.0
        %733 = vmatpush1.msra.mxu0 0.0
        %734 = vmatprep.subr.mxu0 0.0
        %735 = vmatpush1.msra.mxu0 0.0
        %736 = vmatprep.subr.mxu0 0.0
        %737 = vmatpush1.msra.mxu0 0.0
        %738 = vmatprep.subr.mxu0 0.0
        %739 = vmatpush1.msra.mxu0 0.0
        %740 = vmatprep.subr.mxu0 0.0
        %741 = vmatpush1.msra.mxu0 0.0
        %742 = vmatprep.subr.mxu0 0.0
        %743 = vmatpush1.msra.mxu0 0.0
        %744 = vmatprep.subr.mxu0 0.0
        %745 = vmatpush1.msra.mxu0 0.0
        %746 = vmatprep.subr.mxu0 0.0
        %747 = vmatpush1.msra.mxu0 0.0
        %748 = vmatprep.subr.mxu0 0.0
        %749 = vmatpush1.msra.mxu0 0.0
        %750 = vmatprep.subr.mxu0 0.0
        %751 = vmatpush1.msra.mxu0 0.0
        %752 = vmatprep.subr.mxu0 0.0
        %753 = vmatpush1.msra.mxu0 0.0
        %754 = vmatprep.mubr.f32.mxu0 0.0
        %v755 = vand.u32 %v274, 4294901760
        %756 = vmatmul.mubr.f32.gmra.mrb[0].mxu0 %v755
        %v757 = vpop.f32.mrb[0].mxu0
        %v758 = vadd.f32 %v683, %v757
        %v759 = vpop.f32.mrb[0].mxu0
        %760 = vdwg.mxu0
        %v761 = vmax.f32 %v758, 0.0
        %v762 = vld [vmem:[%s2] sm:$0xff]
        %v763 = vld [vmem:[%s2 + $0x8] sm:$0xff]
        %v764 = vld [vmem:[%s2 + $0x10] sm:$0xff]
        %v765 = vld [vmem:[%s2 + $0x18] sm:$0xff]
        %v766 = vld [vmem:[%s2 + $0x20] sm:$0xff]
        %v767 = vld [vmem:[%s2 + $0x28] sm:$0xff]
        %v768 = vld [vmem:[%s2 + $0x30] sm:$0xff]
        %v769 = vld [vmem:[%s2 + $0x38] sm:$0xff]
        %v770 = vld [vmem:[%s2 + $0x40] sm:$0xff]
        %v771 = vld [vmem:[%s2 + $0x48] sm:$0xff]
        %v772 = vld [vmem:[%s2 + $0x50] sm:$0xff]
        %v773 = vld [vmem:[%s2 + $0x58] sm:$0xff]
        %v774 = vld [vmem:[%s2 + $0x60] sm:$0xff]
        %v775 = vld [vmem:[%s2 + $0x68] sm:$0xff]
        %v776 = vld [vmem:[%s2 + $0x70] sm:$0xff]
        %v777 = vld [vmem:[%s2 + $0x78] sm:$0xff]
        %v778 = vld [vmem:[%s3] sm:$0x1]
        %v780 = vlaneseq
        %v781 = vshrl.u32 %v780, 7
        %v782 = vsub.s32 0, %v781
        %v783 = vrot.slane %v778, %v782
        %785 = vmatprep.subr.mxu0 0.0
        %v786 = vand.u32 %v762, 4294901760
        %787 = vmatpush1.msra.mxu0 %v786
        %788 = vmatprep.subr.mxu0 0.0
        %v789 = vand.u32 %v763, 4294901760
        %790 = vmatpush1.msra.mxu0 %v789
        %791 = vmatprep.subr.mxu0 0.0
        %v792 = vand.u32 %v764, 4294901760
        %793 = vmatpush1.msra.mxu0 %v792
        %794 = vmatprep.subr.mxu0 0.0
        %v795 = vand.u32 %v765, 4294901760
        %796 = vmatpush1.msra.mxu0 %v795
        %797 = vmatprep.subr.mxu0 0.0
        %v798 = vand.u32 %v766, 4294901760
        %799 = vmatpush1.msra.mxu0 %v798
        %800 = vmatprep.subr.mxu0 0.0
        %v801 = vand.u32 %v767, 4294901760
        %802 = vmatpush1.msra.mxu0 %v801
        %803 = vmatprep.subr.mxu0 0.0
        %v804 = vand.u32 %v768, 4294901760
        %805 = vmatpush1.msra.mxu0 %v804
        %806 = vmatprep.subr.mxu0 0.0
        %v807 = vand.u32 %v769, 4294901760
        %808 = vmatpush1.msra.mxu0 %v807
        %809 = vmatprep.subr.mxu0 0.0
        %v810 = vand.u32 %v770, 4294901760
        %811 = vmatpush1.msra.mxu0 %v810
        %812 = vmatprep.subr.mxu0 0.0
        %v813 = vand.u32 %v771, 4294901760
        %814 = vmatpush1.msra.mxu0 %v813
        %815 = vmatprep.subr.mxu0 0.0
        %v816 = vand.u32 %v772, 4294901760
        %817 = vmatpush1.msra.mxu0 %v816
        %818 = vmatprep.subr.mxu0 0.0
        %v819 = vand.u32 %v773, 4294901760
        %820 = vmatpush1.msra.mxu0 %v819
        %821 = vmatprep.subr.mxu0 0.0
        %v822 = vand.u32 %v774, 4294901760
        %823 = vmatpush1.msra.mxu0 %v822
        %824 = vmatprep.subr.mxu0 0.0
        %v825 = vand.u32 %v775, 4294901760
        %826 = vmatpush1.msra.mxu0 %v825
        %827 = vmatprep.subr.mxu0 0.0
        %v828 = vand.u32 %v776, 4294901760
        %829 = vmatpush1.msra.mxu0 %v828
        %830 = vmatprep.subr.mxu0 0.0
        %v831 = vand.u32 %v777, 4294901760
        %832 = vmatpush1.msra.mxu0 %v831
        %833 = vmatprep.subr.mxu0 0.0
        %834 = vmatpush1.msra.mxu0 0.0
        %835 = vmatprep.subr.mxu0 0.0
        %836 = vmatpush1.msra.mxu0 0.0
        %837 = vmatprep.subr.mxu0 0.0
        %838 = vmatpush1.msra.mxu0 0.0
        %839 = vmatprep.subr.mxu0 0.0
        %840 = vmatpush1.msra.mxu0 0.0
        %841 = vmatprep.subr.mxu0 0.0
        %842 = vmatpush1.msra.mxu0 0.0
        %843 = vmatprep.subr.mxu0 0.0
        %844 = vmatpush1.msra.mxu0 0.0
        %845 = vmatprep.subr.mxu0 0.0
        %846 = vmatpush1.msra.mxu0 0.0
        %847 = vmatprep.subr.mxu0 0.0
        %848 = vmatpush1.msra.mxu0 0.0
        %849 = vmatprep.subr.mxu0 0.0
        %850 = vmatpush1.msra.mxu0 0.0
        %851 = vmatprep.subr.mxu0 0.0
        %852 = vmatpush1.msra.mxu0 0.0
        %853 = vmatprep.subr.mxu0 0.0
        %854 = vmatpush1.msra.mxu0 0.0
        %855 = vmatprep.subr.mxu0 0.0
        %856 = vmatpush1.msra.mxu0 0.0
        %857 = vmatprep.subr.mxu0 0.0
        %858 = vmatpush1.msra.mxu0 0.0
        %859 = vmatprep.subr.mxu0 0.0
        %860 = vmatpush1.msra.mxu0 0.0
        %861 = vmatprep.subr.mxu0 0.0
        %862 = vmatpush1.msra.mxu0 0.0
        %863 = vmatprep.subr.mxu0 0.0
        %864 = vmatpush1.msra.mxu0 0.0
        %865 = vmatprep.mubr.f32.mxu0 0.0
        %v866 = vand.u32 %v761, 4294901760
        %v867 = vsub.f32 %v761, %v866
        %v868 = vand.u32 %v867, 4294901760
        %v869 = vsub.f32 %v867, %v868
        %v870 = vand.u32 %v869, 4294901760
        %871 = vmatmul.mubr.f32.gmra.mrb[0].mxu0 %v870
        %v872 = vpop.f32.mrb[0].mxu0
        %v873 = vadd.f32 %v783, %v872
        %v874 = vpop.f32.mrb[0].mxu0
        %875 = vdwg.mxu0
        %876 = vmatprep.subr.mxu0 0.0
        %v877 = vand.u32 %v762, 4294901760
        %v878 = vsub.f32 %v762, %v877
        %v879 = vand.u32 %v878, 4294901760
        %v880 = vsub.f32 %v878, %v879
        %v881 = vand.u32 %v880, 4294901760
        %882 = vmatpush1.msra.mxu0 %v881
        %883 = vmatprep.subr.mxu0 0.0
        %v884 = vand.u32 %v763, 4294901760
        %v885 = vsub.f32 %v763, %v884
        %v886 = vand.u32 %v885, 4294901760
        %v887 = vsub.f32 %v885, %v886
        %v888 = vand.u32 %v887, 4294901760
        %889 = vmatpush1.msra.mxu0 %v888
        %890 = vmatprep.subr.mxu0 0.0
        %v891 = vand.u32 %v764, 4294901760
        %v892 = vsub.f32 %v764, %v891
        %v893 = vand.u32 %v892, 4294901760
        %v894 = vsub.f32 %v892, %v893
        %v895 = vand.u32 %v894, 4294901760
        %896 = vmatpush1.msra.mxu0 %v895
        %897 = vmatprep.subr.mxu0 0.0
        %v898 = vand.u32 %v765, 4294901760
        %v899 = vsub.f32 %v765, %v898
        %v900 = vand.u32 %v899, 4294901760
        %v901 = vsub.f32 %v899, %v900
        %v902 = vand.u32 %v901, 4294901760
        %903 = vmatpush1.msra.mxu0 %v902
        %904 = vmatprep.subr.mxu0 0.0
        %v905 = vand.u32 %v766, 4294901760
        %v906 = vsub.f32 %v766, %v905
        %v907 = vand.u32 %v906, 4294901760
        %v908 = vsub.f32 %v906, %v907
        %v909 = vand.u32 %v908, 4294901760
        %910 = vmatpush1.msra.mxu0 %v909
        %911 = vmatprep.subr.mxu0 0.0
        %v912 = vand.u32 %v767, 4294901760
        %v913 = vsub.f32 %v767, %v912
        %v914 = vand.u32 %v913, 4294901760
        %v915 = vsub.f32 %v913, %v914
        %v916 = vand.u32 %v915, 4294901760
        %917 = vmatpush1.msra.mxu0 %v916
        %918 = vmatprep.subr.mxu0 0.0
        %v919 = vand.u32 %v768, 4294901760
        %v920 = vsub.f32 %v768, %v919
        %v921 = vand.u32 %v920, 4294901760
        %v922 = vsub.f32 %v920, %v921
        %v923 = vand.u32 %v922, 4294901760
        %924 = vmatpush1.msra.mxu0 %v923
        %925 = vmatprep.subr.mxu0 0.0
        %v926 = vand.u32 %v769, 4294901760
        %v927 = vsub.f32 %v769, %v926
        %v928 = vand.u32 %v927, 4294901760
        %v929 = vsub.f32 %v927, %v928
        %v930 = vand.u32 %v929, 4294901760
        %931 = vmatpush1.msra.mxu0 %v930
        %932 = vmatprep.subr.mxu0 0.0
        %v933 = vand.u32 %v770, 4294901760
        %v934 = vsub.f32 %v770, %v933
        %v935 = vand.u32 %v934, 4294901760
        %v936 = vsub.f32 %v934, %v935
        %v937 = vand.u32 %v936, 4294901760
        %938 = vmatpush1.msra.mxu0 %v937
        %939 = vmatprep.subr.mxu0 0.0
        %v940 = vand.u32 %v771, 4294901760
        %v941 = vsub.f32 %v771, %v940
        %v942 = vand.u32 %v941, 4294901760
        %v943 = vsub.f32 %v941, %v942
        %v944 = vand.u32 %v943, 4294901760
        %945 = vmatpush1.msra.mxu0 %v944
        %946 = vmatprep.subr.mxu0 0.0
        %v947 = vand.u32 %v772, 4294901760
        %v948 = vsub.f32 %v772, %v947
        %v949 = vand.u32 %v948, 4294901760
        %v950 = vsub.f32 %v948, %v949
        %v951 = vand.u32 %v950, 4294901760
        %952 = vmatpush1.msra.mxu0 %v951
        %953 = vmatprep.subr.mxu0 0.0
        %v954 = vand.u32 %v773, 4294901760
        %v955 = vsub.f32 %v773, %v954
        %v956 = vand.u32 %v955, 4294901760
        %v957 = vsub.f32 %v955, %v956
        %v958 = vand.u32 %v957, 4294901760
        %959 = vmatpush1.msra.mxu0 %v958
        %960 = vmatprep.subr.mxu0 0.0
        %v961 = vand.u32 %v774, 4294901760
        %v962 = vsub.f32 %v774, %v961
        %v963 = vand.u32 %v962, 4294901760
        %v964 = vsub.f32 %v962, %v963
        %v965 = vand.u32 %v964, 4294901760
        %966 = vmatpush1.msra.mxu0 %v965
        %967 = vmatprep.subr.mxu0 0.0
        %v968 = vand.u32 %v775, 4294901760
        %v969 = vsub.f32 %v775, %v968
        %v970 = vand.u32 %v969, 4294901760
        %v971 = vsub.f32 %v969, %v970
        %v972 = vand.u32 %v971, 4294901760
        %973 = vmatpush1.msra.mxu0 %v972
        %974 = vmatprep.subr.mxu0 0.0
        %v975 = vand.u32 %v776, 4294901760
        %v976 = vsub.f32 %v776, %v975
        %v977 = vand.u32 %v976, 4294901760
        %v978 = vsub.f32 %v976, %v977
        %v979 = vand.u32 %v978, 4294901760
        %980 = vmatpush1.msra.mxu0 %v979
        %981 = vmatprep.subr.mxu0 0.0
        %v982 = vand.u32 %v777, 4294901760
        %v983 = vsub.f32 %v777, %v982
        %v984 = vand.u32 %v983, 4294901760
        %v985 = vsub.f32 %v983, %v984
        %v986 = vand.u32 %v985, 4294901760
        %987 = vmatpush1.msra.mxu0 %v986
        %988 = vmatprep.subr.mxu0 0.0
        %989 = vmatpush1.msra.mxu0 0.0
        %990 = vmatprep.subr.mxu0 0.0
        %991 = vmatpush1.msra.mxu0 0.0
        %992 = vmatprep.subr.mxu0 0.0
        %993 = vmatpush1.msra.mxu0 0.0
        %994 = vmatprep.subr.mxu0 0.0
        %995 = vmatpush1.msra.mxu0 0.0
        %996 = vmatprep.subr.mxu0 0.0
        %997 = vmatpush1.msra.mxu0 0.0
        %998 = vmatprep.subr.mxu0 0.0
        %999 = vmatpush1.msra.mxu0 0.0
        %1000 = vmatprep.subr.mxu0 0.0
        %1001 = vmatpush1.msra.mxu0 0.0
        %1002 = vmatprep.subr.mxu0 0.0
        %1003 = vmatpush1.msra.mxu0 0.0
        %1004 = vmatprep.subr.mxu0 0.0
        %1005 = vmatpush1.msra.mxu0 0.0
        %1006 = vmatprep.subr.mxu0 0.0
        %1007 = vmatpush1.msra.mxu0 0.0
        %1008 = vmatprep.subr.mxu0 0.0
        %1009 = vmatpush1.msra.mxu0 0.0
        %1010 = vmatprep.subr.mxu0 0.0
        %1011 = vmatpush1.msra.mxu0 0.0
        %1012 = vmatprep.subr.mxu0 0.0
        %1013 = vmatpush1.msra.mxu0 0.0
        %1014 = vmatprep.subr.mxu0 0.0
        %1015 = vmatpush1.msra.mxu0 0.0
        %1016 = vmatprep.subr.mxu0 0.0
        %1017 = vmatpush1.msra.mxu0 0.0
        %1018 = vmatprep.subr.mxu0 0.0
        %1019 = vmatpush1.msra.mxu0 0.0
        %1020 = vmatprep.mubr.f32.mxu0 0.0
        %v1021 = vand.u32 %v761, 4294901760
        %1022 = vmatmul.mubr.f32.gmra.mrb[0].mxu0 %v1021
        %v1023 = vpop.f32.mrb[0].mxu0
        %v1024 = vadd.f32 %v873, %v1023
        %v1025 = vpop.f32.mrb[0].mxu0
        %1026 = vdwg.mxu0
        %1027 = vmatprep.subr.mxu0 0.0
        %v1028 = vand.u32 %v762, 4294901760
        %v1029 = vsub.f32 %v762, %v1028
        %1030 = vmatpush1.msra.mxu0 %v1029
        %1031 = vmatprep.subr.mxu0 0.0
        %v1032 = vand.u32 %v763, 4294901760
        %v1033 = vsub.f32 %v763, %v1032
        %1034 = vmatpush1.msra.mxu0 %v1033
        %1035 = vmatprep.subr.mxu0 0.0
        %v1036 = vand.u32 %v764, 4294901760
        %v1037 = vsub.f32 %v764, %v1036
        %1038 = vmatpush1.msra.mxu0 %v1037
        %1039 = vmatprep.subr.mxu0 0.0
        %v1040 = vand.u32 %v765, 4294901760
        %v1041 = vsub.f32 %v765, %v1040
        %1042 = vmatpush1.msra.mxu0 %v1041
        %1043 = vmatprep.subr.mxu0 0.0
        %v1044 = vand.u32 %v766, 4294901760
        %v1045 = vsub.f32 %v766, %v1044
        %1046 = vmatpush1.msra.mxu0 %v1045
        %1047 = vmatprep.subr.mxu0 0.0
        %v1048 = vand.u32 %v767, 4294901760
        %v1049 = vsub.f32 %v767, %v1048
        %1050 = vmatpush1.msra.mxu0 %v1049
        %1051 = vmatprep.subr.mxu0 0.0
        %v1052 = vand.u32 %v768, 4294901760
        %v1053 = vsub.f32 %v768, %v1052
        %1054 = vmatpush1.msra.mxu0 %v1053
        %1055 = vmatprep.subr.mxu0 0.0
        %v1056 = vand.u32 %v769, 4294901760
        %v1057 = vsub.f32 %v769, %v1056
        %1058 = vmatpush1.msra.mxu0 %v1057
        %1059 = vmatprep.subr.mxu0 0.0
        %v1060 = vand.u32 %v770, 4294901760
        %v1061 = vsub.f32 %v770, %v1060
        %1062 = vmatpush1.msra.mxu0 %v1061
        %1063 = vmatprep.subr.mxu0 0.0
        %v1064 = vand.u32 %v771, 4294901760
        %v1065 = vsub.f32 %v771, %v1064
        %1066 = vmatpush1.msra.mxu0 %v1065
        %1067 = vmatprep.subr.mxu0 0.0
        %v1068 = vand.u32 %v772, 4294901760
        %v1069 = vsub.f32 %v772, %v1068
        %1070 = vmatpush1.msra.mxu0 %v1069
        %1071 = vmatprep.subr.mxu0 0.0
        %v1072 = vand.u32 %v773, 4294901760
        %v1073 = vsub.f32 %v773, %v1072
        %1074 = vmatpush1.msra.mxu0 %v1073
        %1075 = vmatprep.subr.mxu0 0.0
        %v1076 = vand.u32 %v774, 4294901760
        %v1077 = vsub.f32 %v774, %v1076
        %1078 = vmatpush1.msra.mxu0 %v1077
        %1079 = vmatprep.subr.mxu0 0.0
        %v1080 = vand.u32 %v775, 4294901760
        %v1081 = vsub.f32 %v775, %v1080
        %1082 = vmatpush1.msra.mxu0 %v1081
        %1083 = vmatprep.subr.mxu0 0.0
        %v1084 = vand.u32 %v776, 4294901760
        %v1085 = vsub.f32 %v776, %v1084
        %1086 = vmatpush1.msra.mxu0 %v1085
        %1087 = vmatprep.subr.mxu0 0.0
        %v1088 = vand.u32 %v777, 4294901760
        %v1089 = vsub.f32 %v777, %v1088
        %1090 = vmatpush1.msra.mxu0 %v1089
        %1091 = vmatprep.subr.mxu0 0.0
        %1092 = vmatpush1.msra.mxu0 0.0
        %1093 = vmatprep.subr.mxu0 0.0
        %1094 = vmatpush1.msra.mxu0 0.0
        %1095 = vmatprep.subr.mxu0 0.0
        %1096 = vmatpush1.msra.mxu0 0.0
        %1097 = vmatprep.subr.mxu0 0.0
        %1098 = vmatpush1.msra.mxu0 0.0
        %1099 = vmatprep.subr.mxu0 0.0
        %1100 = vmatpush1.msra.mxu0 0.0
        %1101 = vmatprep.subr.mxu0 0.0
        %1102 = vmatpush1.msra.mxu0 0.0
        %1103 = vmatprep.subr.mxu0 0.0
        %1104 = vmatpush1.msra.mxu0 0.0
        %1105 = vmatprep.subr.mxu0 0.0
        %1106 = vmatpush1.msra.mxu0 0.0
        %1107 = vmatprep.subr.mxu0 0.0
        %1108 = vmatpush1.msra.mxu0 0.0
        %1109 = vmatprep.subr.mxu0 0.0
        %1110 = vmatpush1.msra.mxu0 0.0
        %1111 = vmatprep.subr.mxu0 0.0
        %1112 = vmatpush1.msra.mxu0 0.0
        %1113 = vmatprep.subr.mxu0 0.0
        %1114 = vmatpush1.msra.mxu0 0.0
        %1115 = vmatprep.subr.mxu0 0.0
        %1116 = vmatpush1.msra.mxu0 0.0
        %1117 = vmatprep.subr.mxu0 0.0
        %1118 = vmatpush1.msra.mxu0 0.0
        %1119 = vmatprep.subr.mxu0 0.0
        %1120 = vmatpush1.msra.mxu0 0.0
        %1121 = vmatprep.subr.mxu0 0.0
        %1122 = vmatpush1.msra.mxu0 0.0
        %1123 = vmatprep.mubr.f32.mxu0 0.0
        %v1124 = vand.u32 %v761, 4294901760
        %v1125 = vsub.f32 %v761, %v1124
        %1126 = vmatmul.mubr.f32.gmra.mrb[0].mxu0 %v1125
        %v1127 = vpop.f32.mrb[0].mxu0
        %v1128 = vadd.f32 %v1024, %v1127
        %v1129 = vpop.f32.mrb[0].mxu0
        %1130 = vdwg.mxu0
        %1131 = vmatprep.subr.mxu0 0.0
        %v1132 = vand.u32 %v762, 4294901760
        %1133 = vmatpush1.msra.mxu0 %v1132
        %1134 = vmatprep.subr.mxu0 0.0
        %v1135 = vand.u32 %v763, 4294901760
        %1136 = vmatpush1.msra.mxu0 %v1135
        %1137 = vmatprep.subr.mxu0 0.0
        %v1138 = vand.u32 %v764, 4294901760
        %1139 = vmatpush1.msra.mxu0 %v1138
        %1140 = vmatprep.subr.mxu0 0.0
        %v1141 = vand.u32 %v765, 4294901760
        %1142 = vmatpush1.msra.mxu0 %v1141
        %1143 = vmatprep.subr.mxu0 0.0
        %v1144 = vand.u32 %v766, 4294901760
        %1145 = vmatpush1.msra.mxu0 %v1144
        %1146 = vmatprep.subr.mxu0 0.0
        %v1147 = vand.u32 %v767, 4294901760
        %1148 = vmatpush1.msra.mxu0 %v1147
        %1149 = vmatprep.subr.mxu0 0.0
        %v1150 = vand.u32 %v768, 4294901760
        %1151 = vmatpush1.msra.mxu0 %v1150
        %1152 = vmatprep.subr.mxu0 0.0
        %v1153 = vand.u32 %v769, 4294901760
        %1154 = vmatpush1.msra.mxu0 %v1153
        %1155 = vmatprep.subr.mxu0 0.0
        %v1156 = vand.u32 %v770, 4294901760
        %1157 = vmatpush1.msra.mxu0 %v1156
        %1158 = vmatprep.subr.mxu0 0.0
        %v1159 = vand.u32 %v771, 4294901760
        %1160 = vmatpush1.msra.mxu0 %v1159
        %1161 = vmatprep.subr.mxu0 0.0
        %v1162 = vand.u32 %v772, 4294901760
        %1163 = vmatpush1.msra.mxu0 %v1162
        %1164 = vmatprep.subr.mxu0 0.0
        %v1165 = vand.u32 %v773, 4294901760
        %1166 = vmatpush1.msra.mxu0 %v1165
        %1167 = vmatprep.subr.mxu0 0.0
        %v1168 = vand.u32 %v774, 4294901760
        %1169 = vmatpush1.msra.mxu0 %v1168
        %1170 = vmatprep.subr.mxu0 0.0
        %v1171 = vand.u32 %v775, 4294901760
        %1172 = vmatpush1.msra.mxu0 %v1171
        %1173 = vmatprep.subr.mxu0 0.0
        %v1174 = vand.u32 %v776, 4294901760
        %1175 = vmatpush1.msra.mxu0 %v1174
        %1176 = vmatprep.subr.mxu0 0.0
        %v1177 = vand.u32 %v777, 4294901760
        %1178 = vmatpush1.msra.mxu0 %v1177
        %1179 = vmatprep.subr.mxu0 0.0
        %1180 = vmatpush1.msra.mxu0 0.0
        %1181 = vmatprep.subr.mxu0 0.0
        %1182 = vmatpush1.msra.mxu0 0.0
        %1183 = vmatprep.subr.mxu0 0.0
        %1184 = vmatpush1.msra.mxu0 0.0
        %1185 = vmatprep.subr.mxu0 0.0
        %1186 = vmatpush1.msra.mxu0 0.0
        %1187 = vmatprep.subr.mxu0 0.0
        %1188 = vmatpush1.msra.mxu0 0.0
        %1189 = vmatprep.subr.mxu0 0.0
        %1190 = vmatpush1.msra.mxu0 0.0
        %1191 = vmatprep.subr.mxu0 0.0
        %1192 = vmatpush1.msra.mxu0 0.0
        %1193 = vmatprep.subr.mxu0 0.0
        %1194 = vmatpush1.msra.mxu0 0.0
        %1195 = vmatprep.subr.mxu0 0.0
        %1196 = vmatpush1.msra.mxu0 0.0
        %1197 = vmatprep.subr.mxu0 0.0
        %1198 = vmatpush1.msra.mxu0 0.0
        %1199 = vmatprep.subr.mxu0 0.0
        %1200 = vmatpush1.msra.mxu0 0.0
        %1201 = vmatprep.subr.mxu0 0.0
        %1202 = vmatpush1.msra.mxu0 0.0
        %1203 = vmatprep.subr.mxu0 0.0
        %1204 = vmatpush1.msra.mxu0 0.0
        %1205 = vmatprep.subr.mxu0 0.0
        %1206 = vmatpush1.msra.mxu0 0.0
        %1207 = vmatprep.subr.mxu0 0.0
        %1208 = vmatpush1.msra.mxu0 0.0
        %1209 = vmatprep.subr.mxu0 0.0
        %1210 = vmatpush1.msra.mxu0 0.0
        %1211 = vmatprep.mubr.f32.mxu0 0.0
        %v1212 = vand.u32 %v761, 4294901760
        %v1213 = vsub.f32 %v761, %v1212
        %v1214 = vand.u32 %v1213, 4294901760
        %1215 = vmatmul.mubr.f32.gmra.mrb[0].mxu0 %v1214
        %v1216 = vpop.f32.mrb[0].mxu0
        %v1217 = vadd.f32 %v1128, %v1216
        %v1218 = vpop.f32.mrb[0].mxu0
        %1219 = vdwg.mxu0
        %1220 = vmatprep.subr.mxu0 0.0
        %v1221 = vand.u32 %v762, 4294901760
        %v1222 = vsub.f32 %v762, %v1221
        %v1223 = vand.u32 %v1222, 4294901760
        %1224 = vmatpush1.msra.mxu0 %v1223
        %1225 = vmatprep.subr.mxu0 0.0
        %v1226 = vand.u32 %v763, 4294901760
        %v1227 = vsub.f32 %v763, %v1226
        %v1228 = vand.u32 %v1227, 4294901760
        %1229 = vmatpush1.msra.mxu0 %v1228
        %1230 = vmatprep.subr.mxu0 0.0
        %v1231 = vand.u32 %v764, 4294901760
        %v1232 = vsub.f32 %v764, %v1231
        %v1233 = vand.u32 %v1232, 4294901760
        %1234 = vmatpush1.msra.mxu0 %v1233
        %1235 = vmatprep.subr.mxu0 0.0
        %v1236 = vand.u32 %v765, 4294901760
        %v1237 = vsub.f32 %v765, %v1236
        %v1238 = vand.u32 %v1237, 4294901760
        %1239 = vmatpush1.msra.mxu0 %v1238
        %1240 = vmatprep.subr.mxu0 0.0
        %v1241 = vand.u32 %v766, 4294901760
        %v1242 = vsub.f32 %v766, %v1241
        %v1243 = vand.u32 %v1242, 4294901760
        %1244 = vmatpush1.msra.mxu0 %v1243
        %1245 = vmatprep.subr.mxu0 0.0
        %v1246 = vand.u32 %v767, 4294901760
        %v1247 = vsub.f32 %v767, %v1246
        %v1248 = vand.u32 %v1247, 4294901760
        %1249 = vmatpush1.msra.mxu0 %v1248
        %1250 = vmatprep.subr.mxu0 0.0
        %v1251 = vand.u32 %v768, 4294901760
        %v1252 = vsub.f32 %v768, %v1251
        %v1253 = vand.u32 %v1252, 4294901760
        %1254 = vmatpush1.msra.mxu0 %v1253
        %1255 = vmatprep.subr.mxu0 0.0
        %v1256 = vand.u32 %v769, 4294901760
        %v1257 = vsub.f32 %v769, %v1256
        %v1258 = vand.u32 %v1257, 4294901760
        %1259 = vmatpush1.msra.mxu0 %v1258
        %1260 = vmatprep.subr.mxu0 0.0
        %v1261 = vand.u32 %v770, 4294901760
        %v1262 = vsub.f32 %v770, %v1261
        %v1263 = vand.u32 %v1262, 4294901760
        %1264 = vmatpush1.msra.mxu0 %v1263
        %1265 = vmatprep.subr.mxu0 0.0
        %v1266 = vand.u32 %v771, 4294901760
        %v1267 = vsub.f32 %v771, %v1266
        %v1268 = vand.u32 %v1267, 4294901760
        %1269 = vmatpush1.msra.mxu0 %v1268
        %1270 = vmatprep.subr.mxu0 0.0
        %v1271 = vand.u32 %v772, 4294901760
        %v1272 = vsub.f32 %v772, %v1271
        %v1273 = vand.u32 %v1272, 4294901760
        %1274 = vmatpush1.msra.mxu0 %v1273
        %1275 = vmatprep.subr.mxu0 0.0
        %v1276 = vand.u32 %v773, 4294901760
        %v1277 = vsub.f32 %v773, %v1276
        %v1278 = vand.u32 %v1277, 4294901760
        %1279 = vmatpush1.msra.mxu0 %v1278
        %1280 = vmatprep.subr.mxu0 0.0
        %v1281 = vand.u32 %v774, 4294901760
        %v1282 = vsub.f32 %v774, %v1281
        %v1283 = vand.u32 %v1282, 4294901760
        %1284 = vmatpush1.msra.mxu0 %v1283
        %1285 = vmatprep.subr.mxu0 0.0
        %v1286 = vand.u32 %v775, 4294901760
        %v1287 = vsub.f32 %v775, %v1286
        %v1288 = vand.u32 %v1287, 4294901760
        %1289 = vmatpush1.msra.mxu0 %v1288
        %1290 = vmatprep.subr.mxu0 0.0
        %v1291 = vand.u32 %v776, 4294901760
        %v1292 = vsub.f32 %v776, %v1291
        %v1293 = vand.u32 %v1292, 4294901760
        %1294 = vmatpush1.msra.mxu0 %v1293
        %1295 = vmatprep.subr.mxu0 0.0
        %v1296 = vand.u32 %v777, 4294901760
        %v1297 = vsub.f32 %v777, %v1296
        %v1298 = vand.u32 %v1297, 4294901760
        %1299 = vmatpush1.msra.mxu0 %v1298
        %1300 = vmatprep.subr.mxu0 0.0
        %1301 = vmatpush1.msra.mxu0 0.0
        %1302 = vmatprep.subr.mxu0 0.0
        %1303 = vmatpush1.msra.mxu0 0.0
        %1304 = vmatprep.subr.mxu0 0.0
        %1305 = vmatpush1.msra.mxu0 0.0
        %1306 = vmatprep.subr.mxu0 0.0
        %1307 = vmatpush1.msra.mxu0 0.0
        %1308 = vmatprep.subr.mxu0 0.0
        %1309 = vmatpush1.msra.mxu0 0.0
        %1310 = vmatprep.subr.mxu0 0.0
        %1311 = vmatpush1.msra.mxu0 0.0
        %1312 = vmatprep.subr.mxu0 0.0
        %1313 = vmatpush1.msra.mxu0 0.0
        %1314 = vmatprep.subr.mxu0 0.0
        %1315 = vmatpush1.msra.mxu0 0.0
        %1316 = vmatprep.subr.mxu0 0.0
        %1317 = vmatpush1.msra.mxu0 0.0
        %1318 = vmatprep.subr.mxu0 0.0
        %1319 = vmatpush1.msra.mxu0 0.0
        %1320 = vmatprep.subr.mxu0 0.0
        %1321 = vmatpush1.msra.mxu0 0.0
        %1322 = vmatprep.subr.mxu0 0.0
        %1323 = vmatpush1.msra.mxu0 0.0
        %1324 = vmatprep.subr.mxu0 0.0
        %1325 = vmatpush1.msra.mxu0 0.0
        %1326 = vmatprep.subr.mxu0 0.0
        %1327 = vmatpush1.msra.mxu0 0.0
        %1328 = vmatprep.subr.mxu0 0.0
        %1329 = vmatpush1.msra.mxu0 0.0
        %1330 = vmatprep.subr.mxu0 0.0
        %1331 = vmatpush1.msra.mxu0 0.0
        %1332 = vmatprep.mubr.f32.mxu0 0.0
        %v1333 = vand.u32 %v761, 4294901760
        %1334 = vmatmul.mubr.f32.gmra.mrb[0].mxu0 %v1333
        %v1335 = vpop.f32.mrb[0].mxu0
        %v1336 = vadd.f32 %v1217, %v1335
        %v1337 = vpop.f32.mrb[0].mxu0
        %1338 = vdwg.mxu0
        %1339 = vmatprep.subr.mxu0 0.0
        %v1340 = vand.u32 %v762, 4294901760
        %1341 = vmatpush1.msra.mxu0 %v1340
        %1342 = vmatprep.subr.mxu0 0.0
        %v1343 = vand.u32 %v763, 4294901760
        %1344 = vmatpush1.msra.mxu0 %v1343
        %1345 = vmatprep.subr.mxu0 0.0
        %v1346 = vand.u32 %v764, 4294901760
        %1347 = vmatpush1.msra.mxu0 %v1346
        %1348 = vmatprep.subr.mxu0 0.0
        %v1349 = vand.u32 %v765, 4294901760
        %1350 = vmatpush1.msra.mxu0 %v1349
        %1351 = vmatprep.subr.mxu0 0.0
        %v1352 = vand.u32 %v766, 4294901760
        %1353 = vmatpush1.msra.mxu0 %v1352
        %1354 = vmatprep.subr.mxu0 0.0
        %v1355 = vand.u32 %v767, 4294901760
        %1356 = vmatpush1.msra.mxu0 %v1355
        %1357 = vmatprep.subr.mxu0 0.0
        %v1358 = vand.u32 %v768, 4294901760
        %1359 = vmatpush1.msra.mxu0 %v1358
        %1360 = vmatprep.subr.mxu0 0.0
        %v1361 = vand.u32 %v769, 4294901760
        %1362 = vmatpush1.msra.mxu0 %v1361
        %1363 = vmatprep.subr.mxu0 0.0
        %v1364 = vand.u32 %v770, 4294901760
        %1365 = vmatpush1.msra.mxu0 %v1364
        %1366 = vmatprep.subr.mxu0 0.0
        %v1367 = vand.u32 %v771, 4294901760
        %1368 = vmatpush1.msra.mxu0 %v1367
        %1369 = vmatprep.subr.mxu0 0.0
        %v1370 = vand.u32 %v772, 4294901760
        %1371 = vmatpush1.msra.mxu0 %v1370
        %1372 = vmatprep.subr.mxu0 0.0
        %v1373 = vand.u32 %v773, 4294901760
        %1374 = vmatpush1.msra.mxu0 %v1373
        %1375 = vmatprep.subr.mxu0 0.0
        %v1376 = vand.u32 %v774, 4294901760
        %1377 = vmatpush1.msra.mxu0 %v1376
        %1378 = vmatprep.subr.mxu0 0.0
        %v1379 = vand.u32 %v775, 4294901760
        %1380 = vmatpush1.msra.mxu0 %v1379
        %1381 = vmatprep.subr.mxu0 0.0
        %v1382 = vand.u32 %v776, 4294901760
        %1383 = vmatpush1.msra.mxu0 %v1382
        %1384 = vmatprep.subr.mxu0 0.0
        %v1385 = vand.u32 %v777, 4294901760
        %1386 = vmatpush1.msra.mxu0 %v1385
        %1387 = vmatprep.subr.mxu0 0.0
        %1388 = vmatpush1.msra.mxu0 0.0
        %1389 = vmatprep.subr.mxu0 0.0
        %1390 = vmatpush1.msra.mxu0 0.0
        %1391 = vmatprep.subr.mxu0 0.0
        %1392 = vmatpush1.msra.mxu0 0.0
        %1393 = vmatprep.subr.mxu0 0.0
        %1394 = vmatpush1.msra.mxu0 0.0
        %1395 = vmatprep.subr.mxu0 0.0
        %1396 = vmatpush1.msra.mxu0 0.0
        %1397 = vmatprep.subr.mxu0 0.0
        %1398 = vmatpush1.msra.mxu0 0.0
        %1399 = vmatprep.subr.mxu0 0.0
        %1400 = vmatpush1.msra.mxu0 0.0
        %1401 = vmatprep.subr.mxu0 0.0
        %1402 = vmatpush1.msra.mxu0 0.0
        %1403 = vmatprep.subr.mxu0 0.0
        %1404 = vmatpush1.msra.mxu0 0.0
        %1405 = vmatprep.subr.mxu0 0.0
        %1406 = vmatpush1.msra.mxu0 0.0
        %1407 = vmatprep.subr.mxu0 0.0
        %1408 = vmatpush1.msra.mxu0 0.0
        %1409 = vmatprep.subr.mxu0 0.0
        %1410 = vmatpush1.msra.mxu0 0.0
        %1411 = vmatprep.subr.mxu0 0.0
        %1412 = vmatpush1.msra.mxu0 0.0
        %1413 = vmatprep.subr.mxu0 0.0
        %1414 = vmatpush1.msra.mxu0 0.0
        %1415 = vmatprep.subr.mxu0 0.0
        %1416 = vmatpush1.msra.mxu0 0.0
        %1417 = vmatprep.subr.mxu0 0.0
        %1418 = vmatpush1.msra.mxu0 0.0
        %1419 = vmatprep.mubr.f32.mxu0 0.0
        %v1420 = vand.u32 %v761, 4294901760
        %1421 = vmatmul.mubr.f32.gmra.mrb[0].mxu0 %v1420
        %v1422 = vpop.f32.mrb[0].mxu0
        %v1423 = vadd.f32 %v1336, %v1422
        %v1424 = vpop.f32.mrb[0].mxu0
        %1425 = vdwg.mxu0
        %v1426 = vmax.f32 %v1423, 0.0
        %v1427 = vld [vmem:[%s4] sm:$0xff]
        %v1428 = vld [vmem:[%s4 + $0x8] sm:$0xff]
        %v1429 = vld [vmem:[%s4 + $0x10] sm:$0xff]
        %v1430 = vld [vmem:[%s4 + $0x18] sm:$0xff]
        %v1431 = vld [vmem:[%s4 + $0x20] sm:$0xff]
        %v1432 = vld [vmem:[%s4 + $0x28] sm:$0xff]
        %v1433 = vld [vmem:[%s4 + $0x30] sm:$0xff]
        %v1434 = vld [vmem:[%s4 + $0x38] sm:$0xff]
        %v1435 = vld [vmem:[%s4 + $0x40] sm:$0xff]
        %v1436 = vld [vmem:[%s4 + $0x48] sm:$0xff]
        %v1437 = vld [vmem:[%s4 + $0x50] sm:$0xff]
        %v1438 = vld [vmem:[%s4 + $0x58] sm:$0xff]
        %v1439 = vld [vmem:[%s4 + $0x60] sm:$0xff]
        %v1440 = vld [vmem:[%s4 + $0x68] sm:$0xff]
        %v1441 = vld [vmem:[%s4 + $0x70] sm:$0xff]
        %v1442 = vld [vmem:[%s4 + $0x78] sm:$0xff]
        %v1443 = vld [vmem:[%s5] sm:$0x1]
        %v1445 = vlaneseq
        %v1446 = vshrl.u32 %v1445, 7
        %v1447 = vsub.s32 0, %v1446
        %v1448 = vrot.slane %v1443, %v1447
        %1450 = vmatprep.subr.mxu0 0.0
        %v1451 = vand.u32 %v1427, 4294901760
        %1452 = vmatpush1.msra.mxu0 %v1451
        %1453 = vmatprep.subr.mxu0 0.0
        %v1454 = vand.u32 %v1428, 4294901760
        %1455 = vmatpush1.msra.mxu0 %v1454
        %1456 = vmatprep.subr.mxu0 0.0
        %v1457 = vand.u32 %v1429, 4294901760
        %1458 = vmatpush1.msra.mxu0 %v1457
        %1459 = vmatprep.subr.mxu0 0.0
        %v1460 = vand.u32 %v1430, 4294901760
        %1461 = vmatpush1.msra.mxu0 %v1460
        %1462 = vmatprep.subr.mxu0 0.0
        %v1463 = vand.u32 %v1431, 4294901760
        %1464 = vmatpush1.msra.mxu0 %v1463
        %1465 = vmatprep.subr.mxu0 0.0
        %v1466 = vand.u32 %v1432, 4294901760
        %1467 = vmatpush1.msra.mxu0 %v1466
        %1468 = vmatprep.subr.mxu0 0.0
        %v1469 = vand.u32 %v1433, 4294901760
        %1470 = vmatpush1.msra.mxu0 %v1469
        %1471 = vmatprep.subr.mxu0 0.0
        %v1472 = vand.u32 %v1434, 4294901760
        %1473 = vmatpush1.msra.mxu0 %v1472
        %1474 = vmatprep.subr.mxu0 0.0
        %v1475 = vand.u32 %v1435, 4294901760
        %1476 = vmatpush1.msra.mxu0 %v1475
        %1477 = vmatprep.subr.mxu0 0.0
        %v1478 = vand.u32 %v1436, 4294901760
        %1479 = vmatpush1.msra.mxu0 %v1478
        %1480 = vmatprep.subr.mxu0 0.0
        %v1481 = vand.u32 %v1437, 4294901760
        %1482 = vmatpush1.msra.mxu0 %v1481
        %1483 = vmatprep.subr.mxu0 0.0
        %v1484 = vand.u32 %v1438, 4294901760
        %1485 = vmatpush1.msra.mxu0 %v1484
        %1486 = vmatprep.subr.mxu0 0.0
        %v1487 = vand.u32 %v1439, 4294901760
        %1488 = vmatpush1.msra.mxu0 %v1487
        %1489 = vmatprep.subr.mxu0 0.0
        %v1490 = vand.u32 %v1440, 4294901760
        %1491 = vmatpush1.msra.mxu0 %v1490
        %1492 = vmatprep.subr.mxu0 0.0
        %v1493 = vand.u32 %v1441, 4294901760
        %1494 = vmatpush1.msra.mxu0 %v1493
        %1495 = vmatprep.subr.mxu0 0.0
        %v1496 = vand.u32 %v1442, 4294901760
        %1497 = vmatpush1.msra.mxu0 %v1496
        %1498 = vmatprep.subr.mxu0 0.0
        %1499 = vmatpush1.msra.mxu0 0.0
        %1500 = vmatprep.subr.mxu0 0.0
        %1501 = vmatpush1.msra.mxu0 0.0
        %1502 = vmatprep.subr.mxu0 0.0
        %1503 = vmatpush1.msra.mxu0 0.0
        %1504 = vmatprep.subr.mxu0 0.0
        %1505 = vmatpush1.msra.mxu0 0.0
        %1506 = vmatprep.subr.mxu0 0.0
        %1507 = vmatpush1.msra.mxu0 0.0
        %1508 = vmatprep.subr.mxu0 0.0
        %1509 = vmatpush1.msra.mxu0 0.0
        %1510 = vmatprep.subr.mxu0 0.0
        %1511 = vmatpush1.msra.mxu0 0.0
        %1512 = vmatprep.subr.mxu0 0.0
        %1513 = vmatpush1.msra.mxu0 0.0
        %1514 = vmatprep.subr.mxu0 0.0
        %1515 = vmatpush1.msra.mxu0 0.0
        %1516 = vmatprep.subr.mxu0 0.0
        %1517 = vmatpush1.msra.mxu0 0.0
        %1518 = vmatprep.subr.mxu0 0.0
        %1519 = vmatpush1.msra.mxu0 0.0
        %1520 = vmatprep.subr.mxu0 0.0
        %1521 = vmatpush1.msra.mxu0 0.0
        %1522 = vmatprep.subr.mxu0 0.0
        %1523 = vmatpush1.msra.mxu0 0.0
        %1524 = vmatprep.subr.mxu0 0.0
        %1525 = vmatpush1.msra.mxu0 0.0
        %1526 = vmatprep.subr.mxu0 0.0
        %1527 = vmatpush1.msra.mxu0 0.0
        %1528 = vmatprep.subr.mxu0 0.0
        %1529 = vmatpush1.msra.mxu0 0.0
        %1530 = vmatprep.mubr.f32.mxu0 0.0
        %v1531 = vand.u32 %v1426, 4294901760
        %v1532 = vsub.f32 %v1426, %v1531
        %v1533 = vand.u32 %v1532, 4294901760
        %v1534 = vsub.f32 %v1532, %v1533
        %v1535 = vand.u32 %v1534, 4294901760
        %1536 = vmatmul.mubr.f32.gmra.mrb[0].mxu0 %v1535
        %v1537 = vpop.f32.mrb[0].mxu0
        %v1538 = vadd.f32 %v1448, %v1537
        %v1539 = vpop.f32.mrb[0].mxu0
        %1540 = vdwg.mxu0
        %1541 = vmatprep.subr.mxu0 0.0
        %v1542 = vand.u32 %v1427, 4294901760
        %v1543 = vsub.f32 %v1427, %v1542
        %v1544 = vand.u32 %v1543, 4294901760
        %v1545 = vsub.f32 %v1543, %v1544
        %v1546 = vand.u32 %v1545, 4294901760
        %1547 = vmatpush1.msra.mxu0 %v1546
        %1548 = vmatprep.subr.mxu0 0.0
        %v1549 = vand.u32 %v1428, 4294901760
        %v1550 = vsub.f32 %v1428, %v1549
        %v1551 = vand.u32 %v1550, 4294901760
        %v1552 = vsub.f32 %v1550, %v1551
        %v1553 = vand.u32 %v1552, 4294901760
        %1554 = vmatpush1.msra.mxu0 %v1553
        %1555 = vmatprep.subr.mxu0 0.0
        %v1556 = vand.u32 %v1429, 4294901760
        %v1557 = vsub.f32 %v1429, %v1556
        %v1558 = vand.u32 %v1557, 4294901760
        %v1559 = vsub.f32 %v1557, %v1558
        %v1560 = vand.u32 %v1559, 4294901760
        %1561 = vmatpush1.msra.mxu0 %v1560
        %1562 = vmatprep.subr.mxu0 0.0
        %v1563 = vand.u32 %v1430, 4294901760
        %v1564 = vsub.f32 %v1430, %v1563
        %v1565 = vand.u32 %v1564, 4294901760
        %v1566 = vsub.f32 %v1564, %v1565
        %v1567 = vand.u32 %v1566, 4294901760
        %1568 = vmatpush1.msra.mxu0 %v1567
        %1569 = vmatprep.subr.mxu0 0.0
        %v1570 = vand.u32 %v1431, 4294901760
        %v1571 = vsub.f32 %v1431, %v1570
        %v1572 = vand.u32 %v1571, 4294901760
        %v1573 = vsub.f32 %v1571, %v1572
        %v1574 = vand.u32 %v1573, 4294901760
        %1575 = vmatpush1.msra.mxu0 %v1574
        %1576 = vmatprep.subr.mxu0 0.0
        %v1577 = vand.u32 %v1432, 4294901760
        %v1578 = vsub.f32 %v1432, %v1577
        %v1579 = vand.u32 %v1578, 4294901760
        %v1580 = vsub.f32 %v1578, %v1579
        %v1581 = vand.u32 %v1580, 4294901760
        %1582 = vmatpush1.msra.mxu0 %v1581
        %1583 = vmatprep.subr.mxu0 0.0
        %v1584 = vand.u32 %v1433, 4294901760
        %v1585 = vsub.f32 %v1433, %v1584
        %v1586 = vand.u32 %v1585, 4294901760
        %v1587 = vsub.f32 %v1585, %v1586
        %v1588 = vand.u32 %v1587, 4294901760
        %1589 = vmatpush1.msra.mxu0 %v1588
        %1590 = vmatprep.subr.mxu0 0.0
        %v1591 = vand.u32 %v1434, 4294901760
        %v1592 = vsub.f32 %v1434, %v1591
        %v1593 = vand.u32 %v1592, 4294901760
        %v1594 = vsub.f32 %v1592, %v1593
        %v1595 = vand.u32 %v1594, 4294901760
        %1596 = vmatpush1.msra.mxu0 %v1595
        %1597 = vmatprep.subr.mxu0 0.0
        %v1598 = vand.u32 %v1435, 4294901760
        %v1599 = vsub.f32 %v1435, %v1598
        %v1600 = vand.u32 %v1599, 4294901760
        %v1601 = vsub.f32 %v1599, %v1600
        %v1602 = vand.u32 %v1601, 4294901760
        %1603 = vmatpush1.msra.mxu0 %v1602
        %1604 = vmatprep.subr.mxu0 0.0
        %v1605 = vand.u32 %v1436, 4294901760
        %v1606 = vsub.f32 %v1436, %v1605
        %v1607 = vand.u32 %v1606, 4294901760
        %v1608 = vsub.f32 %v1606, %v1607
        %v1609 = vand.u32 %v1608, 4294901760
        %1610 = vmatpush1.msra.mxu0 %v1609
        %1611 = vmatprep.subr.mxu0 0.0
        %v1612 = vand.u32 %v1437, 4294901760
        %v1613 = vsub.f32 %v1437, %v1612
        %v1614 = vand.u32 %v1613, 4294901760
        %v1615 = vsub.f32 %v1613, %v1614
        %v1616 = vand.u32 %v1615, 4294901760
        %1617 = vmatpush1.msra.mxu0 %v1616
        %1618 = vmatprep.subr.mxu0 0.0
        %v1619 = vand.u32 %v1438, 4294901760
        %v1620 = vsub.f32 %v1438, %v1619
        %v1621 = vand.u32 %v1620, 4294901760
        %v1622 = vsub.f32 %v1620, %v1621
        %v1623 = vand.u32 %v1622, 4294901760
        %1624 = vmatpush1.msra.mxu0 %v1623
        %1625 = vmatprep.subr.mxu0 0.0
        %v1626 = vand.u32 %v1439, 4294901760
        %v1627 = vsub.f32 %v1439, %v1626
        %v1628 = vand.u32 %v1627, 4294901760
        %v1629 = vsub.f32 %v1627, %v1628
        %v1630 = vand.u32 %v1629, 4294901760
        %1631 = vmatpush1.msra.mxu0 %v1630
        %1632 = vmatprep.subr.mxu0 0.0
        %v1633 = vand.u32 %v1440, 4294901760
        %v1634 = vsub.f32 %v1440, %v1633
        %v1635 = vand.u32 %v1634, 4294901760
        %v1636 = vsub.f32 %v1634, %v1635
        %v1637 = vand.u32 %v1636, 4294901760
        %1638 = vmatpush1.msra.mxu0 %v1637
        %1639 = vmatprep.subr.mxu0 0.0
        %v1640 = vand.u32 %v1441, 4294901760
        %v1641 = vsub.f32 %v1441, %v1640
        %v1642 = vand.u32 %v1641, 4294901760
        %v1643 = vsub.f32 %v1641, %v1642
        %v1644 = vand.u32 %v1643, 4294901760
        %1645 = vmatpush1.msra.mxu0 %v1644
        %1646 = vmatprep.subr.mxu0 0.0
        %v1647 = vand.u32 %v1442, 4294901760
        %v1648 = vsub.f32 %v1442, %v1647
        %v1649 = vand.u32 %v1648, 4294901760
        %v1650 = vsub.f32 %v1648, %v1649
        %v1651 = vand.u32 %v1650, 4294901760
        %1652 = vmatpush1.msra.mxu0 %v1651
        %1653 = vmatprep.subr.mxu0 0.0
        %1654 = vmatpush1.msra.mxu0 0.0
        %1655 = vmatprep.subr.mxu0 0.0
        %1656 = vmatpush1.msra.mxu0 0.0
        %1657 = vmatprep.subr.mxu0 0.0
        %1658 = vmatpush1.msra.mxu0 0.0
        %1659 = vmatprep.subr.mxu0 0.0
        %1660 = vmatpush1.msra.mxu0 0.0
        %1661 = vmatprep.subr.mxu0 0.0
        %1662 = vmatpush1.msra.mxu0 0.0
        %1663 = vmatprep.subr.mxu0 0.0
        %1664 = vmatpush1.msra.mxu0 0.0
        %1665 = vmatprep.subr.mxu0 0.0
        %1666 = vmatpush1.msra.mxu0 0.0
        %1667 = vmatprep.subr.mxu0 0.0
        %1668 = vmatpush1.msra.mxu0 0.0
        %1669 = vmatprep.subr.mxu0 0.0
        %1670 = vmatpush1.msra.mxu0 0.0
        %1671 = vmatprep.subr.mxu0 0.0
        %1672 = vmatpush1.msra.mxu0 0.0
        %1673 = vmatprep.subr.mxu0 0.0
        %1674 = vmatpush1.msra.mxu0 0.0
        %1675 = vmatprep.subr.mxu0 0.0
        %1676 = vmatpush1.msra.mxu0 0.0
        %1677 = vmatprep.subr.mxu0 0.0
        %1678 = vmatpush1.msra.mxu0 0.0
        %1679 = vmatprep.subr.mxu0 0.0
        %1680 = vmatpush1.msra.mxu0 0.0
        %1681 = vmatprep.subr.mxu0 0.0
        %1682 = vmatpush1.msra.mxu0 0.0
        %1683 = vmatprep.subr.mxu0 0.0
        %1684 = vmatpush1.msra.mxu0 0.0
        %1685 = vmatprep.mubr.f32.mxu0 0.0
        %v1686 = vand.u32 %v1426, 4294901760
        %1687 = vmatmul.mubr.f32.gmra.mrb[0].mxu0 %v1686
        %v1688 = vpop.f32.mrb[0].mxu0
        %v1689 = vadd.f32 %v1538, %v1688
        %v1690 = vpop.f32.mrb[0].mxu0
        %1691 = vdwg.mxu0
        %1692 = vmatprep.subr.mxu0 0.0
        %v1693 = vand.u32 %v1427, 4294901760
        %v1694 = vsub.f32 %v1427, %v1693
        %1695 = vmatpush1.msra.mxu0 %v1694
        %1696 = vmatprep.subr.mxu0 0.0
        %v1697 = vand.u32 %v1428, 4294901760
        %v1698 = vsub.f32 %v1428, %v1697
        %1699 = vmatpush1.msra.mxu0 %v1698
        %1700 = vmatprep.subr.mxu0 0.0
        %v1701 = vand.u32 %v1429, 4294901760
        %v1702 = vsub.f32 %v1429, %v1701
        %1703 = vmatpush1.msra.mxu0 %v1702
        %1704 = vmatprep.subr.mxu0 0.0
        %v1705 = vand.u32 %v1430, 4294901760
        %v1706 = vsub.f32 %v1430, %v1705
        %1707 = vmatpush1.msra.mxu0 %v1706
        %1708 = vmatprep.subr.mxu0 0.0
        %v1709 = vand.u32 %v1431, 4294901760
        %v1710 = vsub.f32 %v1431, %v1709
        %1711 = vmatpush1.msra.mxu0 %v1710
        %1712 = vmatprep.subr.mxu0 0.0
        %v1713 = vand.u32 %v1432, 4294901760
        %v1714 = vsub.f32 %v1432, %v1713
        %1715 = vmatpush1.msra.mxu0 %v1714
        %1716 = vmatprep.subr.mxu0 0.0
        %v1717 = vand.u32 %v1433, 4294901760
        %v1718 = vsub.f32 %v1433, %v1717
        %1719 = vmatpush1.msra.mxu0 %v1718
        %1720 = vmatprep.subr.mxu0 0.0
        %v1721 = vand.u32 %v1434, 4294901760
        %v1722 = vsub.f32 %v1434, %v1721
        %1723 = vmatpush1.msra.mxu0 %v1722
        %1724 = vmatprep.subr.mxu0 0.0
        %v1725 = vand.u32 %v1435, 4294901760
        %v1726 = vsub.f32 %v1435, %v1725
        %1727 = vmatpush1.msra.mxu0 %v1726
        %1728 = vmatprep.subr.mxu0 0.0
        %v1729 = vand.u32 %v1436, 4294901760
        %v1730 = vsub.f32 %v1436, %v1729
        %1731 = vmatpush1.msra.mxu0 %v1730
        %1732 = vmatprep.subr.mxu0 0.0
        %v1733 = vand.u32 %v1437, 4294901760
        %v1734 = vsub.f32 %v1437, %v1733
        %1735 = vmatpush1.msra.mxu0 %v1734
        %1736 = vmatprep.subr.mxu0 0.0
        %v1737 = vand.u32 %v1438, 4294901760
        %v1738 = vsub.f32 %v1438, %v1737
        %1739 = vmatpush1.msra.mxu0 %v1738
        %1740 = vmatprep.subr.mxu0 0.0
        %v1741 = vand.u32 %v1439, 4294901760
        %v1742 = vsub.f32 %v1439, %v1741
        %1743 = vmatpush1.msra.mxu0 %v1742
        %1744 = vmatprep.subr.mxu0 0.0
        %v1745 = vand.u32 %v1440, 4294901760
        %v1746 = vsub.f32 %v1440, %v1745
        %1747 = vmatpush1.msra.mxu0 %v1746
        %1748 = vmatprep.subr.mxu0 0.0
        %v1749 = vand.u32 %v1441, 4294901760
        %v1750 = vsub.f32 %v1441, %v1749
        %1751 = vmatpush1.msra.mxu0 %v1750
        %1752 = vmatprep.subr.mxu0 0.0
        %v1753 = vand.u32 %v1442, 4294901760
        %v1754 = vsub.f32 %v1442, %v1753
        %1755 = vmatpush1.msra.mxu0 %v1754
        %1756 = vmatprep.subr.mxu0 0.0
        %1757 = vmatpush1.msra.mxu0 0.0
        %1758 = vmatprep.subr.mxu0 0.0
        %1759 = vmatpush1.msra.mxu0 0.0
        %1760 = vmatprep.subr.mxu0 0.0
        %1761 = vmatpush1.msra.mxu0 0.0
        %1762 = vmatprep.subr.mxu0 0.0
        %1763 = vmatpush1.msra.mxu0 0.0
        %1764 = vmatprep.subr.mxu0 0.0
        %1765 = vmatpush1.msra.mxu0 0.0
        %1766 = vmatprep.subr.mxu0 0.0
        %1767 = vmatpush1.msra.mxu0 0.0
        %1768 = vmatprep.subr.mxu0 0.0
        %1769 = vmatpush1.msra.mxu0 0.0
        %1770 = vmatprep.subr.mxu0 0.0
        %1771 = vmatpush1.msra.mxu0 0.0
        %1772 = vmatprep.subr.mxu0 0.0
        %1773 = vmatpush1.msra.mxu0 0.0
        %1774 = vmatprep.subr.mxu0 0.0
        %1775 = vmatpush1.msra.mxu0 0.0
        %1776 = vmatprep.subr.mxu0 0.0
        %1777 = vmatpush1.msra.mxu0 0.0
        %1778 = vmatprep.subr.mxu0 0.0
        %1779 = vmatpush1.msra.mxu0 0.0
        %1780 = vmatprep.subr.mxu0 0.0
        %1781 = vmatpush1.msra.mxu0 0.0
        %1782 = vmatprep.subr.mxu0 0.0
        %1783 = vmatpush1.msra.mxu0 0.0
        %1784 = vmatprep.subr.mxu0 0.0
        %1785 = vmatpush1.msra.mxu0 0.0
        %1786 = vmatprep.subr.mxu0 0.0
        %1787 = vmatpush1.msra.mxu0 0.0
        %1788 = vmatprep.mubr.f32.mxu0 0.0
        %v1789 = vand.u32 %v1426, 4294901760
        %v1790 = vsub.f32 %v1426, %v1789
        %1791 = vmatmul.mubr.f32.gmra.mrb[0].mxu0 %v1790
        %v1792 = vpop.f32.mrb[0].mxu0
        %v1793 = vadd.f32 %v1689, %v1792
        %v1794 = vpop.f32.mrb[0].mxu0
        %1795 = vdwg.mxu0
        %1796 = vmatprep.subr.mxu0 0.0
        %v1797 = vand.u32 %v1427, 4294901760
        %1798 = vmatpush1.msra.mxu0 %v1797
        %1799 = vmatprep.subr.mxu0 0.0
        %v1800 = vand.u32 %v1428, 4294901760
        %1801 = vmatpush1.msra.mxu0 %v1800
        %1802 = vmatprep.subr.mxu0 0.0
        %v1803 = vand.u32 %v1429, 4294901760
        %1804 = vmatpush1.msra.mxu0 %v1803
        %1805 = vmatprep.subr.mxu0 0.0
        %v1806 = vand.u32 %v1430, 4294901760
        %1807 = vmatpush1.msra.mxu0 %v1806
        %1808 = vmatprep.subr.mxu0 0.0
        %v1809 = vand.u32 %v1431, 4294901760
        %1810 = vmatpush1.msra.mxu0 %v1809
        %1811 = vmatprep.subr.mxu0 0.0
        %v1812 = vand.u32 %v1432, 4294901760
        %1813 = vmatpush1.msra.mxu0 %v1812
        %1814 = vmatprep.subr.mxu0 0.0
        %v1815 = vand.u32 %v1433, 4294901760
        %1816 = vmatpush1.msra.mxu0 %v1815
        %1817 = vmatprep.subr.mxu0 0.0
        %v1818 = vand.u32 %v1434, 4294901760
        %1819 = vmatpush1.msra.mxu0 %v1818
        %1820 = vmatprep.subr.mxu0 0.0
        %v1821 = vand.u32 %v1435, 4294901760
        %1822 = vmatpush1.msra.mxu0 %v1821
        %1823 = vmatprep.subr.mxu0 0.0
        %v1824 = vand.u32 %v1436, 4294901760
        %1825 = vmatpush1.msra.mxu0 %v1824
        %1826 = vmatprep.subr.mxu0 0.0
        %v1827 = vand.u32 %v1437, 4294901760
        %1828 = vmatpush1.msra.mxu0 %v1827
        %1829 = vmatprep.subr.mxu0 0.0
        %v1830 = vand.u32 %v1438, 4294901760
        %1831 = vmatpush1.msra.mxu0 %v1830
        %1832 = vmatprep.subr.mxu0 0.0
        %v1833 = vand.u32 %v1439, 4294901760
        %1834 = vmatpush1.msra.mxu0 %v1833
        %1835 = vmatprep.subr.mxu0 0.0
        %v1836 = vand.u32 %v1440, 4294901760
        %1837 = vmatpush1.msra.mxu0 %v1836
        %1838 = vmatprep.subr.mxu0 0.0
        %v1839 = vand.u32 %v1441, 4294901760
        %1840 = vmatpush1.msra.mxu0 %v1839
        %1841 = vmatprep.subr.mxu0 0.0
        %v1842 = vand.u32 %v1442, 4294901760
        %1843 = vmatpush1.msra.mxu0 %v1842
        %1844 = vmatprep.subr.mxu0 0.0
        %1845 = vmatpush1.msra.mxu0 0.0
        %1846 = vmatprep.subr.mxu0 0.0
        %1847 = vmatpush1.msra.mxu0 0.0
        %1848 = vmatprep.subr.mxu0 0.0
        %1849 = vmatpush1.msra.mxu0 0.0
        %1850 = vmatprep.subr.mxu0 0.0
        %1851 = vmatpush1.msra.mxu0 0.0
        %1852 = vmatprep.subr.mxu0 0.0
        %1853 = vmatpush1.msra.mxu0 0.0
        %1854 = vmatprep.subr.mxu0 0.0
        %1855 = vmatpush1.msra.mxu0 0.0
        %1856 = vmatprep.subr.mxu0 0.0
        %1857 = vmatpush1.msra.mxu0 0.0
        %1858 = vmatprep.subr.mxu0 0.0
        %1859 = vmatpush1.msra.mxu0 0.0
        %1860 = vmatprep.subr.mxu0 0.0
        %1861 = vmatpush1.msra.mxu0 0.0
        %1862 = vmatprep.subr.mxu0 0.0
        %1863 = vmatpush1.msra.mxu0 0.0
        %1864 = vmatprep.subr.mxu0 0.0
        %1865 = vmatpush1.msra.mxu0 0.0
        %1866 = vmatprep.subr.mxu0 0.0
        %1867 = vmatpush1.msra.mxu0 0.0
        %1868 = vmatprep.subr.mxu0 0.0
        %1869 = vmatpush1.msra.mxu0 0.0
        %1870 = vmatprep.subr.mxu0 0.0
        %1871 = vmatpush1.msra.mxu0 0.0
        %1872 = vmatprep.subr.mxu0 0.0
        %1873 = vmatpush1.msra.mxu0 0.0
        %1874 = vmatprep.subr.mxu0 0.0
        %1875 = vmatpush1.msra.mxu0 0.0
        %1876 = vmatprep.mubr.f32.mxu0 0.0
        %v1877 = vand.u32 %v1426, 4294901760
        %v1878 = vsub.f32 %v1426, %v1877
        %v1879 = vand.u32 %v1878, 4294901760
        %1880 = vmatmul.mubr.f32.gmra.mrb[0].mxu0 %v1879
        %v1881 = vpop.f32.mrb[0].mxu0
        %v1882 = vadd.f32 %v1793, %v1881
        %v1883 = vpop.f32.mrb[0].mxu0
        %1884 = vdwg.mxu0
        %1885 = vmatprep.subr.mxu0 0.0
        %v1886 = vand.u32 %v1427, 4294901760
        %v1887 = vsub.f32 %v1427, %v1886
        %v1888 = vand.u32 %v1887, 4294901760
        %1889 = vmatpush1.msra.mxu0 %v1888
        %1890 = vmatprep.subr.mxu0 0.0
        %v1891 = vand.u32 %v1428, 4294901760
        %v1892 = vsub.f32 %v1428, %v1891
        %v1893 = vand.u32 %v1892, 4294901760
        %1894 = vmatpush1.msra.mxu0 %v1893
        %1895 = vmatprep.subr.mxu0 0.0
        %v1896 = vand.u32 %v1429, 4294901760
        %v1897 = vsub.f32 %v1429, %v1896
        %v1898 = vand.u32 %v1897, 4294901760
        %1899 = vmatpush1.msra.mxu0 %v1898
        %1900 = vmatprep.subr.mxu0 0.0
        %v1901 = vand.u32 %v1430, 4294901760
        %v1902 = vsub.f32 %v1430, %v1901
        %v1903 = vand.u32 %v1902, 4294901760
        %1904 = vmatpush1.msra.mxu0 %v1903
        %1905 = vmatprep.subr.mxu0 0.0
        %v1906 = vand.u32 %v1431, 4294901760
        %v1907 = vsub.f32 %v1431, %v1906
        %v1908 = vand.u32 %v1907, 4294901760
        %1909 = vmatpush1.msra.mxu0 %v1908
        %1910 = vmatprep.subr.mxu0 0.0
        %v1911 = vand.u32 %v1432, 4294901760
        %v1912 = vsub.f32 %v1432, %v1911
        %v1913 = vand.u32 %v1912, 4294901760
        %1914 = vmatpush1.msra.mxu0 %v1913
        %1915 = vmatprep.subr.mxu0 0.0
        %v1916 = vand.u32 %v1433, 4294901760
        %v1917 = vsub.f32 %v1433, %v1916
        %v1918 = vand.u32 %v1917, 4294901760
        %1919 = vmatpush1.msra.mxu0 %v1918
        %1920 = vmatprep.subr.mxu0 0.0
        %v1921 = vand.u32 %v1434, 4294901760
        %v1922 = vsub.f32 %v1434, %v1921
        %v1923 = vand.u32 %v1922, 4294901760
        %1924 = vmatpush1.msra.mxu0 %v1923
        %1925 = vmatprep.subr.mxu0 0.0
        %v1926 = vand.u32 %v1435, 4294901760
        %v1927 = vsub.f32 %v1435, %v1926
        %v1928 = vand.u32 %v1927, 4294901760
        %1929 = vmatpush1.msra.mxu0 %v1928
        %1930 = vmatprep.subr.mxu0 0.0
        %v1931 = vand.u32 %v1436, 4294901760
        %v1932 = vsub.f32 %v1436, %v1931
        %v1933 = vand.u32 %v1932, 4294901760
        %1934 = vmatpush1.msra.mxu0 %v1933
        %1935 = vmatprep.subr.mxu0 0.0
        %v1936 = vand.u32 %v1437, 4294901760
        %v1937 = vsub.f32 %v1437, %v1936
        %v1938 = vand.u32 %v1937, 4294901760
        %1939 = vmatpush1.msra.mxu0 %v1938
        %1940 = vmatprep.subr.mxu0 0.0
        %v1941 = vand.u32 %v1438, 4294901760
        %v1942 = vsub.f32 %v1438, %v1941
        %v1943 = vand.u32 %v1942, 4294901760
        %1944 = vmatpush1.msra.mxu0 %v1943
        %1945 = vmatprep.subr.mxu0 0.0
        %v1946 = vand.u32 %v1439, 4294901760
        %v1947 = vsub.f32 %v1439, %v1946
        %v1948 = vand.u32 %v1947, 4294901760
        %1949 = vmatpush1.msra.mxu0 %v1948
        %1950 = vmatprep.subr.mxu0 0.0
        %v1951 = vand.u32 %v1440, 4294901760
        %v1952 = vsub.f32 %v1440, %v1951
        %v1953 = vand.u32 %v1952, 4294901760
        %1954 = vmatpush1.msra.mxu0 %v1953
        %1955 = vmatprep.subr.mxu0 0.0
        %v1956 = vand.u32 %v1441, 4294901760
        %v1957 = vsub.f32 %v1441, %v1956
        %v1958 = vand.u32 %v1957, 4294901760
        %1959 = vmatpush1.msra.mxu0 %v1958
        %1960 = vmatprep.subr.mxu0 0.0
        %v1961 = vand.u32 %v1442, 4294901760
        %v1962 = vsub.f32 %v1442, %v1961
        %v1963 = vand.u32 %v1962, 4294901760
        %1964 = vmatpush1.msra.mxu0 %v1963
        %1965 = vmatprep.subr.mxu0 0.0
        %1966 = vmatpush1.msra.mxu0 0.0
        %1967 = vmatprep.subr.mxu0 0.0
        %1968 = vmatpush1.msra.mxu0 0.0
        %1969 = vmatprep.subr.mxu0 0.0
        %1970 = vmatpush1.msra.mxu0 0.0
        %1971 = vmatprep.subr.mxu0 0.0
        %1972 = vmatpush1.msra.mxu0 0.0
        %1973 = vmatprep.subr.mxu0 0.0
        %1974 = vmatpush1.msra.mxu0 0.0
        %1975 = vmatprep.subr.mxu0 0.0
        %1976 = vmatpush1.msra.mxu0 0.0
        %1977 = vmatprep.subr.mxu0 0.0
        %1978 = vmatpush1.msra.mxu0 0.0
        %1979 = vmatprep.subr.mxu0 0.0
        %1980 = vmatpush1.msra.mxu0 0.0
        %1981 = vmatprep.subr.mxu0 0.0
        %1982 = vmatpush1.msra.mxu0 0.0
        %1983 = vmatprep.subr.mxu0 0.0
        %1984 = vmatpush1.msra.mxu0 0.0
        %1985 = vmatprep.subr.mxu0 0.0
        %1986 = vmatpush1.msra.mxu0 0.0
        %1987 = vmatprep.subr.mxu0 0.0
        %1988 = vmatpush1.msra.mxu0 0.0
        %1989 = vmatprep.subr.mxu0 0.0
        %1990 = vmatpush1.msra.mxu0 0.0
        %1991 = vmatprep.subr.mxu0 0.0
        %1992 = vmatpush1.msra.mxu0 0.0
        %1993 = vmatprep.subr.mxu0 0.0
        %1994 = vmatpush1.msra.mxu0 0.0
        %1995 = vmatprep.subr.mxu0 0.0
        %1996 = vmatpush1.msra.mxu0 0.0
        %1997 = vmatprep.mubr.f32.mxu0 0.0
        %v1998 = vand.u32 %v1426, 4294901760
        %1999 = vmatmul.mubr.f32.gmra.mrb[0].mxu0 %v1998
        %v2000 = vpop.f32.mrb[0].mxu0
        %v2001 = vadd.f32 %v1882, %v2000
        %v2002 = vpop.f32.mrb[0].mxu0
        %2003 = vdwg.mxu0
        %2004 = vmatprep.subr.mxu0 0.0
        %v2005 = vand.u32 %v1427, 4294901760
        %2006 = vmatpush1.msra.mxu0 %v2005
        %2007 = vmatprep.subr.mxu0 0.0
        %v2008 = vand.u32 %v1428, 4294901760
        %2009 = vmatpush1.msra.mxu0 %v2008
        %2010 = vmatprep.subr.mxu0 0.0
        %v2011 = vand.u32 %v1429, 4294901760
        %2012 = vmatpush1.msra.mxu0 %v2011
        %2013 = vmatprep.subr.mxu0 0.0
        %v2014 = vand.u32 %v1430, 4294901760
        %2015 = vmatpush1.msra.mxu0 %v2014
        %2016 = vmatprep.subr.mxu0 0.0
        %v2017 = vand.u32 %v1431, 4294901760
        %2018 = vmatpush1.msra.mxu0 %v2017
        %2019 = vmatprep.subr.mxu0 0.0
        %v2020 = vand.u32 %v1432, 4294901760
        %2021 = vmatpush1.msra.mxu0 %v2020
        %2022 = vmatprep.subr.mxu0 0.0
        %v2023 = vand.u32 %v1433, 4294901760
        %2024 = vmatpush1.msra.mxu0 %v2023
        %2025 = vmatprep.subr.mxu0 0.0
        %v2026 = vand.u32 %v1434, 4294901760
        %2027 = vmatpush1.msra.mxu0 %v2026
        %2028 = vmatprep.subr.mxu0 0.0
        %v2029 = vand.u32 %v1435, 4294901760
        %2030 = vmatpush1.msra.mxu0 %v2029
        %2031 = vmatprep.subr.mxu0 0.0
        %v2032 = vand.u32 %v1436, 4294901760
        %2033 = vmatpush1.msra.mxu0 %v2032
        %2034 = vmatprep.subr.mxu0 0.0
        %v2035 = vand.u32 %v1437, 4294901760
        %2036 = vmatpush1.msra.mxu0 %v2035
        %2037 = vmatprep.subr.mxu0 0.0
        %v2038 = vand.u32 %v1438, 4294901760
        %2039 = vmatpush1.msra.mxu0 %v2038
        %2040 = vmatprep.subr.mxu0 0.0
        %v2041 = vand.u32 %v1439, 4294901760
        %2042 = vmatpush1.msra.mxu0 %v2041
        %2043 = vmatprep.subr.mxu0 0.0
        %v2044 = vand.u32 %v1440, 4294901760
        %2045 = vmatpush1.msra.mxu0 %v2044
        %2046 = vmatprep.subr.mxu0 0.0
        %v2047 = vand.u32 %v1441, 4294901760
        %2048 = vmatpush1.msra.mxu0 %v2047
        %2049 = vmatprep.subr.mxu0 0.0
        %v2050 = vand.u32 %v1442, 4294901760
        %2051 = vmatpush1.msra.mxu0 %v2050
        %2052 = vmatprep.subr.mxu0 0.0
        %2053 = vmatpush1.msra.mxu0 0.0
        %2054 = vmatprep.subr.mxu0 0.0
        %2055 = vmatpush1.msra.mxu0 0.0
        %2056 = vmatprep.subr.mxu0 0.0
        %2057 = vmatpush1.msra.mxu0 0.0
        %2058 = vmatprep.subr.mxu0 0.0
        %2059 = vmatpush1.msra.mxu0 0.0
        %2060 = vmatprep.subr.mxu0 0.0
        %2061 = vmatpush1.msra.mxu0 0.0
        %2062 = vmatprep.subr.mxu0 0.0
        %2063 = vmatpush1.msra.mxu0 0.0
        %2064 = vmatprep.subr.mxu0 0.0
        %2065 = vmatpush1.msra.mxu0 0.0
        %2066 = vmatprep.subr.mxu0 0.0
        %2067 = vmatpush1.msra.mxu0 0.0
        %2068 = vmatprep.subr.mxu0 0.0
        %2069 = vmatpush1.msra.mxu0 0.0
        %2070 = vmatprep.subr.mxu0 0.0
        %2071 = vmatpush1.msra.mxu0 0.0
        %2072 = vmatprep.subr.mxu0 0.0
        %2073 = vmatpush1.msra.mxu0 0.0
        %2074 = vmatprep.subr.mxu0 0.0
        %2075 = vmatpush1.msra.mxu0 0.0
        %2076 = vmatprep.subr.mxu0 0.0
        %2077 = vmatpush1.msra.mxu0 0.0
        %2078 = vmatprep.subr.mxu0 0.0
        %2079 = vmatpush1.msra.mxu0 0.0
        %2080 = vmatprep.subr.mxu0 0.0
        %2081 = vmatpush1.msra.mxu0 0.0
        %2082 = vmatprep.subr.mxu0 0.0
        %2083 = vmatpush1.msra.mxu0 0.0
        %2084 = vmatprep.mubr.f32.mxu0 0.0
        %v2085 = vand.u32 %v1426, 4294901760
        %2086 = vmatmul.mubr.f32.gmra.mrb[0].mxu0 %v2085
        %v2087 = vpop.f32.mrb[0].mxu0
        %v2088 = vadd.f32 %v2001, %v2087
        %v2089 = vpop.f32.mrb[0].mxu0
        %2090 = vdwg.mxu0
        %v2091 = vmax.f32 %v2088, 0.0
        %2092 = vst.msk [vmem:[%s266] sm:$0xff] %vm272, %v2091
        %s2093 = sand.u32 %s162, 1
        %s2094 = scalar_lea.sflag [#allocation4], %s2093
        %s2095 = sand.u32 %s162, 1
        %s2096 = smul.addr %s2095, 8
        %s2097 = scalar_lea.vmem [#allocation5], %s2096
        // Predicated region
        $region49: #{tpu_custom_call.1} parent=43 // pred_check
          %p2098 = pneg %p172
        $region50: #{tpu_custom_call.1} parent=43 // pred_check_branch
          %2100 = sbr.rel (%p2098) target = $region52
        $region51: #{tpu_custom_call.1} parent=43 // pred_region
          %s2102 = ssub.s32 128, 128
          %2103 = vsyncadd %s2094, %s2102
          %s2104 = smul.addr %s23, 128
          %s2105 = scalar_lea.hbm %s6, %s2104
          %s2107 = sshll.u32 %s2097, 4
          %s2108 = int_to_ptr.vmem [resolvable:$true] %s2107
          %2110 = dma.vmem_to_hbm [thread:$0]  %s2108, 128, %s2105, %s2094
        $region52: #{tpu_custom_call.1} parent=43 // pred_fallthru
          _
      $region44: #{tpu_custom_call.1} parent=5 // pred_fallthru
        _
      %p2111 = scmp.le.s32.totalorder 2, %s18
      // Predicated region
      $region53: #{tpu_custom_call.1} parent=5 // pred_check
        %p2112 = pneg %p2111
      $region54: #{tpu_custom_call.1} parent=5 // pred_check_branch
        %2114 = sbr.rel (%p2112) target = $region56
      $region55: #{tpu_custom_call.1} parent=5 // pred_region
        %s2115 = ssub.s32 %s18, 2
        // Predicated region
        $region57: #{tpu_custom_call.1} parent=55 // pred_check
          %p2116 = pneg %p178
        $region58: #{tpu_custom_call.1} parent=55 // pred_check_branch
          %2118 = sbr.rel (%p2116) target = $region60
        $region59: #{tpu_custom_call.1} parent=55 // pred_region
          %s2119 = sand.u32 %s163, 1
          %s2120 = scalar_lea.sflag [#allocation4], %s2119
          %s2121 = sand.u32 %s163, 1
          %s2122 = smul.addr %s2121, 8
          %s2123 = scalar_lea.vmem [#allocation5], %s2122
          %2124 = dma.done %s2120, 128
        $region60: #{tpu_custom_call.1} parent=55 // pred_fallthru
          _
      $region56: #{tpu_custom_call.1} parent=5 // pred_fallthru
        _
    $region6: #{tpu_custom_call.1} parent=1 // loop_footer
      %s22 = sadd.s32 1, %s18
    $region7: #{tpu_custom_call.1} parent=1 // loop_footer_branch
      %17 = sbr.rel target = $region3
    $region8: #{tpu_custom_call.1} parent=1 // loop_exit
      _
    %2125 = vsyncpa [#allocation3], 1
    %s2126 = scalar_lea.sflag [#allocation3], 1
    %2127 = vsyncpa %s2126, 1
    %2128 = vsyncpa [#allocation4], 1
    %s2129 = scalar_lea.sflag [#allocation4], 1
    %2130 = vsyncpa %s2129, 1

// kernel: tpu_custom_call.1
$region0: #{tpu_custom_call.1}
  #allocation0 [shape = 'u32[]', space=smem, size = 0x4, offset = 0x4, fixed_abs, tag = 'smem constant byte address 0x4 - core index']
  #allocation1 [shape = 'u32[144,128]{1,0:T(1,128)}', space=vmem, size = 0x12000, scoped, tag = 'internal scratch']
  %s0 = inlined_call_operand.hbm [shape: f32[16,32], index: 0, kind: input, shape index: {}]
  %s1 = inlined_call_operand.vmem [shape: f32[32,128], index: 1, kind: input, shape index: {}]
  %s2 = inlined_call_operand.vmem [shape: f32[128,128], index: 2, kind: input, shape index: {}]
  %s3 = inlined_call_operand.vmem [shape: f32[1,128], index: 3, kind: input, shape index: {}]
  %s4 = inlined_call_operand.vmem [shape: f32[128,32], index: 4, kind: input, shape index: {}]
  %s5 = inlined_call_operand.vmem [shape: f32[1,32], index: 5, kind: input, shape index: {}]
  %s6 = inlined_call_operand.hbm [shape: f32[16,32], index: 6, kind: output, shape index: {}]
  %s7 = sld [smem:[#allocation0]]
  $region61: #{tpu_custom_call.1} parent=0
    _
  %s9 = ssub.s32 1, %s7
  %s10 = scalar_select 0, %s9, %s7
  $region1: #{tpu_custom_call.1} parent=0
    #allocation2 [shape = 'u8[8192]{0}', space=vmem, size = 0x2000, scoped, tag = 'input window, operand 0']
    #allocation3 [shape = 's32[2]{0}', space=sflag, size = 0x8, scoped, tag = 'scoped memory for tpu_custom_call.1']
    #allocation4 [shape = 's32[2]{0}', space=sflag, size = 0x8, scoped, tag = 'scoped memory for tpu_custom_call.1']
    #allocation5 [shape = 'u8[8192]{0}', space=vmem, size = 0x2000, scoped, tag = 'output window, operand 0']
    %11 = vsyncpa [#allocation3], 0
    %s12 = scalar_lea.sflag [#allocation3], 1
    %13 = vsyncpa %s12, 0
    %14 = vsyncpa [#allocation4], 0
    %s15 = scalar_lea.sflag [#allocation4], 1
    %16 = vsyncpa %s15, 0
    loop: start=0, step=1, limit=4
    $region2: #{tpu_custom_call.1} parent=1 // loop_pre_header
      _
    $region3: #{tpu_custom_call.1} parent=1 // loop_header
      %s18 = sphi 0, %s22
      %p19 = scmp.ge.s32.totalorder %s18, 4
      %s28 = sphi 0, %s30
      %s31 = sphi 0, %s28
      %s32 = sphi 0, %s31
      %s48 = sphi 0, %s32
      %s52 = sphi 0, %s52
      %s54 = sphi 0, %s52
      %s55 = sphi 0, %s54
      %s69 = sphi 0, %s55
      %s73 = sphi 0, %s73
      %s75 = sphi 0, %s73
      %s76 = sphi 0, %s75
      %s90 = sphi 0, %s76
      %s94 = sphi 0, %s94
      %s96 = sphi 0, %s94
      %s97 = sphi 0, %s96
      %s111 = sphi 0, %s97
      %s115 = sphi 0, %s115
      %s117 = sphi 0, %s115
      %s118 = sphi 0, %s117
      %s132 = sphi 0, %s118
      %s136 = sphi 0, %s136
      %s138 = sphi 0, %s136
      %s139 = sphi 0, %s138
      %s153 = sphi 0, %s139
      %s159 = sphi 0, %s161
      %s162 = sphi 0, %s159
      %s163 = sphi 0, %s162
      %s179 = sphi 0, %s163
    $region4: #{tpu_custom_call.1} parent=1 // loop_header_branch
      %21 = sbr.rel (%p19) target = $region8
    $region5: #{tpu_custom_call.1} parent=1 // loop_body
      %s23 = ssub.s32 %s18, 1
      %s24 = ssub.s32 %s18, 2
      %s25 = sadd.s32 %s18, 1
      %s26 = ssub.s32 %s18, %s25
      %p27 = scmp.eq.s32.totalorder %s26, 0
      %s29 = sadd.s32 %s28, 1
      %s30 = scalar_select %p27, %s28, %s29
      %p33 = pneg %p27
      %p34 = scmp.eq.s32.totalorder %s18, 1
      %p35 = por %p33, %p34
      %p36 = scmp.ne.s32.totalorder %s28, %s31
      %p37 = scmp.eq.s32.totalorder %s18, 0
      %p38 = por %p36, %p37
      %p39 = scmp.ne.s32.totalorder %s28, %s31
      %p40 = scmp.eq.s32.totalorder %s23, 1
      %p41 = por %p39, %p40
      %p42 = scmp.ne.s32.totalorder %s31, %s32
      %p43 = scmp.eq.s32.totalorder %s23, 0
      %p44 = por %p42, %p43
      %p45 = scmp.ne.s32.totalorder %s31, %s32
      %p46 = scmp.eq.s32.totalorder %s24, 1
      %p47 = por %p45, %p46
      %p49 = scmp.ne.s32.totalorder %s32, %s48
      %p50 = scmp.eq.s32.totalorder %s24, 0
      %p51 = por %p49, %p50
      %s53 = sadd.s32 %s52, 1
      %p56 = scmp.eq.s32.totalorder %s18, 1
      %p57 = scmp.ne.s32.totalorder %s52, %s54
      %p58 = scmp.eq.s32.totalorder %s18, 0
      %p59 = por %p57, %p58
      %p60 = scmp.ne.s32.totalorder %s52, %s54
      %p61 = scmp.eq.s32.totalorder %s23, 1
      %p62 = por %p60, %p61
      %p63 = scmp.ne.s32.totalorder %s54, %s55
      %p64 = scmp.eq.s32.totalorder %s23, 0
      %p65 = por %p63, %p64
      %p66 = scmp.ne.s32.totalorder %s54, %s55
      %p67 = scmp.eq.s32.totalorder %s24, 1
      %p68 = por %p66, %p67
      %p70 = scmp.ne.s32.totalorder %s55, %s69
      %p71 = scmp.eq.s32.totalorder %s24, 0
      %p72 = por %p70, %p71
      %s74 = sadd.s32 %s73, 1
      %p77 = scmp.eq.s32.totalorder %s18, 1
      %p78 = scmp.ne.s32.totalorder %s73, %s75
      %p79 = scmp.eq.s32.totalorder %s18, 0
      %p80 = por %p78, %p79
      %p81 = scmp.ne.s32.totalorder %s73, %s75
      %p82 = scmp.eq.s32.totalorder %s23, 1
      %p83 = por %p81, %p82
      %p84 = scmp.ne.s32.totalorder %s75, %s76
      %p85 = scmp.eq.s32.totalorder %s23, 0
      %p86 = por %p84, %p85
      %p87 = scmp.ne.s32.totalorder %s75, %s76
      %p88 = scmp.eq.s32.totalorder %s24, 1
      %p89 = por %p87, %p88
      %p91 = scmp.ne.s32.totalorder %s76, %s90
      %p92 = scmp.eq.s32.totalorder %s24, 0
      %p93 = por %p91, %p92
      %s95 = sadd.s32 %s94, 1
      %p98 = scmp.eq.s32.totalorder %s18, 1
      %p99 = scmp.ne.s32.totalorder %s94, %s96
      %p100 = scmp.eq.s32.totalorder %s18, 0
      %p101 = por %p99, %p100
      %p102 = scmp.ne.s32.totalorder %s94, %s96
      %p103 = scmp.eq.s32.totalorder %s23, 1
      %p104 = por %p102, %p103
      %p105 = scmp.ne.s32.totalorder %s96, %s97
      %p106 = scmp.eq.s32.totalorder %s23, 0
      %p107 = por %p105, %p106
      %p108 = scmp.ne.s32.totalorder %s96, %s97
      %p109 = scmp.eq.s32.totalorder %s24, 1
      %p110 = por %p108, %p109
      %p112 = scmp.ne.s32.totalorder %s97, %s111
      %p113 = scmp.eq.s32.totalorder %s24, 0
      %p114 = por %p112, %p113
      %s116 = sadd.s32 %s115, 1
      %p119 = scmp.eq.s32.totalorder %s18, 1
      %p120 = scmp.ne.s32.totalorder %s115, %s117
      %p121 = scmp.eq.s32.totalorder %s18, 0
      %p122 = por %p120, %p121
      %p123 = scmp.ne.s32.totalorder %s115, %s117
      %p124 = scmp.eq.s32.totalorder %s23, 1
      %p125 = por %p123, %p124
      %p126 = scmp.ne.s32.totalorder %s117, %s118
      %p127 = scmp.eq.s32.totalorder %s23, 0
      %p128 = por %p126, %p127
      %p129 = scmp.ne.s32.totalorder %s117, %s118
      %p130 = scmp.eq.s32.totalorder %s24, 1
      %p131 = por %p129, %p130
      %p133 = scmp.ne.s32.totalorder %s118, %s132
      %p134 = scmp.eq.s32.totalorder %s24, 0
      %p135 = por %p133, %p134
      %s137 = sadd.s32 %s136, 1
      %p140 = scmp.eq.s32.totalorder %s18, 1
      %p141 = scmp.ne.s32.totalorder %s136, %s138
      %p142 = scmp.eq.s32.totalorder %s18, 0
      %p143 = por %p141, %p142
      %p144 = scmp.ne.s32.totalorder %s136, %s138
      %p145 = scmp.eq.s32.totalorder %s23, 1
      %p146 = por %p144, %p145
      %p147 = scmp.ne.s32.totalorder %s138, %s139
      %p148 = scmp.eq.s32.totalorder %s23, 0
      %p149 = por %p147, %p148
      %p150 = scmp.ne.s32.totalorder %s138, %s139
      %p151 = scmp.eq.s32.totalorder %s24, 1
      %p152 = por %p150, %p151
      %p154 = scmp.ne.s32.totalorder %s139, %s153
      %p155 = scmp.eq.s32.totalorder %s24, 0
      %p156 = por %p154, %p155
      %s157 = ssub.s32 %s18, %s25
      %p158 = scmp.eq.s32.totalorder %s157, 0
      %s160 = sadd.s32 %s159, 1
      %s161 = scalar_select %p158, %s159, %s160
      %p164 = pneg %p158
      %p165 = scmp.eq.s32.totalorder %s18, 1
      %p166 = por %p164, %p165
      %p167 = scmp.ne.s32.totalorder %s159, %s162
      %p168 = scmp.eq.s32.totalorder %s18, 0
      %p169 = por %p167, %p168
      %p170 = scmp.ne.s32.totalorder %s159, %s162
      %p171 = scmp.eq.s32.totalorder %s23, 1
      %p172 = por %p170, %p171
      %p173 = scmp.ne.s32.totalorder %s162, %s163
      %p174 = scmp.eq.s32.totalorder %s23, 0
      %p175 = por %p173, %p174
      %p176 = scmp.ne.s32.totalorder %s162, %s163
      %p177 = scmp.eq.s32.totalorder %s24, 1
      %p178 = por %p176, %p177
      %p180 = scmp.ne.s32.totalorder %s163, %s179
      %p181 = scmp.eq.s32.totalorder %s24, 0
      %p182 = por %p180, %p181
      %p183 = scmp.le.s32.totalorder 1, %s18
      %p184 = scmp.lt.s32.totalorder %s18, 3
      %p185 = pnand %p183, %p184
      %p186 = pneg %p185
      // Predicated region
      $region9: #{tpu_custom_call.1} parent=5 // pred_check
        _
      $region10: #{tpu_custom_call.1} parent=5 // pred_check_branch
        %188 = sbr.rel (%p185) target = $region12
      $region11: #{tpu_custom_call.1} parent=5 // pred_region
        %s189 = ssub.s32 %s18, 1
        // Predicated region
        $region13: #{tpu_custom_call.1} parent=11 // pred_check
          %p190 = pneg %p65
        $region14: #{tpu_custom_call.1} parent=11 // pred_check_branch
          %192 = sbr.rel (%p190) target = $region16
        $region15: #{tpu_custom_call.1} parent=11 // pred_region
          _
        $region16: #{tpu_custom_call.1} parent=11 // pred_fallthru
          _
        // Predicated region
        $region17: #{tpu_custom_call.1} parent=11 // pred_check
          %p193 = pneg %p86
        $region18: #{tpu_custom_call.1} parent=11 // pred_check_branch
          %195 = sbr.rel (%p193) target = $region20
        $region19: #{tpu_custom_call.1} parent=11 // pred_region
          _
        $region20: #{tpu_custom_call.1} parent=11 // pred_fallthru
          _
        // Predicated region
        $region21: #{tpu_custom_call.1} parent=11 // pred_check
          %p196 = pneg %p107
        $region22: #{tpu_custom_call.1} parent=11 // pred_check_branch
          %198 = sbr.rel (%p196) target = $region24
        $region23: #{tpu_custom_call.1} parent=11 // pred_region
          _
        $region24: #{tpu_custom_call.1} parent=11 // pred_fallthru
          _
        // Predicated region
        $region25: #{tpu_custom_call.1} parent=11 // pred_check
          %p199 = pneg %p128
        $region26: #{tpu_custom_call.1} parent=11 // pred_check_branch
          %201 = sbr.rel (%p199) target = $region28
        $region27: #{tpu_custom_call.1} parent=11 // pred_region
          _
        $region28: #{tpu_custom_call.1} parent=11 // pred_fallthru
          _
        // Predicated region
        $region29: #{tpu_custom_call.1} parent=11 // pred_check
          %p202 = pneg %p149
        $region30: #{tpu_custom_call.1} parent=11 // pred_check_branch
          %204 = sbr.rel (%p202) target = $region32
        $region31: #{tpu_custom_call.1} parent=11 // pred_region
          _
        $region32: #{tpu_custom_call.1} parent=11 // pred_fallthru
          _
      $region12: #{tpu_custom_call.1} parent=5 // pred_fallthru
        _
      %p205 = scmp.lt.s32.totalorder %s18, 2
      // Predicated region
      $region33: #{tpu_custom_call.1} parent=5 // pred_check
        %p206 = pneg %p205
      $region34: #{tpu_custom_call.1} parent=5 // pred_check_branch
        %208 = sbr.rel (%p206) target = $region36
      $region35: #{tpu_custom_call.1} parent=5 // pred_region
        // Predicated region
        $region37: #{tpu_custom_call.1} parent=35 // pred_check
          %p209 = pneg %p38
        $region38: #{tpu_custom_call.1} parent=35 // pred_check_branch
          %211 = sbr.rel (%p209) target = $region40
        $region39: #{tpu_custom_call.1} parent=35 // pred_region
          %s212 = sand.u32 %s28, 1
          %s213 = scalar_lea.sflag [#allocation3], %s212
          %s214 = sand.u32 %s28, 1
          %s215 = smul.addr %s214, 8
          %s216 = scalar_lea.vmem [#allocation2], %s215
          %s218 = ssub.s32 128, 128
          %219 = vsyncadd %s213, %s218
          %s220 = smul.addr %s18, 128
          %s221 = scalar_lea.hbm %s0, %s220
          %s223 = sshll.u32 %s216, 4
          %s224 = int_to_ptr.vmem [resolvable:$true] %s223
          %226 = dma.hbm_to_vmem [thread:$0]  %s221, 128, %s224, %s213
        $region40: #{tpu_custom_call.1} parent=35 // pred_fallthru
          _
      $region36: #{tpu_custom_call.1} parent=5 // pred_fallthru
        _
      %p227 = scmp.le.s32.totalorder 1, %s18
      %p228 = scmp.lt.s32.totalorder %s18, 3
      %p229 = pnand %p227, %p228
      %p230 = pneg %p229
      // Predicated region
      $region41: #{tpu_custom_call.1} parent=5 // pred_check
        _
      $region42: #{tpu_custom_call.1} parent=5 // pred_check_branch
        %232 = sbr.rel (%p229) target = $region44
      $region43: #{tpu_custom_call.1} parent=5 // pred_region
        %s233 = ssub.s32 %s18, 1
        %s234 = sand.u32 %s31, 1
        %s235 = scalar_lea.sflag [#allocation3], %s234
        %s236 = sand.u32 %s31, 1
        %s237 = smul.addr %s236, 8
        %s238 = scalar_lea.vmem [#allocation2], %s237
        // Predicated region
        $region45: #{tpu_custom_call.1} parent=43 // pred_check
          %p239 = pneg %p44
        $region46: #{tpu_custom_call.1} parent=43 // pred_check_branch
          %241 = sbr.rel (%p239) target = $region48
        $region47: #{tpu_custom_call.1} parent=43 // pred_region
          %242 = dma.done %s235, 128
        $region48: #{tpu_custom_call.1} parent=43 // pred_fallthru
          _
        %s243 = sand.u32 %s31, 1
        %s244 = scalar_lea.sflag [#allocation3], %s243
        %s245 = sand.u32 %s31, 1
        %s246 = smul.addr %s245, 8
        %s247 = scalar_lea.vmem [#allocation2], %s246
        %p248 = pneg %p44
        %p249 = pneg %p41
        %p250 = pneg %p65
        %p251 = pneg %p62
        %p252 = pneg %p86
        %p253 = pneg %p83
        %p254 = pneg %p107
        %p255 = pneg %p104
        %p256 = pneg %p128
        %p257 = pneg %p125
        %p258 = pneg %p149
        %p259 = pneg %p146
        %p260 = pneg %p175
        %p261 = pneg %p172
        %s262 = sand.u32 %s162, 1
        %s263 = scalar_lea.sflag [#allocation4], %s262
        %s264 = sand.u32 %s162, 1
        %s265 = smul.addr %s264, 8
        %s266 = scalar_lea.vmem [#allocation5], %s265
        %v267 = vld [vmem:[%s238] sm:$0xff]
        %v268 = vld [vmem:[%s1] sm:$0xff]
        %v269 = vld [vmem:[%s1 + $0x8] sm:$0xff]
        %v270 = vld [vmem:[%s1 + $0x10] sm:$0xff]
        %v271 = vld [vmem:[%s1 + $0x18] sm:$0xff]
        %vm272 = vcmask 261120
        %v274 = vsel %vm272, %v267, 0
        %276 = vmatprep.subr.mxu0 0.0
        %v277 = vand.u32 %v268, 4294901760
        %278 = vmatpush1.msra.mxu0 %v277
        %279 = vmatprep.subr.mxu0 0.0
        %v280 = vand.u32 %v269, 4294901760
        %281 = vmatpush1.msra.mxu0 %v280
        %282 = vmatprep.subr.mxu0 0.0
        %v283 = vand.u32 %v270, 4294901760
        %284 = vmatpush1.msra.mxu0 %v283
        %285 = vmatprep.subr.mxu0 0.0
        %v286 = vand.u32 %v271, 4294901760
        %287 = vmatpush1.msra.mxu0 %v286
        %288 = vmatprep.subr.mxu0 0.0
        %289 = vmatpush1.msra.mxu0 0.0
        %290 = vmatprep.subr.mxu0 0.0
        %291 = vmatpush1.msra.mxu0 0.0
        %292 = vmatprep.subr.mxu0 0.0
        %293 = vmatpush1.msra.mxu0 0.0
        %294 = vmatprep.subr.mxu0 0.0
        %295 = vmatpush1.msra.mxu0 0.0
        %296 = vmatprep.subr.mxu0 0.0
        %297 = vmatpush1.msra.mxu0 0.0
        %298 = vmatprep.subr.mxu0 0.0
        %299 = vmatpush1.msra.mxu0 0.0
        %300 = vmatprep.subr.mxu0 0.0
        %301 = vmatpush1.msra.mxu0 0.0
        %302 = vmatprep.subr.mxu0 0.0
        %303 = vmatpush1.msra.mxu0 0.0
        %304 = vmatprep.subr.mxu0 0.0
        %305 = vmatpush1.msra.mxu0 0.0
        %306 = vmatprep.subr.mxu0 0.0
        %307 = vmatpush1.msra.mxu0 0.0
        %308 = vmatprep.subr.mxu0 0.0
        %309 = vmatpush1.msra.mxu0 0.0
        %310 = vmatprep.subr.mxu0 0.0
        %311 = vmatpush1.msra.mxu0 0.0
        %312 = vmatprep.subr.mxu0 0.0
        %313 = vmatpush1.msra.mxu0 0.0
        %314 = vmatprep.subr.mxu0 0.0
        %315 = vmatpush1.msra.mxu0 0.0
        %316 = vmatprep.subr.mxu0 0.0
        %317 = vmatpush1.msra.mxu0 0.0
        %318 = vmatprep.subr.mxu0 0.0
        %319 = vmatpush1.msra.mxu0 0.0
        %320 = vmatprep.subr.mxu0 0.0
        %321 = vmatpush1.msra.mxu0 0.0
        %322 = vmatprep.subr.mxu0 0.0
        %323 = vmatpush1.msra.mxu0 0.0
        %324 = vmatprep.subr.mxu0 0.0
        %325 = vmatpush1.msra.mxu0 0.0
        %326 = vmatprep.subr.mxu0 0.0
        %327 = vmatpush1.msra.mxu0 0.0
        %328 = vmatprep.subr.mxu0 0.0
        %329 = vmatpush1.msra.mxu0 0.0
        %330 = vmatprep.subr.mxu0 0.0
        %331 = vmatpush1.msra.mxu0 0.0
        %332 = vmatprep.subr.mxu0 0.0
        %333 = vmatpush1.msra.mxu0 0.0
        %334 = vmatprep.subr.mxu0 0.0
        %335 = vmatpush1.msra.mxu0 0.0
        %336 = vmatprep.subr.mxu0 0.0
        %337 = vmatpush1.msra.mxu0 0.0
        %338 = vmatprep.subr.mxu0 0.0
        %339 = vmatpush1.msra.mxu0 0.0
        %340 = vmatprep.subr.mxu0 0.0
        %341 = vmatpush1.msra.mxu0 0.0
        %342 = vmatprep.subr.mxu0 0.0
        %343 = vmatpush1.msra.mxu0 0.0
        %344 = vmatprep.mubr.f32.mxu0 0.0
        %v345 = vand.u32 %v274, 4294901760
        %v346 = vsub.f32 %v274, %v345
        %v347 = vand.u32 %v346, 4294901760
        %v348 = vsub.f32 %v346, %v347
        %v349 = vand.u32 %v348, 4294901760
        %350 = vmatmul.mubr.f32.gmra.mrb[0].mxu0 %v349
        %v351 = vpop.f32.mrb[0].mxu0
        %v352 = vadd.f32 0.0, %v351
        %v353 = vpop.f32.mrb[0].mxu0
        %354 = vdwg.mxu0
        %355 = vmatprep.subr.mxu0 0.0
        %v356 = vand.u32 %v268, 4294901760
        %v357 = vsub.f32 %v268, %v356
        %v358 = vand.u32 %v357, 4294901760
        %v359 = vsub.f32 %v357, %v358
        %v360 = vand.u32 %v359, 4294901760
        %361 = vmatpush1.msra.mxu0 %v360
        %362 = vmatprep.subr.mxu0 0.0
        %v363 = vand.u32 %v269, 4294901760
        %v364 = vsub.f32 %v269, %v363
        %v365 = vand.u32 %v364, 4294901760
        %v366 = vsub.f32 %v364, %v365
        %v367 = vand.u32 %v366, 4294901760
        %368 = vmatpush1.msra.mxu0 %v367
        %369 = vmatprep.subr.mxu0 0.0
        %v370 = vand.u32 %v270, 4294901760
        %v371 = vsub.f32 %v270, %v370
        %v372 = vand.u32 %v371, 4294901760
        %v373 = vsub.f32 %v371, %v372
        %v374 = vand.u32 %v373, 4294901760
        %375 = vmatpush1.msra.mxu0 %v374
        %376 = vmatprep.subr.mxu0 0.0
        %v377 = vand.u32 %v271, 4294901760
        %v378 = vsub.f32 %v271, %v377
        %v379 = vand.u32 %v378, 4294901760
        %v380 = vsub.f32 %v378, %v379
        %v381 = vand.u32 %v380, 4294901760
        %382 = vmatpush1.msra.mxu0 %v381
        %383 = vmatprep.subr.mxu0 0.0
        %384 = vmatpush1.msra.mxu0 0.0
        %385 = vmatprep.subr.mxu0 0.0
        %386 = vmatpush1.msra.mxu0 0.0
        %387 = vmatprep.subr.mxu0 0.0
        %388 = vmatpush1.msra.mxu0 0.0
        %389 = vmatprep.subr.mxu0 0.0
        %390 = vmatpush1.msra.mxu0 0.0
        %391 = vmatprep.subr.mxu0 0.0
        %392 = vmatpush1.msra.mxu0 0.0
        %393 = vmatprep.subr.mxu0 0.0
        %394 = vmatpush1.msra.mxu0 0.0
        %395 = vmatprep.subr.mxu0 0.0
        %396 = vmatpush1.msra.mxu0 0.0
        %397 = vmatprep.subr.mxu0 0.0
        %398 = vmatpush1.msra.mxu0 0.0
        %399 = vmatprep.subr.mxu0 0.0
        %400 = vmatpush1.msra.mxu0 0.0
        %401 = vmatprep.subr.mxu0 0.0
        %402 = vmatpush1.msra.mxu0 0.0
        %403 = vmatprep.subr.mxu0 0.0
        %404 = vmatpush1.msra.mxu0 0.0
        %405 = vmatprep.subr.mxu0 0.0
        %406 = vmatpush1.msra.mxu0 0.0
        %407 = vmatprep.subr.mxu0 0.0
        %408 = vmatpush1.msra.mxu0 0.0
        %409 = vmatprep.subr.mxu0 0.0
        %410 = vmatpush1.msra.mxu0 0.0
        %411 = vmatprep.subr.mxu0 0.0
        %412 = vmatpush1.msra.mxu0 0.0
        %413 = vmatprep.subr.mxu0 0.0
        %414 = vmatpush1.msra.mxu0 0.0
        %415 = vmatprep.subr.mxu0 0.0
        %416 = vmatpush1.msra.mxu0 0.0
        %417 = vmatprep.subr.mxu0 0.0
        %418 = vmatpush1.msra.mxu0 0.0
        %419 = vmatprep.subr.mxu0 0.0
        %420 = vmatpush1.msra.mxu0 0.0
        %421 = vmatprep.subr.mxu0 0.0
        %422 = vmatpush1.msra.mxu0 0.0
        %423 = vmatprep.subr.mxu0 0.0
        %424 = vmatpush1.msra.mxu0 0.0
        %425 = vmatprep.subr.mxu0 0.0
        %426 = vmatpush1.msra.mxu0 0.0
        %427 = vmatprep.subr.mxu0 0.0
        %428 = vmatpush1.msra.mxu0 0.0
        %429 = vmatprep.subr.mxu0 0.0
        %430 = vmatpush1.msra.mxu0 0.0
        %431 = vmatprep.subr.mxu0 0.0
        %432 = vmatpush1.msra.mxu0 0.0
        %433 = vmatprep.subr.mxu0 0.0
        %434 = vmatpush1.msra.mxu0 0.0
        %435 = vmatprep.subr.mxu0 0.0
        %436 = vmatpush1.msra.mxu0 0.0
        %437 = vmatprep.subr.mxu0 0.0
        %438 = vmatpush1.msra.mxu0 0.0
        %439 = vmatprep.mubr.f32.mxu0 0.0
        %v440 = vand.u32 %v274, 4294901760
        %441 = vmatmul.mubr.f32.gmra.mrb[0].mxu0 %v440
        %v442 = vpop.f32.mrb[0].mxu0
        %v443 = vadd.f32 %v352, %v442
        %v444 = vpop.f32.mrb[0].mxu0
        %445 = vdwg.mxu0
        %446 = vmatprep.subr.mxu0 0.0
        %v447 = vand.u32 %v268, 4294901760
        %v448 = vsub.f32 %v268, %v447
        %449 = vmatpush1.msra.mxu0 %v448
        %450 = vmatprep.subr.mxu0 0.0
        %v451 = vand.u32 %v269, 4294901760
        %v452 = vsub.f32 %v269, %v451
        %453 = vmatpush1.msra.mxu0 %v452
        %454 = vmatprep.subr.mxu0 0.0
        %v455 = vand.u32 %v270, 4294901760
        %v456 = vsub.f32 %v270, %v455
        %457 = vmatpush1.msra.mxu0 %v456
        %458 = vmatprep.subr.mxu0 0.0
        %v459 = vand.u32 %v271, 4294901760
        %v460 = vsub.f32 %v271, %v459
        %461 = vmatpush1.msra.mxu0 %v460
        %462 = vmatprep.subr.mxu0 0.0
        %463 = vmatpush1.msra.mxu0 0.0
        %464 = vmatprep.subr.mxu0 0.0
        %465 = vmatpush1.msra.mxu0 0.0
        %466 = vmatprep.subr.mxu0 0.0
        %467 = vmatpush1.msra.mxu0 0.0
        %468 = vmatprep.subr.mxu0 0.0
        %469 = vmatpush1.msra.mxu0 0.0
        %470 = vmatprep.subr.mxu0 0.0
        %471 = vmatpush1.msra.mxu0 0.0
        %472 = vmatprep.subr.mxu0 0.0
        %473 = vmatpush1.msra.mxu0 0.0
        %474 = vmatprep.subr.mxu0 0.0
        %475 = vmatpush1.msra.mxu0 0.0
        %476 = vmatprep.subr.mxu0 0.0
        %477 = vmatpush1.msra.mxu0 0.0
        %478 = vmatprep.subr.mxu0 0.0
        %479 = vmatpush1.msra.mxu0 0.0
        %480 = vmatprep.subr.mxu0 0.0
        %481 = vmatpush1.msra.mxu0 0.0
        %482 = vmatprep.subr.mxu0 0.0
        %483 = vmatpush1.msra.mxu0 0.0
        %484 = vmatprep.subr.mxu0 0.0
        %485 = vmatpush1.msra.mxu0 0.0
        %486 = vmatprep.subr.mxu0 0.0
        %487 = vmatpush1.msra.mxu0 0.0
        %488 = vmatprep.subr.mxu0 0.0
        %489 = vmatpush1.msra.mxu0 0.0
        %490 = vmatprep.subr.mxu0 0.0
        %491 = vmatpush1.msra.mxu0 0.0
        %492 = vmatprep.subr.mxu0 0.0
        %493 = vmatpush1.msra.mxu0 0.0
        %494 = vmatprep.subr.mxu0 0.0
        %495 = vmatpush1.msra.mxu0 0.0
        %496 = vmatprep.subr.mxu0 0.0
        %497 = vmatpush1.msra.mxu0 0.0
        %498 = vmatprep.subr.mxu0 0.0
        %499 = vmatpush1.msra.mxu0 0.0
        %500 = vmatprep.subr.mxu0 0.0
        %501 = vmatpush1.msra.mxu0 0.0
        %502 = vmatprep.subr.mxu0 0.0
        %503 = vmatpush1.msra.mxu0 0.0
        %504 = vmatprep.subr.mxu0 0.0
        %505 = vmatpush1.msra.mxu0 0.0
        %506 = vmatprep.subr.mxu0 0.0
        %507 = vmatpush1.msra.mxu0 0.0
        %508 = vmatprep.subr.mxu0 0.0
        %509 = vmatpush1.msra.mxu0 0.0
        %510 = vmatprep.subr.mxu0 0.0
        %511 = vmatpush1.msra.mxu0 0.0
        %512 = vmatprep.subr.mxu0 0.0
        %513 = vmatpush1.msra.mxu0 0.0
        %514 = vmatprep.subr.mxu0 0.0
        %515 = vmatpush1.msra.mxu0 0.0
        %516 = vmatprep.subr.mxu0 0.0
        %517 = vmatpush1.msra.mxu0 0.0
        %518 = vmatprep.mubr.f32.mxu0 0.0
        %v519 = vand.u32 %v274, 4294901760
        %v520 = vsub.f32 %v274, %v519
        %521 = vmatmul.mubr.f32.gmra.mrb[0].mxu0 %v520
        %v522 = vpop.f32.mrb[0].mxu0
        %v523 = vadd.f32 %v443, %v522
        %v524 = vpop.f32.mrb[0].mxu0
        %525 = vdwg.mxu0
        %526 = vmatprep.subr.mxu0 0.0
        %v527 = vand.u32 %v268, 4294901760
        %528 = vmatpush1.msra.mxu0 %v527
        %529 = vmatprep.subr.mxu0 0.0
        %v530 = vand.u32 %v269, 4294901760
        %531 = vmatpush1.msra.mxu0 %v530
        %532 = vmatprep.subr.mxu0 0.0
        %v533 = vand.u32 %v270, 4294901760
        %534 = vmatpush1.msra.mxu0 %v533
        %535 = vmatprep.subr.mxu0 0.0
        %v536 = vand.u32 %v271, 4294901760
        %537 = vmatpush1.msra.mxu0 %v536
        %538 = vmatprep.subr.mxu0 0.0
        %539 = vmatpush1.msra.mxu0 0.0
        %540 = vmatprep.subr.mxu0 0.0
        %541 = vmatpush1.msra.mxu0 0.0
        %542 = vmatprep.subr.mxu0 0.0
        %543 = vmatpush1.msra.mxu0 0.0
        %544 = vmatprep.subr.mxu0 0.0
        %545 = vmatpush1.msra.mxu0 0.0
        %546 = vmatprep.subr.mxu0 0.0
        %547 = vmatpush1.msra.mxu0 0.0
        %548 = vmatprep.subr.mxu0 0.0
        %549 = vmatpush1.msra.mxu0 0.0
        %550 = vmatprep.subr.mxu0 0.0
        %551 = vmatpush1.msra.mxu0 0.0
        %552 = vmatprep.subr.mxu0 0.0
        %553 = vmatpush1.msra.mxu0 0.0
        %554 = vmatprep.subr.mxu0 0.0
        %555 = vmatpush1.msra.mxu0 0.0
        %556 = vmatprep.subr.mxu0 0.0
        %557 = vmatpush1.msra.mxu0 0.0
        %558 = vmatprep.subr.mxu0 0.0
        %559 = vmatpush1.msra.mxu0 0.0
        %560 = vmatprep.subr.mxu0 0.0
        %561 = vmatpush1.msra.mxu0 0.0
        %562 = vmatprep.subr.mxu0 0.0
        %563 = vmatpush1.msra.mxu0 0.0
        %564 = vmatprep.subr.mxu0 0.0
        %565 = vmatpush1.msra.mxu0 0.0
        %566 = vmatprep.subr.mxu0 0.0
        %567 = vmatpush1.msra.mxu0 0.0
        %568 = vmatprep.subr.mxu0 0.0
        %569 = vmatpush1.msra.mxu0 0.0
        %570 = vmatprep.subr.mxu0 0.0
        %571 = vmatpush1.msra.mxu0 0.0
        %572 = vmatprep.subr.mxu0 0.0
        %573 = vmatpush1.msra.mxu0 0.0
        %574 = vmatprep.subr.mxu0 0.0
        %575 = vmatpush1.msra.mxu0 0.0
        %576 = vmatprep.subr.mxu0 0.0
        %577 = vmatpush1.msra.mxu0 0.0
        %578 = vmatprep.subr.mxu0 0.0
        %579 = vmatpush1.msra.mxu0 0.0
        %580 = vmatprep.subr.mxu0 0.0
        %581 = vmatpush1.msra.mxu0 0.0
        %582 = vmatprep.subr.mxu0 0.0
        %583 = vmatpush1.msra.mxu0 0.0
        %584 = vmatprep.subr.mxu0 0.0
        %585 = vmatpush1.msra.mxu0 0.0
        %586 = vmatprep.subr.mxu0 0.0
        %587 = vmatpush1.msra.mxu0 0.0
        %588 = vmatprep.subr.mxu0 0.0
        %589 = vmatpush1.msra.mxu0 0.0
        %590 = vmatprep.subr.mxu0 0.0
        %591 = vmatpush1.msra.mxu0 0.0
        %592 = vmatprep.subr.mxu0 0.0
        %593 = vmatpush1.msra.mxu0 0.0
        %594 = vmatprep.mubr.f32.mxu0 0.0
        %v595 = vand.u32 %v274, 4294901760
        %v596 = vsub.f32 %v274, %v595
        %v597 = vand.u32 %v596, 4294901760
        %598 = vmatmul.mubr.f32.gmra.mrb[0].mxu0 %v597
        %v599 = vpop.f32.mrb[0].mxu0
        %v600 = vadd.f32 %v523, %v599
        %v601 = vpop.f32.mrb[0].mxu0
        %602 = vdwg.mxu0
        %603 = vmatprep.subr.mxu0 0.0
        %v604 = vand.u32 %v268, 4294901760
        %v605 = vsub.f32 %v268, %v604
        %v606 = vand.u32 %v605, 4294901760
        %607 = vmatpush1.msra.mxu0 %v606
        %608 = vmatprep.subr.mxu0 0.0
        %v609 = vand.u32 %v269, 4294901760
        %v610 = vsub.f32 %v269, %v609
        %v611 = vand.u32 %v610, 4294901760
        %612 = vmatpush1.msra.mxu0 %v611
        %613 = vmatprep.subr.mxu0 0.0
        %v614 = vand.u32 %v270, 4294901760
        %v615 = vsub.f32 %v270, %v614
        %v616 = vand.u32 %v615, 4294901760
        %617 = vmatpush1.msra.mxu0 %v616
        %618 = vmatprep.subr.mxu0 0.0
        %v619 = vand.u32 %v271, 4294901760
        %v620 = vsub.f32 %v271, %v619
        %v621 = vand.u32 %v620, 4294901760
        %622 = vmatpush1.msra.mxu0 %v621
        %623 = vmatprep.subr.mxu0 0.0
        %624 = vmatpush1.msra.mxu0 0.0
        %625 = vmatprep.subr.mxu0 0.0
        %626 = vmatpush1.msra.mxu0 0.0
        %627 = vmatprep.subr.mxu0 0.0
        %628 = vmatpush1.msra.mxu0 0.0
        %629 = vmatprep.subr.mxu0 0.0
        %630 = vmatpush1.msra.mxu0 0.0
        %631 = vmatprep.subr.mxu0 0.0
        %632 = vmatpush1.msra.mxu0 0.0
        %633 = vmatprep.subr.mxu0 0.0
        %634 = vmatpush1.msra.mxu0 0.0
        %635 = vmatprep.subr.mxu0 0.0
        %636 = vmatpush1.msra.mxu0 0.0
        %637 = vmatprep.subr.mxu0 0.0
        %638 = vmatpush1.msra.mxu0 0.0
        %639 = vmatprep.subr.mxu0 0.0
        %640 = vmatpush1.msra.mxu0 0.0
        %641 = vmatprep.subr.mxu0 0.0
        %642 = vmatpush1.msra.mxu0 0.0
        %643 = vmatprep.subr.mxu0 0.0
        %644 = vmatpush1.msra.mxu0 0.0
        %645 = vmatprep.subr.mxu0 0.0
        %646 = vmatpush1.msra.mxu0 0.0
        %647 = vmatprep.subr.mxu0 0.0
        %648 = vmatpush1.msra.mxu0 0.0
        %649 = vmatprep.subr.mxu0 0.0
        %650 = vmatpush1.msra.mxu0 0.0
        %651 = vmatprep.subr.mxu0 0.0
        %652 = vmatpush1.msra.mxu0 0.0
        %653 = vmatprep.subr.mxu0 0.0
        %654 = vmatpush1.msra.mxu0 0.0
        %655 = vmatprep.subr.mxu0 0.0
        %656 = vmatpush1.msra.mxu0 0.0
        %657 = vmatprep.subr.mxu0 0.0
        %658 = vmatpush1.msra.mxu0 0.0
        %659 = vmatprep.subr.mxu0 0.0
        %660 = vmatpush1.msra.mxu0 0.0
        %661 = vmatprep.subr.mxu0 0.0
        %662 = vmatpush1.msra.mxu0 0.0
        %663 = vmatprep.subr.mxu0 0.0
        %664 = vmatpush1.msra.mxu0 0.0
        %665 = vmatprep.subr.mxu0 0.0
        %666 = vmatpush1.msra.mxu0 0.0
        %667 = vmatprep.subr.mxu0 0.0
        %668 = vmatpush1.msra.mxu0 0.0
        %669 = vmatprep.subr.mxu0 0.0
        %670 = vmatpush1.msra.mxu0 0.0
        %671 = vmatprep.subr.mxu0 0.0
        %672 = vmatpush1.msra.mxu0 0.0
        %673 = vmatprep.subr.mxu0 0.0
        %674 = vmatpush1.msra.mxu0 0.0
        %675 = vmatprep.subr.mxu0 0.0
        %676 = vmatpush1.msra.mxu0 0.0
        %677 = vmatprep.subr.mxu0 0.0
        %678 = vmatpush1.msra.mxu0 0.0
        %679 = vmatprep.mubr.f32.mxu0 0.0
        %v680 = vand.u32 %v274, 4294901760
        %681 = vmatmul.mubr.f32.gmra.mrb[0].mxu0 %v680
        %v682 = vpop.f32.mrb[0].mxu0
        %v683 = vadd.f32 %v600, %v682
        %v684 = vpop.f32.mrb[0].mxu0
        %685 = vdwg.mxu0
        %686 = vmatprep.subr.mxu0 0.0
        %v687 = vand.u32 %v268, 4294901760
        %688 = vmatpush1.msra.mxu0 %v687
        %689 = vmatprep.subr.mxu0 0.0
        %v690 = vand.u32 %v269, 4294901760
        %691 = vmatpush1.msra.mxu0 %v690
        %692 = vmatprep.subr.mxu0 0.0
        %v693 = vand.u32 %v270, 4294901760
        %694 = vmatpush1.msra.mxu0 %v693
        %695 = vmatprep.subr.mxu0 0.0
        %v696 = vand.u32 %v271, 4294901760
        %697 = vmatpush1.msra.mxu0 %v696
        %698 = vmatprep.subr.mxu0 0.0
        %699 = vmatpush1.msra.mxu0 0.0
        %700 = vmatprep.subr.mxu0 0.0
        %701 = vmatpush1.msra.mxu0 0.0
        %702 = vmatprep.subr.mxu0 0.0
        %703 = vmatpush1.msra.mxu0 0.0
        %704 = vmatprep.subr.mxu0 0.0
        %705 = vmatpush1.msra.mxu0 0.0
        %706 = vmatprep.subr.mxu0 0.0
        %707 = vmatpush1.msra.mxu0 0.0
        %708 = vmatprep.subr.mxu0 0.0
        %709 = vmatpush1.msra.mxu0 0.0
        %710 = vmatprep.subr.mxu0 0.0
        %711 = vmatpush1.msra.mxu0 0.0
        %712 = vmatprep.subr.mxu0 0.0
        %713 = vmatpush1.msra.mxu0 0.0
        %714 = vmatprep.subr.mxu0 0.0
        %715 = vmatpush1.msra.mxu0 0.0
        %716 = vmatprep.subr.mxu0 0.0
        %717 = vmatpush1.msra.mxu0 0.0
        %718 = vmatprep.subr.mxu0 0.0
        %719 = vmatpush1.msra.mxu0 0.0
        %720 = vmatprep.subr.mxu0 0.0
        %721 = vmatpush1.msra.mxu0 0.0
        %722 = vmatprep.subr.mxu0 0.0
        %723 = vmatpush1.msra.mxu0 0.0
        %724 = vmatprep.subr.mxu0 0.0
        %725 = vmatpush1.msra.mxu0 0.0
        %726 = vmatprep.subr.mxu0 0.0
        %727 = vmatpush1.msra.mxu0 0.0
        %728 = vmatprep.subr.mxu0 0.0
        %729 = vmatpush1.msra.mxu0 0.0
        %730 = vmatprep.subr.mxu0 0.0
        %731 = vmatpush1.msra.mxu0 0.0
        %732 = vmatprep.subr.mxu0 0.0
        %733 = vmatpush1.msra.mxu0 0.0
        %734 = vmatprep.subr.mxu0 0.0
        %735 = vmatpush1.msra.mxu0 0.0
        %736 = vmatprep.subr.mxu0 0.0
        %737 = vmatpush1.msra.mxu0 0.0
        %738 = vmatprep.subr.mxu0 0.0
        %739 = vmatpush1.msra.mxu0 0.0
        %740 = vmatprep.subr.mxu0 0.0
        %741 = vmatpush1.msra.mxu0 0.0
        %742 = vmatprep.subr.mxu0 0.0
        %743 = vmatpush1.msra.mxu0 0.0
        %744 = vmatprep.subr.mxu0 0.0
        %745 = vmatpush1.msra.mxu0 0.0
        %746 = vmatprep.subr.mxu0 0.0
        %747 = vmatpush1.msra.mxu0 0.0
        %748 = vmatprep.subr.mxu0 0.0
        %749 = vmatpush1.msra.mxu0 0.0
        %750 = vmatprep.subr.mxu0 0.0
        %751 = vmatpush1.msra.mxu0 0.0
        %752 = vmatprep.subr.mxu0 0.0
        %753 = vmatpush1.msra.mxu0 0.0
        %754 = vmatprep.mubr.f32.mxu0 0.0
        %v755 = vand.u32 %v274, 4294901760
        %756 = vmatmul.mubr.f32.gmra.mrb[0].mxu0 %v755
        %v757 = vpop.f32.mrb[0].mxu0
        %v758 = vadd.f32 %v683, %v757
        %v759 = vpop.f32.mrb[0].mxu0
        %760 = vdwg.mxu0
        %v761 = vmax.f32 %v758, 0.0
        %v762 = vld [vmem:[%s2] sm:$0xff]
        %v763 = vld [vmem:[%s2 + $0x8] sm:$0xff]
        %v764 = vld [vmem:[%s2 + $0x10] sm:$0xff]
        %v765 = vld [vmem:[%s2 + $0x18] sm:$0xff]
        %v766 = vld [vmem:[%s2 + $0x20] sm:$0xff]
        %v767 = vld [vmem:[%s2 + $0x28] sm:$0xff]
        %v768 = vld [vmem:[%s2 + $0x30] sm:$0xff]
        %v769 = vld [vmem:[%s2 + $0x38] sm:$0xff]
        %v770 = vld [vmem:[%s2 + $0x40] sm:$0xff]
        %v771 = vld [vmem:[%s2 + $0x48] sm:$0xff]
        %v772 = vld [vmem:[%s2 + $0x50] sm:$0xff]
        %v773 = vld [vmem:[%s2 + $0x58] sm:$0xff]
        %v774 = vld [vmem:[%s2 + $0x60] sm:$0xff]
        %v775 = vld [vmem:[%s2 + $0x68] sm:$0xff]
        %v776 = vld [vmem:[%s2 + $0x70] sm:$0xff]
        %v777 = vld [vmem:[%s2 + $0x78] sm:$0xff]
        %v778 = vld [vmem:[%s3] sm:$0x1]
        %v780 = vlaneseq
        %v781 = vshrl.u32 %v780, 7
        %v782 = vsub.s32 0, %v781
        %v783 = vrot.slane %v778, %v782
        %785 = vmatprep.subr.mxu0 0.0
        %v786 = vand.u32 %v762, 4294901760
        %787 = vmatpush1.msra.mxu0 %v786
        %788 = vmatprep.subr.mxu0 0.0
        %v789 = vand.u32 %v763, 4294901760
        %790 = vmatpush1.msra.mxu0 %v789
        %791 = vmatprep.subr.mxu0 0.0
        %v792 = vand.u32 %v764, 4294901760
        %793 = vmatpush1.msra.mxu0 %v792
        %794 = vmatprep.subr.mxu0 0.0
        %v795 = vand.u32 %v765, 4294901760
        %796 = vmatpush1.msra.mxu0 %v795
        %797 = vmatprep.subr.mxu0 0.0
        %v798 = vand.u32 %v766, 4294901760
        %799 = vmatpush1.msra.mxu0 %v798
        %800 = vmatprep.subr.mxu0 0.0
        %v801 = vand.u32 %v767, 4294901760
        %802 = vmatpush1.msra.mxu0 %v801
        %803 = vmatprep.subr.mxu0 0.0
        %v804 = vand.u32 %v768, 4294901760
        %805 = vmatpush1.msra.mxu0 %v804
        %806 = vmatprep.subr.mxu0 0.0
        %v807 = vand.u32 %v769, 4294901760
        %808 = vmatpush1.msra.mxu0 %v807
        %809 = vmatprep.subr.mxu0 0.0
        %v810 = vand.u32 %v770, 4294901760
        %811 = vmatpush1.msra.mxu0 %v810
        %812 = vmatprep.subr.mxu0 0.0
        %v813 = vand.u32 %v771, 4294901760
        %814 = vmatpush1.msra.mxu0 %v813
        %815 = vmatprep.subr.mxu0 0.0
        %v816 = vand.u32 %v772, 4294901760
        %817 = vmatpush1.msra.mxu0 %v816
        %818 = vmatprep.subr.mxu0 0.0
        %v819 = vand.u32 %v773, 4294901760
        %820 = vmatpush1.msra.mxu0 %v819
        %821 = vmatprep.subr.mxu0 0.0
        %v822 = vand.u32 %v774, 4294901760
        %823 = vmatpush1.msra.mxu0 %v822
        %824 = vmatprep.subr.mxu0 0.0
        %v825 = vand.u32 %v775, 4294901760
        %826 = vmatpush1.msra.mxu0 %v825
        %827 = vmatprep.subr.mxu0 0.0
        %v828 = vand.u32 %v776, 4294901760
        %829 = vmatpush1.msra.mxu0 %v828
        %830 = vmatprep.subr.mxu0 0.0
        %v831 = vand.u32 %v777, 4294901760
        %832 = vmatpush1.msra.mxu0 %v831
        %833 = vmatprep.subr.mxu0 0.0
        %834 = vmatpush1.msra.mxu0 0.0
        %835 = vmatprep.subr.mxu0 0.0
        %836 = vmatpush1.msra.mxu0 0.0
        %837 = vmatprep.subr.mxu0 0.0
        %838 = vmatpush1.msra.mxu0 0.0
        %839 = vmatprep.subr.mxu0 0.0
        %840 = vmatpush1.msra.mxu0 0.0
        %841 = vmatprep.subr.mxu0 0.0
        %842 = vmatpush1.msra.mxu0 0.0
        %843 = vmatprep.subr.mxu0 0.0
        %844 = vmatpush1.msra.mxu0 0.0
        %845 = vmatprep.subr.mxu0 0.0
        %846 = vmatpush1.msra.mxu0 0.0
        %847 = vmatprep.subr.mxu0 0.0
        %848 = vmatpush1.msra.mxu0 0.0
        %849 = vmatprep.subr.mxu0 0.0
        %850 = vmatpush1.msra.mxu0 0.0
        %851 = vmatprep.subr.mxu0 0.0
        %852 = vmatpush1.msra.mxu0 0.0
        %853 = vmatprep.subr.mxu0 0.0
        %854 = vmatpush1.msra.mxu0 0.0
        %855 = vmatprep.subr.mxu0 0.0
        %856 = vmatpush1.msra.mxu0 0.0
        %857 = vmatprep.subr.mxu0 0.0
        %858 = vmatpush1.msra.mxu0 0.0
        %859 = vmatprep.subr.mxu0 0.0
        %860 = vmatpush1.msra.mxu0 0.0
        %861 = vmatprep.subr.mxu0 0.0
        %862 = vmatpush1.msra.mxu0 0.0
        %863 = vmatprep.subr.mxu0 0.0
        %864 = vmatpush1.msra.mxu0 0.0
        %865 = vmatprep.mubr.f32.mxu0 0.0
        %v866 = vand.u32 %v761, 4294901760
        %v867 = vsub.f32 %v761, %v866
        %v868 = vand.u32 %v867, 4294901760
        %v869 = vsub.f32 %v867, %v868
        %v870 = vand.u32 %v869, 4294901760
        %871 = vmatmul.mubr.f32.gmra.mrb[0].mxu0 %v870
        %v872 = vpop.f32.mrb[0].mxu0
        %v873 = vadd.f32 %v783, %v872
        %v874 = vpop.f32.mrb[0].mxu0
        %875 = vdwg.mxu0
        %876 = vmatprep.subr.mxu0 0.0
        %v877 = vand.u32 %v762, 4294901760
        %v878 = vsub.f32 %v762, %v877
        %v879 = vand.u32 %v878, 4294901760
        %v880 = vsub.f32 %v878, %v879
        %v881 = vand.u32 %v880, 4294901760
        %882 = vmatpush1.msra.mxu0 %v881
        %883 = vmatprep.subr.mxu0 0.0
        %v884 = vand.u32 %v763, 4294901760
        %v885 = vsub.f32 %v763, %v884
        %v886 = vand.u32 %v885, 4294901760
        %v887 = vsub.f32 %v885, %v886
        %v888 = vand.u32 %v887, 4294901760
        %889 = vmatpush1.msra.mxu0 %v888
        %890 = vmatprep.subr.mxu0 0.0
        %v891 = vand.u32 %v764, 4294901760
        %v892 = vsub.f32 %v764, %v891
        %v893 = vand.u32 %v892, 4294901760
        %v894 = vsub.f32 %v892, %v893
        %v895 = vand.u32 %v894, 4294901760
        %896 = vmatpush1.msra.mxu0 %v895
        %897 = vmatprep.subr.mxu0 0.0
        %v898 = vand.u32 %v765, 4294901760
        %v899 = vsub.f32 %v765, %v898
        %v900 = vand.u32 %v899, 4294901760
        %v901 = vsub.f32 %v899, %v900
        %v902 = vand.u32 %v901, 4294901760
        %903 = vmatpush1.msra.mxu0 %v902
        %904 = vmatprep.subr.mxu0 0.0
        %v905 = vand.u32 %v766, 4294901760
        %v906 = vsub.f32 %v766, %v905
        %v907 = vand.u32 %v906, 4294901760
        %v908 = vsub.f32 %v906, %v907
        %v909 = vand.u32 %v908, 4294901760
        %910 = vmatpush1.msra.mxu0 %v909
        %911 = vmatprep.subr.mxu0 0.0
        %v912 = vand.u32 %v767, 4294901760
        %v913 = vsub.f32 %v767, %v912
        %v914 = vand.u32 %v913, 4294901760
        %v915 = vsub.f32 %v913, %v914
        %v916 = vand.u32 %v915, 4294901760
        %917 = vmatpush1.msra.mxu0 %v916
        %918 = vmatprep.subr.mxu0 0.0
        %v919 = vand.u32 %v768, 4294901760
        %v920 = vsub.f32 %v768, %v919
        %v921 = vand.u32 %v920, 4294901760
        %v922 = vsub.f32 %v920, %v921
        %v923 = vand.u32 %v922, 4294901760
        %924 = vmatpush1.msra.mxu0 %v923
        %925 = vmatprep.subr.mxu0 0.0
        %v926 = vand.u32 %v769, 4294901760
        %v927 = vsub.f32 %v769, %v926
        %v928 = vand.u32 %v927, 4294901760
        %v929 = vsub.f32 %v927, %v928
        %v930 = vand.u32 %v929, 4294901760
        %931 = vmatpush1.msra.mxu0 %v930
        %932 = vmatprep.subr.mxu0 0.0
        %v933 = vand.u32 %v770, 4294901760
        %v934 = vsub.f32 %v770, %v933
        %v935 = vand.u32 %v934, 4294901760
        %v936 = vsub.f32 %v934, %v935
        %v937 = vand.u32 %v936, 4294901760
        %938 = vmatpush1.msra.mxu0 %v937
        %939 = vmatprep.subr.mxu0 0.0
        %v940 = vand.u32 %v771, 4294901760
        %v941 = vsub.f32 %v771, %v940
        %v942 = vand.u32 %v941, 4294901760
        %v943 = vsub.f32 %v941, %v942
        %v944 = vand.u32 %v943, 4294901760
        %945 = vmatpush1.msra.mxu0 %v944
        %946 = vmatprep.subr.mxu0 0.0
        %v947 = vand.u32 %v772, 4294901760
        %v948 = vsub.f32 %v772, %v947
        %v949 = vand.u32 %v948, 4294901760
        %v950 = vsub.f32 %v948, %v949
        %v951 = vand.u32 %v950, 4294901760
        %952 = vmatpush1.msra.mxu0 %v951
        %953 = vmatprep.subr.mxu0 0.0
        %v954 = vand.u32 %v773, 4294901760
        %v955 = vsub.f32 %v773, %v954
        %v956 = vand.u32 %v955, 4294901760
        %v957 = vsub.f32 %v955, %v956
        %v958 = vand.u32 %v957, 4294901760
        %959 = vmatpush1.msra.mxu0 %v958
        %960 = vmatprep.subr.mxu0 0.0
        %v961 = vand.u32 %v774, 4294901760
        %v962 = vsub.f32 %v774, %v961
        %v963 = vand.u32 %v962, 4294901760
        %v964 = vsub.f32 %v962, %v963
        %v965 = vand.u32 %v964, 4294901760
        %966 = vmatpush1.msra.mxu0 %v965
        %967 = vmatprep.subr.mxu0 0.0
        %v968 = vand.u32 %v775, 4294901760
        %v969 = vsub.f32 %v775, %v968
        %v970 = vand.u32 %v969, 4294901760
        %v971 = vsub.f32 %v969, %v970
        %v972 = vand.u32 %v971, 4294901760
        %973 = vmatpush1.msra.mxu0 %v972
        %974 = vmatprep.subr.mxu0 0.0
        %v975 = vand.u32 %v776, 4294901760
        %v976 = vsub.f32 %v776, %v975
        %v977 = vand.u32 %v976, 4294901760
        %v978 = vsub.f32 %v976, %v977
        %v979 = vand.u32 %v978, 4294901760
        %980 = vmatpush1.msra.mxu0 %v979
        %981 = vmatprep.subr.mxu0 0.0
        %v982 = vand.u32 %v777, 4294901760
        %v983 = vsub.f32 %v777, %v982
        %v984 = vand.u32 %v983, 4294901760
        %v985 = vsub.f32 %v983, %v984
        %v986 = vand.u32 %v985, 4294901760
        %987 = vmatpush1.msra.mxu0 %v986
        %988 = vmatprep.subr.mxu0 0.0
        %989 = vmatpush1.msra.mxu0 0.0
        %990 = vmatprep.subr.mxu0 0.0
        %991 = vmatpush1.msra.mxu0 0.0
        %992 = vmatprep.subr.mxu0 0.0
        %993 = vmatpush1.msra.mxu0 0.0
        %994 = vmatprep.subr.mxu0 0.0
        %995 = vmatpush1.msra.mxu0 0.0
        %996 = vmatprep.subr.mxu0 0.0
        %997 = vmatpush1.msra.mxu0 0.0
        %998 = vmatprep.subr.mxu0 0.0
        %999 = vmatpush1.msra.mxu0 0.0
        %1000 = vmatprep.subr.mxu0 0.0
        %1001 = vmatpush1.msra.mxu0 0.0
        %1002 = vmatprep.subr.mxu0 0.0
        %1003 = vmatpush1.msra.mxu0 0.0
        %1004 = vmatprep.subr.mxu0 0.0
        %1005 = vmatpush1.msra.mxu0 0.0
        %1006 = vmatprep.subr.mxu0 0.0
        %1007 = vmatpush1.msra.mxu0 0.0
        %1008 = vmatprep.subr.mxu0 0.0
        %1009 = vmatpush1.msra.mxu0 0.0
        %1010 = vmatprep.subr.mxu0 0.0
        %1011 = vmatpush1.msra.mxu0 0.0
        %1012 = vmatprep.subr.mxu0 0.0
        %1013 = vmatpush1.msra.mxu0 0.0
        %1014 = vmatprep.subr.mxu0 0.0
        %1015 = vmatpush1.msra.mxu0 0.0
        %1016 = vmatprep.subr.mxu0 0.0
        %1017 = vmatpush1.msra.mxu0 0.0
        %1018 = vmatprep.subr.mxu0 0.0
        %1019 = vmatpush1.msra.mxu0 0.0
        %1020 = vmatprep.mubr.f32.mxu0 0.0
        %v1021 = vand.u32 %v761, 4294901760
        %1022 = vmatmul.mubr.f32.gmra.mrb[0].mxu0 %v1021
        %v1023 = vpop.f32.mrb[0].mxu0
        %v1024 = vadd.f32 %v873, %v1023
        %v1025 = vpop.f32.mrb[0].mxu0
        %1026 = vdwg.mxu0
        %1027 = vmatprep.subr.mxu0 0.0
        %v1028 = vand.u32 %v762, 4294901760
        %v1029 = vsub.f32 %v762, %v1028
        %1030 = vmatpush1.msra.mxu0 %v1029
        %1031 = vmatprep.subr.mxu0 0.0
        %v1032 = vand.u32 %v763, 4294901760
        %v1033 = vsub.f32 %v763, %v1032
        %1034 = vmatpush1.msra.mxu0 %v1033
        %1035 = vmatprep.subr.mxu0 0.0
        %v1036 = vand.u32 %v764, 4294901760
        %v1037 = vsub.f32 %v764, %v1036
        %1038 = vmatpush1.msra.mxu0 %v1037
        %1039 = vmatprep.subr.mxu0 0.0
        %v1040 = vand.u32 %v765, 4294901760
        %v1041 = vsub.f32 %v765, %v1040
        %1042 = vmatpush1.msra.mxu0 %v1041
        %1043 = vmatprep.subr.mxu0 0.0
        %v1044 = vand.u32 %v766, 4294901760
        %v1045 = vsub.f32 %v766, %v1044
        %1046 = vmatpush1.msra.mxu0 %v1045
        %1047 = vmatprep.subr.mxu0 0.0
        %v1048 = vand.u32 %v767, 4294901760
        %v1049 = vsub.f32 %v767, %v1048
        %1050 = vmatpush1.msra.mxu0 %v1049
        %1051 = vmatprep.subr.mxu0 0.0
        %v1052 = vand.u32 %v768, 4294901760
        %v1053 = vsub.f32 %v768, %v1052
        %1054 = vmatpush1.msra.mxu0 %v1053
        %1055 = vmatprep.subr.mxu0 0.0
        %v1056 = vand.u32 %v769, 4294901760
        %v1057 = vsub.f32 %v769, %v1056
        %1058 = vmatpush1.msra.mxu0 %v1057
        %1059 = vmatprep.subr.mxu0 0.0
        %v1060 = vand.u32 %v770, 4294901760
        %v1061 = vsub.f32 %v770, %v1060
        %1062 = vmatpush1.msra.mxu0 %v1061
        %1063 = vmatprep.subr.mxu0 0.0
        %v1064 = vand.u32 %v771, 4294901760
        %v1065 = vsub.f32 %v771, %v1064
        %1066 = vmatpush1.msra.mxu0 %v1065
        %1067 = vmatprep.subr.mxu0 0.0
        %v1068 = vand.u32 %v772, 4294901760
        %v1069 = vsub.f32 %v772, %v1068
        %1070 = vmatpush1.msra.mxu0 %v1069
        %1071 = vmatprep.subr.mxu0 0.0
        %v1072 = vand.u32 %v773, 4294901760
        %v1073 = vsub.f32 %v773, %v1072
        %1074 = vmatpush1.msra.mxu0 %v1073
        %1075 = vmatprep.subr.mxu0 0.0
        %v1076 = vand.u32 %v774, 4294901760
        %v1077 = vsub.f32 %v774, %v1076
        %1078 = vmatpush1.msra.mxu0 %v1077
        %1079 = vmatprep.subr.mxu0 0.0
        %v1080 = vand.u32 %v775, 4294901760
        %v1081 = vsub.f32 %v775, %v1080
        %1082 = vmatpush1.msra.mxu0 %v1081
        %1083 = vmatprep.subr.mxu0 0.0
        %v1084 = vand.u32 %v776, 4294901760
        %v1085 = vsub.f32 %v776, %v1084
        %1086 = vmatpush1.msra.mxu0 %v1085
        %1087 = vmatprep.subr.mxu0 0.0
        %v1088 = vand.u32 %v777, 4294901760
        %v1089 = vsub.f32 %v777, %v1088
        %1090 = vmatpush1.msra.mxu0 %v1089
        %1091 = vmatprep.subr.mxu0 0.0
        %1092 = vmatpush1.msra.mxu0 0.0
        %1093 = vmatprep.subr.mxu0 0.0
        %1094 = vmatpush1.msra.mxu0 0.0
        %1095 = vmatprep.subr.mxu0 0.0
        %1096 = vmatpush1.msra.mxu0 0.0
        %1097 = vmatprep.subr.mxu0 0.0
        %1098 = vmatpush1.msra.mxu0 0.0
        %1099 = vmatprep.subr.mxu0 0.0
        %1100 = vmatpush1.msra.mxu0 0.0
        %1101 = vmatprep.subr.mxu0 0.0
        %1102 = vmatpush1.msra.mxu0 0.0
        %1103 = vmatprep.subr.mxu0 0.0
        %1104 = vmatpush1.msra.mxu0 0.0
        %1105 = vmatprep.subr.mxu0 0.0
        %1106 = vmatpush1.msra.mxu0 0.0
        %1107 = vmatprep.subr.mxu0 0.0
        %1108 = vmatpush1.msra.mxu0 0.0
        %1109 = vmatprep.subr.mxu0 0.0
        %1110 = vmatpush1.msra.mxu0 0.0
        %1111 = vmatprep.subr.mxu0 0.0
        %1112 = vmatpush1.msra.mxu0 0.0
        %1113 = vmatprep.subr.mxu0 0.0
        %1114 = vmatpush1.msra.mxu0 0.0
        %1115 = vmatprep.subr.mxu0 0.0
        %1116 = vmatpush1.msra.mxu0 0.0
        %1117 = vmatprep.subr.mxu0 0.0
        %1118 = vmatpush1.msra.mxu0 0.0
        %1119 = vmatprep.subr.mxu0 0.0
        %1120 = vmatpush1.msra.mxu0 0.0
        %1121 = vmatprep.subr.mxu0 0.0
        %1122 = vmatpush1.msra.mxu0 0.0
        %1123 = vmatprep.mubr.f32.mxu0 0.0
        %v1124 = vand.u32 %v761, 4294901760
        %v1125 = vsub.f32 %v761, %v1124
        %1126 = vmatmul.mubr.f32.gmra.mrb[0].mxu0 %v1125
        %v1127 = vpop.f32.mrb[0].mxu0
        %v1128 = vadd.f32 %v1024, %v1127
        %v1129 = vpop.f32.mrb[0].mxu0
        %1130 = vdwg.mxu0
        %1131 = vmatprep.subr.mxu0 0.0
        %v1132 = vand.u32 %v762, 4294901760
        %1133 = vmatpush1.msra.mxu0 %v1132
        %1134 = vmatprep.subr.mxu0 0.0
        %v1135 = vand.u32 %v763, 4294901760
        %1136 = vmatpush1.msra.mxu0 %v1135
        %1137 = vmatprep.subr.mxu0 0.0
        %v1138 = vand.u32 %v764, 4294901760
        %1139 = vmatpush1.msra.mxu0 %v1138
        %1140 = vmatprep.subr.mxu0 0.0
        %v1141 = vand.u32 %v765, 4294901760
        %1142 = vmatpush1.msra.mxu0 %v1141
        %1143 = vmatprep.subr.mxu0 0.0
        %v1144 = vand.u32 %v766, 4294901760
        %1145 = vmatpush1.msra.mxu0 %v1144
        %1146 = vmatprep.subr.mxu0 0.0
        %v1147 = vand.u32 %v767, 4294901760
        %1148 = vmatpush1.msra.mxu0 %v1147
        %1149 = vmatprep.subr.mxu0 0.0
        %v1150 = vand.u32 %v768, 4294901760
        %1151 = vmatpush1.msra.mxu0 %v1150
        %1152 = vmatprep.subr.mxu0 0.0
        %v1153 = vand.u32 %v769, 4294901760
        %1154 = vmatpush1.msra.mxu0 %v1153
        %1155 = vmatprep.subr.mxu0 0.0
        %v1156 = vand.u32 %v770, 4294901760
        %1157 = vmatpush1.msra.mxu0 %v1156
        %1158 = vmatprep.subr.mxu0 0.0
        %v1159 = vand.u32 %v771, 4294901760
        %1160 = vmatpush1.msra.mxu0 %v1159
        %1161 = vmatprep.subr.mxu0 0.0
        %v1162 = vand.u32 %v772, 4294901760
        %1163 = vmatpush1.msra.mxu0 %v1162
        %1164 = vmatprep.subr.mxu0 0.0
        %v1165 = vand.u32 %v773, 4294901760
        %1166 = vmatpush1.msra.mxu0 %v1165
        %1167 = vmatprep.subr.mxu0 0.0
        %v1168 = vand.u32 %v774, 4294901760
        %1169 = vmatpush1.msra.mxu0 %v1168
        %1170 = vmatprep.subr.mxu0 0.0
        %v1171 = vand.u32 %v775, 4294901760
        %1172 = vmatpush1.msra.mxu0 %v1171
        %1173 = vmatprep.subr.mxu0 0.0
        %v1174 = vand.u32 %v776, 4294901760
        %1175 = vmatpush1.msra.mxu0 %v1174
        %1176 = vmatprep.subr.mxu0 0.0
        %v1177 = vand.u32 %v777, 4294901760
        %1178 = vmatpush1.msra.mxu0 %v1177
        %1179 = vmatprep.subr.mxu0 0.0
        %1180 = vmatpush1.msra.mxu0 0.0
        %1181 = vmatprep.subr.mxu0 0.0
        %1182 = vmatpush1.msra.mxu0 0.0
        %1183 = vmatprep.subr.mxu0 0.0
        %1184 = vmatpush1.msra.mxu0 0.0
        %1185 = vmatprep.subr.mxu0 0.0
        %1186 = vmatpush1.msra.mxu0 0.0
        %1187 = vmatprep.subr.mxu0 0.0
        %1188 = vmatpush1.msra.mxu0 0.0
        %1189 = vmatprep.subr.mxu0 0.0
        %1190 = vmatpush1.msra.mxu0 0.0
        %1191 = vmatprep.subr.mxu0 0.0
        %1192 = vmatpush1.msra.mxu0 0.0
        %1193 = vmatprep.subr.mxu0 0.0
        %1194 = vmatpush1.msra.mxu0 0.0
        %1195 = vmatprep.subr.mxu0 0.0
        %1196 = vmatpush1.msra.mxu0 0.0
        %1197 = vmatprep.subr.mxu0 0.0
        %1198 = vmatpush1.msra.mxu0 0.0
        %1199 = vmatprep.subr.mxu0 0.0
        %1200 = vmatpush1.msra.mxu0 0.0
        %1201 = vmatprep.subr.mxu0 0.0
        %1202 = vmatpush1.msra.mxu0 0.0
        %1203 = vmatprep.subr.mxu0 0.0
        %1204 = vmatpush1.msra.mxu0 0.0
        %1205 = vmatprep.subr.mxu0 0.0
        %1206 = vmatpush1.msra.mxu0 0.0
        %1207 = vmatprep.subr.mxu0 0.0
        %1208 = vmatpush1.msra.mxu0 0.0
        %1209 = vmatprep.subr.mxu0 0.0
        %1210 = vmatpush1.msra.mxu0 0.0
        %1211 = vmatprep.mubr.f32.mxu0 0.0
        %v1212 = vand.u32 %v761, 4294901760
        %v1213 = vsub.f32 %v761, %v1212
        %v1214 = vand.u32 %v1213, 4294901760
        %1215 = vmatmul.mubr.f32.gmra.mrb[0].mxu0 %v1214
        %v1216 = vpop.f32.mrb[0].mxu0
        %v1217 = vadd.f32 %v1128, %v1216
        %v1218 = vpop.f32.mrb[0].mxu0
        %1219 = vdwg.mxu0
        %1220 = vmatprep.subr.mxu0 0.0
        %v1221 = vand.u32 %v762, 4294901760
        %v1222 = vsub.f32 %v762, %v1221
        %v1223 = vand.u32 %v1222, 4294901760
        %1224 = vmatpush1.msra.mxu0 %v1223
        %1225 = vmatprep.subr.mxu0 0.0
        %v1226 = vand.u32 %v763, 4294901760
        %v1227 = vsub.f32 %v763, %v1226
        %v1228 = vand.u32 %v1227, 4294901760
        %1229 = vmatpush1.msra.mxu0 %v1228
        %1230 = vmatprep.subr.mxu0 0.0
        %v1231 = vand.u32 %v764, 4294901760
        %v1232 = vsub.f32 %v764, %v1231
        %v1233 = vand.u32 %v1232, 4294901760
        %1234 = vmatpush1.msra.mxu0 %v1233
        %1235 = vmatprep.subr.mxu0 0.0
        %v1236 = vand.u32 %v765, 4294901760
        %v1237 = vsub.f32 %v765, %v1236
        %v1238 = vand.u32 %v1237, 4294901760
        %1239 = vmatpush1.msra.mxu0 %v1238
        %1240 = vmatprep.subr.mxu0 0.0
        %v1241 = vand.u32 %v766, 4294901760
        %v1242 = vsub.f32 %v766, %v1241
        %v1243 = vand.u32 %v1242, 4294901760
        %1244 = vmatpush1.msra.mxu0 %v1243
        %1245 = vmatprep.subr.mxu0 0.0
        %v1246 = vand.u32 %v767, 4294901760
        %v1247 = vsub.f32 %v767, %v1246
        %v1248 = vand.u32 %v1247, 4294901760
        %1249 = vmatpush1.msra.mxu0 %v1248
        %1250 = vmatprep.subr.mxu0 0.0
        %v1251 = vand.u32 %v768, 4294901760
        %v1252 = vsub.f32 %v768, %v1251
        %v1253 = vand.u32 %v1252, 4294901760
        %1254 = vmatpush1.msra.mxu0 %v1253
        %1255 = vmatprep.subr.mxu0 0.0
        %v1256 = vand.u32 %v769, 4294901760
        %v1257 = vsub.f32 %v769, %v1256
        %v1258 = vand.u32 %v1257, 4294901760
        %1259 = vmatpush1.msra.mxu0 %v1258
        %1260 = vmatprep.subr.mxu0 0.0
        %v1261 = vand.u32 %v770, 4294901760
        %v1262 = vsub.f32 %v770, %v1261
        %v1263 = vand.u32 %v1262, 4294901760
        %1264 = vmatpush1.msra.mxu0 %v1263
        %1265 = vmatprep.subr.mxu0 0.0
        %v1266 = vand.u32 %v771, 4294901760
        %v1267 = vsub.f32 %v771, %v1266
        %v1268 = vand.u32 %v1267, 4294901760
        %1269 = vmatpush1.msra.mxu0 %v1268
        %1270 = vmatprep.subr.mxu0 0.0
        %v1271 = vand.u32 %v772, 4294901760
        %v1272 = vsub.f32 %v772, %v1271
        %v1273 = vand.u32 %v1272, 4294901760
        %1274 = vmatpush1.msra.mxu0 %v1273
        %1275 = vmatprep.subr.mxu0 0.0
        %v1276 = vand.u32 %v773, 4294901760
        %v1277 = vsub.f32 %v773, %v1276
        %v1278 = vand.u32 %v1277, 4294901760
        %1279 = vmatpush1.msra.mxu0 %v1278
        %1280 = vmatprep.subr.mxu0 0.0
        %v1281 = vand.u32 %v774, 4294901760
        %v1282 = vsub.f32 %v774, %v1281
        %v1283 = vand.u32 %v1282, 4294901760
        %1284 = vmatpush1.msra.mxu0 %v1283
        %1285 = vmatprep.subr.mxu0 0.0
        %v1286 = vand.u32 %v775, 4294901760
        %v1287 = vsub.f32 %v775, %v1286
        %v1288 = vand.u32 %v1287, 4294901760
        %1289 = vmatpush1.msra.mxu0 %v1288
        %1290 = vmatprep.subr.mxu0 0.0
        %v1291 = vand.u32 %v776, 4294901760
        %v1292 = vsub.f32 %v776, %v1291
        %v1293 = vand.u32 %v1292, 4294901760
        %1294 = vmatpush1.msra.mxu0 %v1293
        %1295 = vmatprep.subr.mxu0 0.0
        %v1296 = vand.u32 %v777, 4294901760
        %v1297 = vsub.f32 %v777, %v1296
        %v1298 = vand.u32 %v1297, 4294901760
        %1299 = vmatpush1.msra.mxu0 %v1298
        %1300 = vmatprep.subr.mxu0 0.0
        %1301 = vmatpush1.msra.mxu0 0.0
        %1302 = vmatprep.subr.mxu0 0.0
        %1303 = vmatpush1.msra.mxu0 0.0
        %1304 = vmatprep.subr.mxu0 0.0
        %1305 = vmatpush1.msra.mxu0 0.0
        %1306 = vmatprep.subr.mxu0 0.0
        %1307 = vmatpush1.msra.mxu0 0.0
        %1308 = vmatprep.subr.mxu0 0.0
        %1309 = vmatpush1.msra.mxu0 0.0
        %1310 = vmatprep.subr.mxu0 0.0
        %1311 = vmatpush1.msra.mxu0 0.0
        %1312 = vmatprep.subr.mxu0 0.0
        %1313 = vmatpush1.msra.mxu0 0.0
        %1314 = vmatprep.subr.mxu0 0.0
        %1315 = vmatpush1.msra.mxu0 0.0
        %1316 = vmatprep.subr.mxu0 0.0
        %1317 = vmatpush1.msra.mxu0 0.0
        %1318 = vmatprep.subr.mxu0 0.0
        %1319 = vmatpush1.msra.mxu0 0.0
        %1320 = vmatprep.subr.mxu0 0.0
        %1321 = vmatpush1.msra.mxu0 0.0
        %1322 = vmatprep.subr.mxu0 0.0
        %1323 = vmatpush1.msra.mxu0 0.0
        %1324 = vmatprep.subr.mxu0 0.0
        %1325 = vmatpush1.msra.mxu0 0.0
        %1326 = vmatprep.subr.mxu0 0.0
        %1327 = vmatpush1.msra.mxu0 0.0
        %1328 = vmatprep.subr.mxu0 0.0
        %1329 = vmatpush1.msra.mxu0 0.0
        %1330 = vmatprep.subr.mxu0 0.0
        %1331 = vmatpush1.msra.mxu0 0.0
        %1332 = vmatprep.mubr.f32.mxu0 0.0
        %v1333 = vand.u32 %v761, 4294901760
        %1334 = vmatmul.mubr.f32.gmra.mrb[0].mxu0 %v1333
        %v1335 = vpop.f32.mrb[0].mxu0
        %v1336 = vadd.f32 %v1217, %v1335
        %v1337 = vpop.f32.mrb[0].mxu0
        %1338 = vdwg.mxu0
        %1339 = vmatprep.subr.mxu0 0.0
        %v1340 = vand.u32 %v762, 4294901760
        %1341 = vmatpush1.msra.mxu0 %v1340
        %1342 = vmatprep.subr.mxu0 0.0
        %v1343 = vand.u32 %v763, 4294901760
        %1344 = vmatpush1.msra.mxu0 %v1343
        %1345 = vmatprep.subr.mxu0 0.0
        %v1346 = vand.u32 %v764, 4294901760
        %1347 = vmatpush1.msra.mxu0 %v1346
        %1348 = vmatprep.subr.mxu0 0.0
        %v1349 = vand.u32 %v765, 4294901760
        %1350 = vmatpush1.msra.mxu0 %v1349
        %1351 = vmatprep.subr.mxu0 0.0
        %v1352 = vand.u32 %v766, 4294901760
        %1353 = vmatpush1.msra.mxu0 %v1352
        %1354 = vmatprep.subr.mxu0 0.0
        %v1355 = vand.u32 %v767, 4294901760
        %1356 = vmatpush1.msra.mxu0 %v1355
        %1357 = vmatprep.subr.mxu0 0.0
        %v1358 = vand.u32 %v768, 4294901760
        %1359 = vmatpush1.msra.mxu0 %v1358
        %1360 = vmatprep.subr.mxu0 0.0
        %v1361 = vand.u32 %v769, 4294901760
        %1362 = vmatpush1.msra.mxu0 %v1361
        %1363 = vmatprep.subr.mxu0 0.0
        %v1364 = vand.u32 %v770, 4294901760
        %1365 = vmatpush1.msra.mxu0 %v1364
        %1366 = vmatprep.subr.mxu0 0.0
        %v1367 = vand.u32 %v771, 4294901760
        %1368 = vmatpush1.msra.mxu0 %v1367
        %1369 = vmatprep.subr.mxu0 0.0
        %v1370 = vand.u32 %v772, 4294901760
        %1371 = vmatpush1.msra.mxu0 %v1370
        %1372 = vmatprep.subr.mxu0 0.0
        %v1373 = vand.u32 %v773, 4294901760
        %1374 = vmatpush1.msra.mxu0 %v1373
        %1375 = vmatprep.subr.mxu0 0.0
        %v1376 = vand.u32 %v774, 4294901760
        %1377 = vmatpush1.msra.mxu0 %v1376
        %1378 = vmatprep.subr.mxu0 0.0
        %v1379 = vand.u32 %v775, 4294901760
        %1380 = vmatpush1.msra.mxu0 %v1379
        %1381 = vmatprep.subr.mxu0 0.0
        %v1382 = vand.u32 %v776, 4294901760
        %1383 = vmatpush1.msra.mxu0 %v1382
        %1384 = vmatprep.subr.mxu0 0.0
        %v1385 = vand.u32 %v777, 4294901760
        %1386 = vmatpush1.msra.mxu0 %v1385
        %1387 = vmatprep.subr.mxu0 0.0
        %1388 = vmatpush1.msra.mxu0 0.0
        %1389 = vmatprep.subr.mxu0 0.0
        %1390 = vmatpush1.msra.mxu0 0.0
        %1391 = vmatprep.subr.mxu0 0.0
        %1392 = vmatpush1.msra.mxu0 0.0
        %1393 = vmatprep.subr.mxu0 0.0
        %1394 = vmatpush1.msra.mxu0 0.0
        %1395 = vmatprep.subr.mxu0 0.0
        %1396 = vmatpush1.msra.mxu0 0.0
        %1397 = vmatprep.subr.mxu0 0.0
        %1398 = vmatpush1.msra.mxu0 0.0
        %1399 = vmatprep.subr.mxu0 0.0
        %1400 = vmatpush1.msra.mxu0 0.0
        %1401 = vmatprep.subr.mxu0 0.0
        %1402 = vmatpush1.msra.mxu0 0.0
        %1403 = vmatprep.subr.mxu0 0.0
        %1404 = vmatpush1.msra.mxu0 0.0
        %1405 = vmatprep.subr.mxu0 0.0
        %1406 = vmatpush1.msra.mxu0 0.0
        %1407 = vmatprep.subr.mxu0 0.0
        %1408 = vmatpush1.msra.mxu0 0.0
        %1409 = vmatprep.subr.mxu0 0.0
        %1410 = vmatpush1.msra.mxu0 0.0
        %1411 = vmatprep.subr.mxu0 0.0
        %1412 = vmatpush1.msra.mxu0 0.0
        %1413 = vmatprep.subr.mxu0 0.0
        %1414 = vmatpush1.msra.mxu0 0.0
        %1415 = vmatprep.subr.mxu0 0.0
        %1416 = vmatpush1.msra.mxu0 0.0
        %1417 = vmatprep.subr.mxu0 0.0
        %1418 = vmatpush1.msra.mxu0 0.0
        %1419 = vmatprep.mubr.f32.mxu0 0.0
        %v1420 = vand.u32 %v761, 4294901760
        %1421 = vmatmul.mubr.f32.gmra.mrb[0].mxu0 %v1420
        %v1422 = vpop.f32.mrb[0].mxu0
        %v1423 = vadd.f32 %v1336, %v1422
        %v1424 = vpop.f32.mrb[0].mxu0
        %1425 = vdwg.mxu0
        %v1426 = vmax.f32 %v1423, 0.0
        %v1427 = vld [vmem:[%s4] sm:$0xff]
        %v1428 = vld [vmem:[%s4 + $0x8] sm:$0xff]
        %v1429 = vld [vmem:[%s4 + $0x10] sm:$0xff]
        %v1430 = vld [vmem:[%s4 + $0x18] sm:$0xff]
        %v1431 = vld [vmem:[%s4 + $0x20] sm:$0xff]
        %v1432 = vld [vmem:[%s4 + $0x28] sm:$0xff]
        %v1433 = vld [vmem:[%s4 + $0x30] sm:$0xff]
        %v1434 = vld [vmem:[%s4 + $0x38] sm:$0xff]
        %v1435 = vld [vmem:[%s4 + $0x40] sm:$0xff]
        %v1436 = vld [vmem:[%s4 + $0x48] sm:$0xff]
        %v1437 = vld [vmem:[%s4 + $0x50] sm:$0xff]
        %v1438 = vld [vmem:[%s4 + $0x58] sm:$0xff]
        %v1439 = vld [vmem:[%s4 + $0x60] sm:$0xff]
        %v1440 = vld [vmem:[%s4 + $0x68] sm:$0xff]
        %v1441 = vld [vmem:[%s4 + $0x70] sm:$0xff]
        %v1442 = vld [vmem:[%s4 + $0x78] sm:$0xff]
        %v1443 = vld [vmem:[%s5] sm:$0x1]
        %v1445 = vlaneseq
        %v1446 = vshrl.u32 %v1445, 7
        %v1447 = vsub.s32 0, %v1446
        %v1448 = vrot.slane %v1443, %v1447
        %1450 = vmatprep.subr.mxu0 0.0
        %v1451 = vand.u32 %v1427, 4294901760
        %1452 = vmatpush1.msra.mxu0 %v1451
        %1453 = vmatprep.subr.mxu0 0.0
        %v1454 = vand.u32 %v1428, 4294901760
        %1455 = vmatpush1.msra.mxu0 %v1454
        %1456 = vmatprep.subr.mxu0 0.0
        %v1457 = vand.u32 %v1429, 4294901760
        %1458 = vmatpush1.msra.mxu0 %v1457
        %1459 = vmatprep.subr.mxu0 0.0
        %v1460 = vand.u32 %v1430, 4294901760
        %1461 = vmatpush1.msra.mxu0 %v1460
        %1462 = vmatprep.subr.mxu0 0.0
        %v1463 = vand.u32 %v1431, 4294901760
        %1464 = vmatpush1.msra.mxu0 %v1463
        %1465 = vmatprep.subr.mxu0 0.0
        %v1466 = vand.u32 %v1432, 4294901760
        %1467 = vmatpush1.msra.mxu0 %v1466
        %1468 = vmatprep.subr.mxu0 0.0
        %v1469 = vand.u32 %v1433, 4294901760
        %1470 = vmatpush1.msra.mxu0 %v1469
        %1471 = vmatprep.subr.mxu0 0.0
        %v1472 = vand.u32 %v1434, 4294901760
        %1473 = vmatpush1.msra.mxu0 %v1472
        %1474 = vmatprep.subr.mxu0 0.0
        %v1475 = vand.u32 %v1435, 4294901760
        %1476 = vmatpush1.msra.mxu0 %v1475
        %1477 = vmatprep.subr.mxu0 0.0
        %v1478 = vand.u32 %v1436, 4294901760
        %1479 = vmatpush1.msra.mxu0 %v1478
        %1480 = vmatprep.subr.mxu0 0.0
        %v1481 = vand.u32 %v1437, 4294901760
        %1482 = vmatpush1.msra.mxu0 %v1481
        %1483 = vmatprep.subr.mxu0 0.0
        %v1484 = vand.u32 %v1438, 4294901760
        %1485 = vmatpush1.msra.mxu0 %v1484
        %1486 = vmatprep.subr.mxu0 0.0
        %v1487 = vand.u32 %v1439, 4294901760
        %1488 = vmatpush1.msra.mxu0 %v1487
        %1489 = vmatprep.subr.mxu0 0.0
        %v1490 = vand.u32 %v1440, 4294901760
        %1491 = vmatpush1.msra.mxu0 %v1490
        %1492 = vmatprep.subr.mxu0 0.0
        %v1493 = vand.u32 %v1441, 4294901760
        %1494 = vmatpush1.msra.mxu0 %v1493
        %1495 = vmatprep.subr.mxu0 0.0
        %v1496 = vand.u32 %v1442, 4294901760
        %1497 = vmatpush1.msra.mxu0 %v1496
        %1498 = vmatprep.subr.mxu0 0.0
        %1499 = vmatpush1.msra.mxu0 0.0
        %1500 = vmatprep.subr.mxu0 0.0
        %1501 = vmatpush1.msra.mxu0 0.0
        %1502 = vmatprep.subr.mxu0 0.0
        %1503 = vmatpush1.msra.mxu0 0.0
        %1504 = vmatprep.subr.mxu0 0.0
        %1505 = vmatpush1.msra.mxu0 0.0
        %1506 = vmatprep.subr.mxu0 0.0
        %1507 = vmatpush1.msra.mxu0 0.0
        %1508 = vmatprep.subr.mxu0 0.0
        %1509 = vmatpush1.msra.mxu0 0.0
        %1510 = vmatprep.subr.mxu0 0.0
        %1511 = vmatpush1.msra.mxu0 0.0
        %1512 = vmatprep.subr.mxu0 0.0
        %1513 = vmatpush1.msra.mxu0 0.0
        %1514 = vmatprep.subr.mxu0 0.0
        %1515 = vmatpush1.msra.mxu0 0.0
        %1516 = vmatprep.subr.mxu0 0.0
        %1517 = vmatpush1.msra.mxu0 0.0
        %1518 = vmatprep.subr.mxu0 0.0
        %1519 = vmatpush1.msra.mxu0 0.0
        %1520 = vmatprep.subr.mxu0 0.0
        %1521 = vmatpush1.msra.mxu0 0.0
        %1522 = vmatprep.subr.mxu0 0.0
        %1523 = vmatpush1.msra.mxu0 0.0
        %1524 = vmatprep.subr.mxu0 0.0
        %1525 = vmatpush1.msra.mxu0 0.0
        %1526 = vmatprep.subr.mxu0 0.0
        %1527 = vmatpush1.msra.mxu0 0.0
        %1528 = vmatprep.subr.mxu0 0.0
        %1529 = vmatpush1.msra.mxu0 0.0
        %1530 = vmatprep.mubr.f32.mxu0 0.0
        %v1531 = vand.u32 %v1426, 4294901760
        %v1532 = vsub.f32 %v1426, %v1531
        %v1533 = vand.u32 %v1532, 4294901760
        %v1534 = vsub.f32 %v1532, %v1533
        %v1535 = vand.u32 %v1534, 4294901760
        %1536 = vmatmul.mubr.f32.gmra.mrb[0].mxu0 %v1535
        %v1537 = vpop.f32.mrb[0].mxu0
        %v1538 = vadd.f32 %v1448, %v1537
        %v1539 = vpop.f32.mrb[0].mxu0
        %1540 = vdwg.mxu0
        %1541 = vmatprep.subr.mxu0 0.0
        %v1542 = vand.u32 %v1427, 4294901760
        %v1543 = vsub.f32 %v1427, %v1542
        %v1544 = vand.u32 %v1543, 4294901760
        %v1545 = vsub.f32 %v1543, %v1544
        %v1546 = vand.u32 %v1545, 4294901760
        %1547 = vmatpush1.msra.mxu0 %v1546
        %1548 = vmatprep.subr.mxu0 0.0
        %v1549 = vand.u32 %v1428, 4294901760
        %v1550 = vsub.f32 %v1428, %v1549
        %v1551 = vand.u32 %v1550, 4294901760
        %v1552 = vsub.f32 %v1550, %v1551
        %v1553 = vand.u32 %v1552, 4294901760
        %1554 = vmatpush1.msra.mxu0 %v1553
        %1555 = vmatprep.subr.mxu0 0.0
        %v1556 = vand.u32 %v1429, 4294901760
        %v1557 = vsub.f32 %v1429, %v1556
        %v1558 = vand.u32 %v1557, 4294901760
        %v1559 = vsub.f32 %v1557, %v1558
        %v1560 = vand.u32 %v1559, 4294901760
        %1561 = vmatpush1.msra.mxu0 %v1560
        %1562 = vmatprep.subr.mxu0 0.0
        %v1563 = vand.u32 %v1430, 4294901760
        %v1564 = vsub.f32 %v1430, %v1563
        %v1565 = vand.u32 %v1564, 4294901760
        %v1566 = vsub.f32 %v1564, %v1565
        %v1567 = vand.u32 %v1566, 4294901760
        %1568 = vmatpush1.msra.mxu0 %v1567
        %1569 = vmatprep.subr.mxu0 0.0
        %v1570 = vand.u32 %v1431, 4294901760
        %v1571 = vsub.f32 %v1431, %v1570
        %v1572 = vand.u32 %v1571, 4294901760
        %v1573 = vsub.f32 %v1571, %v1572
        %v1574 = vand.u32 %v1573, 4294901760
        %1575 = vmatpush1.msra.mxu0 %v1574
        %1576 = vmatprep.subr.mxu0 0.0
        %v1577 = vand.u32 %v1432, 4294901760
        %v1578 = vsub.f32 %v1432, %v1577
        %v1579 = vand.u32 %v1578, 4294901760
        %v1580 = vsub.f32 %v1578, %v1579
        %v1581 = vand.u32 %v1580, 4294901760
        %1582 = vmatpush1.msra.mxu0 %v1581
        %1583 = vmatprep.subr.mxu0 0.0
        %v1584 = vand.u32 %v1433, 4294901760
        %v1585 = vsub.f32 %v1433, %v1584
        %v1586 = vand.u32 %v1585, 4294901760
        %v1587 = vsub.f32 %v1585, %v1586
        %v1588 = vand.u32 %v1587, 4294901760
        %1589 = vmatpush1.msra.mxu0 %v1588
        %1590 = vmatprep.subr.mxu0 0.0
        %v1591 = vand.u32 %v1434, 4294901760
        %v1592 = vsub.f32 %v1434, %v1591
        %v1593 = vand.u32 %v1592, 4294901760
        %v1594 = vsub.f32 %v1592, %v1593
        %v1595 = vand.u32 %v1594, 4294901760
        %1596 = vmatpush1.msra.mxu0 %v1595
        %1597 = vmatprep.subr.mxu0 0.0
        %v1598 = vand.u32 %v1435, 4294901760
        %v1599 = vsub.f32 %v1435, %v1598
        %v1600 = vand.u32 %v1599, 4294901760
        %v1601 = vsub.f32 %v1599, %v1600
        %v1602 = vand.u32 %v1601, 4294901760
        %1603 = vmatpush1.msra.mxu0 %v1602
        %1604 = vmatprep.subr.mxu0 0.0
        %v1605 = vand.u32 %v1436, 4294901760
        %v1606 = vsub.f32 %v1436, %v1605
        %v1607 = vand.u32 %v1606, 4294901760
        %v1608 = vsub.f32 %v1606, %v1607
        %v1609 = vand.u32 %v1608, 4294901760
        %1610 = vmatpush1.msra.mxu0 %v1609
        %1611 = vmatprep.subr.mxu0 0.0
        %v1612 = vand.u32 %v1437, 4294901760
        %v1613 = vsub.f32 %v1437, %v1612
        %v1614 = vand.u32 %v1613, 4294901760
        %v1615 = vsub.f32 %v1613, %v1614
        %v1616 = vand.u32 %v1615, 4294901760
        %1617 = vmatpush1.msra.mxu0 %v1616
        %1618 = vmatprep.subr.mxu0 0.0
        %v1619 = vand.u32 %v1438, 4294901760
        %v1620 = vsub.f32 %v1438, %v1619
        %v1621 = vand.u32 %v1620, 4294901760
        %v1622 = vsub.f32 %v1620, %v1621
        %v1623 = vand.u32 %v1622, 4294901760
        %1624 = vmatpush1.msra.mxu0 %v1623
        %1625 = vmatprep.subr.mxu0 0.0
        %v1626 = vand.u32 %v1439, 4294901760
        %v1627 = vsub.f32 %v1439, %v1626
        %v1628 = vand.u32 %v1627, 4294901760
        %v1629 = vsub.f32 %v1627, %v1628
        %v1630 = vand.u32 %v1629, 4294901760
        %1631 = vmatpush1.msra.mxu0 %v1630
        %1632 = vmatprep.subr.mxu0 0.0
        %v1633 = vand.u32 %v1440, 4294901760
        %v1634 = vsub.f32 %v1440, %v1633
        %v1635 = vand.u32 %v1634, 4294901760
        %v1636 = vsub.f32 %v1634, %v1635
        %v1637 = vand.u32 %v1636, 4294901760
        %1638 = vmatpush1.msra.mxu0 %v1637
        %1639 = vmatprep.subr.mxu0 0.0
        %v1640 = vand.u32 %v1441, 4294901760
        %v1641 = vsub.f32 %v1441, %v1640
        %v1642 = vand.u32 %v1641, 4294901760
        %v1643 = vsub.f32 %v1641, %v1642
        %v1644 = vand.u32 %v1643, 4294901760
        %1645 = vmatpush1.msra.mxu0 %v1644
        %1646 = vmatprep.subr.mxu0 0.0
        %v1647 = vand.u32 %v1442, 4294901760
        %v1648 = vsub.f32 %v1442, %v1647
        %v1649 = vand.u32 %v1648, 4294901760
        %v1650 = vsub.f32 %v1648, %v1649
        %v1651 = vand.u32 %v1650, 4294901760
        %1652 = vmatpush1.msra.mxu0 %v1651
        %1653 = vmatprep.subr.mxu0 0.0
        %1654 = vmatpush1.msra.mxu0 0.0
        %1655 = vmatprep.subr.mxu0 0.0
        %1656 = vmatpush1.msra.mxu0 0.0
        %1657 = vmatprep.subr.mxu0 0.0
        %1658 = vmatpush1.msra.mxu0 0.0
        %1659 = vmatprep.subr.mxu0 0.0
        %1660 = vmatpush1.msra.mxu0 0.0
        %1661 = vmatprep.subr.mxu0 0.0
        %1662 = vmatpush1.msra.mxu0 0.0
        %1663 = vmatprep.subr.mxu0 0.0
        %1664 = vmatpush1.msra.mxu0 0.0
        %1665 = vmatprep.subr.mxu0 0.0
        %1666 = vmatpush1.msra.mxu0 0.0
        %1667 = vmatprep.subr.mxu0 0.0
        %1668 = vmatpush1.msra.mxu0 0.0
        %1669 = vmatprep.subr.mxu0 0.0
        %1670 = vmatpush1.msra.mxu0 0.0
        %1671 = vmatprep.subr.mxu0 0.0
        %1672 = vmatpush1.msra.mxu0 0.0
        %1673 = vmatprep.subr.mxu0 0.0
        %1674 = vmatpush1.msra.mxu0 0.0
        %1675 = vmatprep.subr.mxu0 0.0
        %1676 = vmatpush1.msra.mxu0 0.0
        %1677 = vmatprep.subr.mxu0 0.0
        %1678 = vmatpush1.msra.mxu0 0.0
        %1679 = vmatprep.subr.mxu0 0.0
        %1680 = vmatpush1.msra.mxu0 0.0
        %1681 = vmatprep.subr.mxu0 0.0
        %1682 = vmatpush1.msra.mxu0 0.0
        %1683 = vmatprep.subr.mxu0 0.0
        %1684 = vmatpush1.msra.mxu0 0.0
        %1685 = vmatprep.mubr.f32.mxu0 0.0
        %v1686 = vand.u32 %v1426, 4294901760
        %1687 = vmatmul.mubr.f32.gmra.mrb[0].mxu0 %v1686
        %v1688 = vpop.f32.mrb[0].mxu0
        %v1689 = vadd.f32 %v1538, %v1688
        %v1690 = vpop.f32.mrb[0].mxu0
        %1691 = vdwg.mxu0
        %1692 = vmatprep.subr.mxu0 0.0
        %v1693 = vand.u32 %v1427, 4294901760
        %v1694 = vsub.f32 %v1427, %v1693
        %1695 = vmatpush1.msra.mxu0 %v1694
        %1696 = vmatprep.subr.mxu0 0.0
        %v1697 = vand.u32 %v1428, 4294901760
        %v1698 = vsub.f32 %v1428, %v1697
        %1699 = vmatpush1.msra.mxu0 %v1698
        %1700 = vmatprep.subr.mxu0 0.0
        %v1701 = vand.u32 %v1429, 4294901760
        %v1702 = vsub.f32 %v1429, %v1701
        %1703 = vmatpush1.msra.mxu0 %v1702
        %1704 = vmatprep.subr.mxu0 0.0
        %v1705 = vand.u32 %v1430, 4294901760
        %v1706 = vsub.f32 %v1430, %v1705
        %1707 = vmatpush1.msra.mxu0 %v1706
        %1708 = vmatprep.subr.mxu0 0.0
        %v1709 = vand.u32 %v1431, 4294901760
        %v1710 = vsub.f32 %v1431, %v1709
        %1711 = vmatpush1.msra.mxu0 %v1710
        %1712 = vmatprep.subr.mxu0 0.0
        %v1713 = vand.u32 %v1432, 4294901760
        %v1714 = vsub.f32 %v1432, %v1713
        %1715 = vmatpush1.msra.mxu0 %v1714
        %1716 = vmatprep.subr.mxu0 0.0
        %v1717 = vand.u32 %v1433, 4294901760
        %v1718 = vsub.f32 %v1433, %v1717
        %1719 = vmatpush1.msra.mxu0 %v1718
        %1720 = vmatprep.subr.mxu0 0.0
        %v1721 = vand.u32 %v1434, 4294901760
        %v1722 = vsub.f32 %v1434, %v1721
        %1723 = vmatpush1.msra.mxu0 %v1722
        %1724 = vmatprep.subr.mxu0 0.0
        %v1725 = vand.u32 %v1435, 4294901760
        %v1726 = vsub.f32 %v1435, %v1725
        %1727 = vmatpush1.msra.mxu0 %v1726
        %1728 = vmatprep.subr.mxu0 0.0
        %v1729 = vand.u32 %v1436, 4294901760
        %v1730 = vsub.f32 %v1436, %v1729
        %1731 = vmatpush1.msra.mxu0 %v1730
        %1732 = vmatprep.subr.mxu0 0.0
        %v1733 = vand.u32 %v1437, 4294901760
        %v1734 = vsub.f32 %v1437, %v1733
        %1735 = vmatpush1.msra.mxu0 %v1734
        %1736 = vmatprep.subr.mxu0 0.0
        %v1737 = vand.u32 %v1438, 4294901760
        %v1738 = vsub.f32 %v1438, %v1737
        %1739 = vmatpush1.msra.mxu0 %v1738
        %1740 = vmatprep.subr.mxu0 0.0
        %v1741 = vand.u32 %v1439, 4294901760
        %v1742 = vsub.f32 %v1439, %v1741
        %1743 = vmatpush1.msra.mxu0 %v1742
        %1744 = vmatprep.subr.mxu0 0.0
        %v1745 = vand.u32 %v1440, 4294901760
        %v1746 = vsub.f32 %v1440, %v1745
        %1747 = vmatpush1.msra.mxu0 %v1746
        %1748 = vmatprep.subr.mxu0 0.0
        %v1749 = vand.u32 %v1441, 4294901760
        %v1750 = vsub.f32 %v1441, %v1749
        %1751 = vmatpush1.msra.mxu0 %v1750
        %1752 = vmatprep.subr.mxu0 0.0
        %v1753 = vand.u32 %v1442, 4294901760
        %v1754 = vsub.f32 %v1442, %v1753
        %1755 = vmatpush1.msra.mxu0 %v1754
        %1756 = vmatprep.subr.mxu0 0.0
        %1757 = vmatpush1.msra.mxu0 0.0
        %1758 = vmatprep.subr.mxu0 0.0
        %1759 = vmatpush1.msra.mxu0 0.0
        %1760 = vmatprep.subr.mxu0 0.0
        %1761 = vmatpush1.msra.mxu0 0.0
        %1762 = vmatprep.subr.mxu0 0.0
        %1763 = vmatpush1.msra.mxu0 0.0
        %1764 = vmatprep.subr.mxu0 0.0
        %1765 = vmatpush1.msra.mxu0 0.0
        %1766 = vmatprep.subr.mxu0 0.0
        %1767 = vmatpush1.msra.mxu0 0.0
        %1768 = vmatprep.subr.mxu0 0.0
        %1769 = vmatpush1.msra.mxu0 0.0
        %1770 = vmatprep.subr.mxu0 0.0
        %1771 = vmatpush1.msra.mxu0 0.0
        %1772 = vmatprep.subr.mxu0 0.0
        %1773 = vmatpush1.msra.mxu0 0.0
        %1774 = vmatprep.subr.mxu0 0.0
        %1775 = vmatpush1.msra.mxu0 0.0
        %1776 = vmatprep.subr.mxu0 0.0
        %1777 = vmatpush1.msra.mxu0 0.0
        %1778 = vmatprep.subr.mxu0 0.0
        %1779 = vmatpush1.msra.mxu0 0.0
        %1780 = vmatprep.subr.mxu0 0.0
        %1781 = vmatpush1.msra.mxu0 0.0
        %1782 = vmatprep.subr.mxu0 0.0
        %1783 = vmatpush1.msra.mxu0 0.0
        %1784 = vmatprep.subr.mxu0 0.0
        %1785 = vmatpush1.msra.mxu0 0.0
        %1786 = vmatprep.subr.mxu0 0.0
        %1787 = vmatpush1.msra.mxu0 0.0
        %1788 = vmatprep.mubr.f32.mxu0 0.0
        %v1789 = vand.u32 %v1426, 4294901760
        %v1790 = vsub.f32 %v1426, %v1789
        %1791 = vmatmul.mubr.f32.gmra.mrb[0].mxu0 %v1790
        %v1792 = vpop.f32.mrb[0].mxu0
        %v1793 = vadd.f32 %v1689, %v1792
        %v1794 = vpop.f32.mrb[0].mxu0
        %1795 = vdwg.mxu0
        %1796 = vmatprep.subr.mxu0 0.0
        %v1797 = vand.u32 %v1427, 4294901760
        %1798 = vmatpush1.msra.mxu0 %v1797
        %1799 = vmatprep.subr.mxu0 0.0
        %v1800 = vand.u32 %v1428, 4294901760
        %1801 = vmatpush1.msra.mxu0 %v1800
        %1802 = vmatprep.subr.mxu0 0.0
        %v1803 = vand.u32 %v1429, 4294901760
        %1804 = vmatpush1.msra.mxu0 %v1803
        %1805 = vmatprep.subr.mxu0 0.0
        %v1806 = vand.u32 %v1430, 4294901760
        %1807 = vmatpush1.msra.mxu0 %v1806
        %1808 = vmatprep.subr.mxu0 0.0
        %v1809 = vand.u32 %v1431, 4294901760
        %1810 = vmatpush1.msra.mxu0 %v1809
        %1811 = vmatprep.subr.mxu0 0.0
        %v1812 = vand.u32 %v1432, 4294901760
        %1813 = vmatpush1.msra.mxu0 %v1812
        %1814 = vmatprep.subr.mxu0 0.0
        %v1815 = vand.u32 %v1433, 4294901760
        %1816 = vmatpush1.msra.mxu0 %v1815
        %1817 = vmatprep.subr.mxu0 0.0
        %v1818 = vand.u32 %v1434, 4294901760
        %1819 = vmatpush1.msra.mxu0 %v1818
        %1820 = vmatprep.subr.mxu0 0.0
        %v1821 = vand.u32 %v1435, 4294901760
        %1822 = vmatpush1.msra.mxu0 %v1821
        %1823 = vmatprep.subr.mxu0 0.0
        %v1824 = vand.u32 %v1436, 4294901760
        %1825 = vmatpush1.msra.mxu0 %v1824
        %1826 = vmatprep.subr.mxu0 0.0
        %v1827 = vand.u32 %v1437, 4294901760
        %1828 = vmatpush1.msra.mxu0 %v1827
        %1829 = vmatprep.subr.mxu0 0.0
        %v1830 = vand.u32 %v1438, 4294901760
        %1831 = vmatpush1.msra.mxu0 %v1830
        %1832 = vmatprep.subr.mxu0 0.0
        %v1833 = vand.u32 %v1439, 4294901760
        %1834 = vmatpush1.msra.mxu0 %v1833
        %1835 = vmatprep.subr.mxu0 0.0
        %v1836 = vand.u32 %v1440, 4294901760
        %1837 = vmatpush1.msra.mxu0 %v1836
        %1838 = vmatprep.subr.mxu0 0.0
        %v1839 = vand.u32 %v1441, 4294901760
        %1840 = vmatpush1.msra.mxu0 %v1839
        %1841 = vmatprep.subr.mxu0 0.0
        %v1842 = vand.u32 %v1442, 4294901760
        %1843 = vmatpush1.msra.mxu0 %v1842
        %1844 = vmatprep.subr.mxu0 0.0
        %1845 = vmatpush1.msra.mxu0 0.0
        %1846 = vmatprep.subr.mxu0 0.0
        %1847 = vmatpush1.msra.mxu0 0.0
        %1848 = vmatprep.subr.mxu0 0.0
        %1849 = vmatpush1.msra.mxu0 0.0
        %1850 = vmatprep.subr.mxu0 0.0
        %1851 = vmatpush1.msra.mxu0 0.0
        %1852 = vmatprep.subr.mxu0 0.0
        %1853 = vmatpush1.msra.mxu0 0.0
        %1854 = vmatprep.subr.mxu0 0.0
        %1855 = vmatpush1.msra.mxu0 0.0
        %1856 = vmatprep.subr.mxu0 0.0
        %1857 = vmatpush1.msra.mxu0 0.0
        %1858 = vmatprep.subr.mxu0 0.0
        %1859 = vmatpush1.msra.mxu0 0.0
        %1860 = vmatprep.subr.mxu0 0.0
        %1861 = vmatpush1.msra.mxu0 0.0
        %1862 = vmatprep.subr.mxu0 0.0
        %1863 = vmatpush1.msra.mxu0 0.0
        %1864 = vmatprep.subr.mxu0 0.0
        %1865 = vmatpush1.msra.mxu0 0.0
        %1866 = vmatprep.subr.mxu0 0.0
        %1867 = vmatpush1.msra.mxu0 0.0
        %1868 = vmatprep.subr.mxu0 0.0
        %1869 = vmatpush1.msra.mxu0 0.0
        %1870 = vmatprep.subr.mxu0 0.0
        %1871 = vmatpush1.msra.mxu0 0.0
        %1872 = vmatprep.subr.mxu0 0.0
        %1873 = vmatpush1.msra.mxu0 0.0
        %1874 = vmatprep.subr.mxu0 0.0
        %1875 = vmatpush1.msra.mxu0 0.0
        %1876 = vmatprep.mubr.f32.mxu0 0.0
        %v1877 = vand.u32 %v1426, 4294901760
        %v1878 = vsub.f32 %v1426, %v1877
        %v1879 = vand.u32 %v1878, 4294901760
        %1880 = vmatmul.mubr.f32.gmra.mrb[0].mxu0 %v1879
        %v1881 = vpop.f32.mrb[0].mxu0
        %v1882 = vadd.f32 %v1793, %v1881
        %v1883 = vpop.f32.mrb[0].mxu0
        %1884 = vdwg.mxu0
        %1885 = vmatprep.subr.mxu0 0.0
        %v1886 = vand.u32 %v1427, 4294901760
        %v1887 = vsub.f32 %v1427, %v1886
        %v1888 = vand.u32 %v1887, 4294901760
        %1889 = vmatpush1.msra.mxu0 %v1888
        %1890 = vmatprep.subr.mxu0 0.0
        %v1891 = vand.u32 %v1428, 4294901760
        %v1892 = vsub.f32 %v1428, %v1891
        %v1893 = vand.u32 %v1892, 4294901760
        %1894 = vmatpush1.msra.mxu0 %v1893
        %1895 = vmatprep.subr.mxu0 0.0
        %v1896 = vand.u32 %v1429, 4294901760
        %v1897 = vsub.f32 %v1429, %v1896
        %v1898 = vand.u32 %v1897, 4294901760
        %1899 = vmatpush1.msra.mxu0 %v1898
        %1900 = vmatprep.subr.mxu0 0.0
        %v1901 = vand.u32 %v1430, 4294901760
        %v1902 = vsub.f32 %v1430, %v1901
        %v1903 = vand.u32 %v1902, 4294901760
        %1904 = vmatpush1.msra.mxu0 %v1903
        %1905 = vmatprep.subr.mxu0 0.0
        %v1906 = vand.u32 %v1431, 4294901760
        %v1907 = vsub.f32 %v1431, %v1906
        %v1908 = vand.u32 %v1907, 4294901760
        %1909 = vmatpush1.msra.mxu0 %v1908
        %1910 = vmatprep.subr.mxu0 0.0
        %v1911 = vand.u32 %v1432, 4294901760
        %v1912 = vsub.f32 %v1432, %v1911
        %v1913 = vand.u32 %v1912, 4294901760
        %1914 = vmatpush1.msra.mxu0 %v1913
        %1915 = vmatprep.subr.mxu0 0.0
        %v1916 = vand.u32 %v1433, 4294901760
        %v1917 = vsub.f32 %v1433, %v1916
        %v1918 = vand.u32 %v1917, 4294901760
        %1919 = vmatpush1.msra.mxu0 %v1918
        %1920 = vmatprep.subr.mxu0 0.0
        %v1921 = vand.u32 %v1434, 4294901760
        %v1922 = vsub.f32 %v1434, %v1921
        %v1923 = vand.u32 %v1922, 4294901760
        %1924 = vmatpush1.msra.mxu0 %v1923
        %1925 = vmatprep.subr.mxu0 0.0
        %v1926 = vand.u32 %v1435, 4294901760
        %v1927 = vsub.f32 %v1435, %v1926
        %v1928 = vand.u32 %v1927, 4294901760
        %1929 = vmatpush1.msra.mxu0 %v1928
        %1930 = vmatprep.subr.mxu0 0.0
        %v1931 = vand.u32 %v1436, 4294901760
        %v1932 = vsub.f32 %v1436, %v1931
        %v1933 = vand.u32 %v1932, 4294901760
        %1934 = vmatpush1.msra.mxu0 %v1933
        %1935 = vmatprep.subr.mxu0 0.0
        %v1936 = vand.u32 %v1437, 4294901760
        %v1937 = vsub.f32 %v1437, %v1936
        %v1938 = vand.u32 %v1937, 4294901760
        %1939 = vmatpush1.msra.mxu0 %v1938
        %1940 = vmatprep.subr.mxu0 0.0
        %v1941 = vand.u32 %v1438, 4294901760
        %v1942 = vsub.f32 %v1438, %v1941
        %v1943 = vand.u32 %v1942, 4294901760
        %1944 = vmatpush1.msra.mxu0 %v1943
        %1945 = vmatprep.subr.mxu0 0.0
        %v1946 = vand.u32 %v1439, 4294901760
        %v1947 = vsub.f32 %v1439, %v1946
        %v1948 = vand.u32 %v1947, 4294901760
        %1949 = vmatpush1.msra.mxu0 %v1948
        %1950 = vmatprep.subr.mxu0 0.0
        %v1951 = vand.u32 %v1440, 4294901760
        %v1952 = vsub.f32 %v1440, %v1951
        %v1953 = vand.u32 %v1952, 4294901760
        %1954 = vmatpush1.msra.mxu0 %v1953
        %1955 = vmatprep.subr.mxu0 0.0
        %v1956 = vand.u32 %v1441, 4294901760
        %v1957 = vsub.f32 %v1441, %v1956
        %v1958 = vand.u32 %v1957, 4294901760
        %1959 = vmatpush1.msra.mxu0 %v1958
        %1960 = vmatprep.subr.mxu0 0.0
        %v1961 = vand.u32 %v1442, 4294901760
        %v1962 = vsub.f32 %v1442, %v1961
        %v1963 = vand.u32 %v1962, 4294901760
        %1964 = vmatpush1.msra.mxu0 %v1963
        %1965 = vmatprep.subr.mxu0 0.0
        %1966 = vmatpush1.msra.mxu0 0.0
        %1967 = vmatprep.subr.mxu0 0.0
        %1968 = vmatpush1.msra.mxu0 0.0
        %1969 = vmatprep.subr.mxu0 0.0
        %1970 = vmatpush1.msra.mxu0 0.0
        %1971 = vmatprep.subr.mxu0 0.0
        %1972 = vmatpush1.msra.mxu0 0.0
        %1973 = vmatprep.subr.mxu0 0.0
        %1974 = vmatpush1.msra.mxu0 0.0
        %1975 = vmatprep.subr.mxu0 0.0
        %1976 = vmatpush1.msra.mxu0 0.0
        %1977 = vmatprep.subr.mxu0 0.0
        %1978 = vmatpush1.msra.mxu0 0.0
        %1979 = vmatprep.subr.mxu0 0.0
        %1980 = vmatpush1.msra.mxu0 0.0
        %1981 = vmatprep.subr.mxu0 0.0
        %1982 = vmatpush1.msra.mxu0 0.0
        %1983 = vmatprep.subr.mxu0 0.0
        %1984 = vmatpush1.msra.mxu0 0.0
        %1985 = vmatprep.subr.mxu0 0.0
        %1986 = vmatpush1.msra.mxu0 0.0
        %1987 = vmatprep.subr.mxu0 0.0
        %1988 = vmatpush1.msra.mxu0 0.0
        %1989 = vmatprep.subr.mxu0 0.0
        %1990 = vmatpush1.msra.mxu0 0.0
        %1991 = vmatprep.subr.mxu0 0.0
        %1992 = vmatpush1.msra.mxu0 0.0
        %1993 = vmatprep.subr.mxu0 0.0
        %1994 = vmatpush1.msra.mxu0 0.0
        %1995 = vmatprep.subr.mxu0 0.0
        %1996 = vmatpush1.msra.mxu0 0.0
        %1997 = vmatprep.mubr.f32.mxu0 0.0
        %v1998 = vand.u32 %v1426, 4294901760
        %1999 = vmatmul.mubr.f32.gmra.mrb[0].mxu0 %v1998
        %v2000 = vpop.f32.mrb[0].mxu0
        %v2001 = vadd.f32 %v1882, %v2000
        %v2002 = vpop.f32.mrb[0].mxu0
        %2003 = vdwg.mxu0
        %2004 = vmatprep.subr.mxu0 0.0
        %v2005 = vand.u32 %v1427, 4294901760
        %2006 = vmatpush1.msra.mxu0 %v2005
        %2007 = vmatprep.subr.mxu0 0.0
        %v2008 = vand.u32 %v1428, 4294901760
        %2009 = vmatpush1.msra.mxu0 %v2008
        %2010 = vmatprep.subr.mxu0 0.0
        %v2011 = vand.u32 %v1429, 4294901760
        %2012 = vmatpush1.msra.mxu0 %v2011
        %2013 = vmatprep.subr.mxu0 0.0
        %v2014 = vand.u32 %v1430, 4294901760
        %2015 = vmatpush1.msra.mxu0 %v2014
        %2016 = vmatprep.subr.mxu0 0.0
        %v2017 = vand.u32 %v1431, 4294901760
        %2018 = vmatpush1.msra.mxu0 %v2017
        %2019 = vmatprep.subr.mxu0 0.0
        %v2020 = vand.u32 %v1432, 4294901760
        %2021 = vmatpush1.msra.mxu0 %v2020
        %2022 = vmatprep.subr.mxu0 0.0
        %v2023 = vand.u32 %v1433, 4294901760
        %2024 = vmatpush1.msra.mxu0 %v2023
        %2025 = vmatprep.subr.mxu0 0.0
        %v2026 = vand.u32 %v1434, 4294901760
        %2027 = vmatpush1.msra.mxu0 %v2026
        %2028 = vmatprep.subr.mxu0 0.0
        %v2029 = vand.u32 %v1435, 4294901760
        %2030 = vmatpush1.msra.mxu0 %v2029
        %2031 = vmatprep.subr.mxu0 0.0
        %v2032 = vand.u32 %v1436, 4294901760
        %2033 = vmatpush1.msra.mxu0 %v2032
        %2034 = vmatprep.subr.mxu0 0.0
        %v2035 = vand.u32 %v1437, 4294901760
        %2036 = vmatpush1.msra.mxu0 %v2035
        %2037 = vmatprep.subr.mxu0 0.0
        %v2038 = vand.u32 %v1438, 4294901760
        %2039 = vmatpush1.msra.mxu0 %v2038
        %2040 = vmatprep.subr.mxu0 0.0
        %v2041 = vand.u32 %v1439, 4294901760
        %2042 = vmatpush1.msra.mxu0 %v2041
        %2043 = vmatprep.subr.mxu0 0.0
        %v2044 = vand.u32 %v1440, 4294901760
        %2045 = vmatpush1.msra.mxu0 %v2044
        %2046 = vmatprep.subr.mxu0 0.0
        %v2047 = vand.u32 %v1441, 4294901760
        %2048 = vmatpush1.msra.mxu0 %v2047
        %2049 = vmatprep.subr.mxu0 0.0
        %v2050 = vand.u32 %v1442, 4294901760
        %2051 = vmatpush1.msra.mxu0 %v2050
        %2052 = vmatprep.subr.mxu0 0.0
        %2053 = vmatpush1.msra.mxu0 0.0
        %2054 = vmatprep.subr.mxu0 0.0
        %2055 = vmatpush1.msra.mxu0 0.0
        %2056 = vmatprep.subr.mxu0 0.0
        %2057 = vmatpush1.msra.mxu0 0.0
        %2058 = vmatprep.subr.mxu0 0.0
        %2059 = vmatpush1.msra.mxu0 0.0
        %2060 = vmatprep.subr.mxu0 0.0
        %2061 = vmatpush1.msra.mxu0 0.0
        %2062 = vmatprep.subr.mxu0 0.0
        %2063 = vmatpush1.msra.mxu0 0.0
        %2064 = vmatprep.subr.mxu0 0.0
        %2065 = vmatpush1.msra.mxu0 0.0
        %2066 = vmatprep.subr.mxu0 0.0
        %2067 = vmatpush1.msra.mxu0 0.0
        %2068 = vmatprep.subr.mxu0 0.0
        %2069 = vmatpush1.msra.mxu0 0.0
        %2070 = vmatprep.subr.mxu0 0.0
        %2071 = vmatpush1.msra.mxu0 0.0
        %2072 = vmatprep.subr.mxu0 0.0
        %2073 = vmatpush1.msra.mxu0 0.0
        %2074 = vmatprep.subr.mxu0 0.0
        %2075 = vmatpush1.msra.mxu0 0.0
        %2076 = vmatprep.subr.mxu0 0.0
        %2077 = vmatpush1.msra.mxu0 0.0
        %2078 = vmatprep.subr.mxu0 0.0
        %2079 = vmatpush1.msra.mxu0 0.0
        %2080 = vmatprep.subr.mxu0 0.0
        %2081 = vmatpush1.msra.mxu0 0.0
        %2082 = vmatprep.subr.mxu0 0.0
        %2083 = vmatpush1.msra.mxu0 0.0
        %2084 = vmatprep.mubr.f32.mxu0 0.0
        %v2085 = vand.u32 %v1426, 4294901760
        %2086 = vmatmul.mubr.f32.gmra.mrb[0].mxu0 %v2085
        %v2087 = vpop.f32.mrb[0].mxu0
        %v2088 = vadd.f32 %v2001, %v2087
        %v2089 = vpop.f32.mrb[0].mxu0
        %2090 = vdwg.mxu0
        %v2091 = vmax.f32 %v2088, 0.0
        %2092 = vst.msk [vmem:[%s266] sm:$0xff] %vm272, %v2091
        %s2093 = sand.u32 %s162, 1
        %s2094 = scalar_lea.sflag [#allocation4], %s2093
        %s2095 = sand.u32 %s162, 1
        %s2096 = smul.addr %s2095, 8
        %s2097 = scalar_lea.vmem [#allocation5], %s2096
        // Predicated region
        $region49: #{tpu_custom_call.1} parent=43 // pred_check
          %p2098 = pneg %p172
        $region50: #{tpu_custom_call.1} parent=43 // pred_check_branch
          %2100 = sbr.rel (%p2098) target = $region52
        $region51: #{tpu_custom_call.1} parent=43 // pred_region
          %s2102 = ssub.s32 128, 128
          %2103 = vsyncadd %s2094, %s2102
          %s2104 = smul.addr %s23, 128
          %s2105 = scalar_lea.hbm %s6, %s2104
          %s2107 = sshll.u32 %s2097, 4
          %s2108 = int_to_ptr.vmem [resolvable:$true] %s2107
          %2110 = dma.vmem_to_hbm [thread:$0]  %s2108, 128, %s2105, %s2094
        $region52: #{tpu_custom_call.1} parent=43 // pred_fallthru
          _
      $region44: #{tpu_custom_call.1} parent=5 // pred_fallthru
        _
      %p2111 = scmp.le.s32.totalorder 2, %s18
      // Predicated region
      $region53: #{tpu_custom_call.1} parent=5 // pred_check
        %p2112 = pneg %p2111
      $region54: #{tpu_custom_call.1} parent=5 // pred_check_branch
        %2114 = sbr.rel (%p2112) target = $region56
      $region55: #{tpu_custom_call.1} parent=5 // pred_region
        %s2115 = ssub.s32 %s18, 2
        // Predicated region
        $region57: #{tpu_custom_call.1} parent=55 // pred_check
          %p2116 = pneg %p178
        $region58: #{tpu_custom_call.1} parent=55 // pred_check_branch
          %2118 = sbr.rel (%p2116) target = $region60
        $region59: #{tpu_custom_call.1} parent=55 // pred_region
          %s2119 = sand.u32 %s163, 1
          %s2120 = scalar_lea.sflag [#allocation4], %s2119
          %s2121 = sand.u32 %s163, 1
          %s2122 = smul.addr %s2121, 8
          %s2123 = scalar_lea.vmem [#allocation5], %s2122
          %2124 = dma.done %s2120, 128
        $region60: #{tpu_custom_call.1} parent=55 // pred_fallthru
          _
      $region56: #{tpu_custom_call.1} parent=5 // pred_fallthru
        _
    $region6: #{tpu_custom_call.1} parent=1 // loop_footer
      %s22 = sadd.s32 1, %s18
    $region7: #{tpu_custom_call.1} parent=1 // loop_footer_branch
      %17 = sbr.rel target = $region3
    $region8: #{tpu_custom_call.1} parent=1 // loop_exit
      _
    %2125 = vsyncpa [#allocation3], 1
    %s2126 = scalar_lea.sflag [#allocation3], 1
    %2127 = vsyncpa %s2126, 1
    %2128 = vsyncpa [#allocation4], 1
    %s2129 = scalar_lea.sflag [#allocation4], 1
    %2130 = vsyncpa %s2129, 1

</llo_original>
